<compile_context>
chip_gen: v7x
topology: tpu7x:2x2x1
jax: 0.10.0
libtpu: 0.0.40
codegen_flags: <defaults>
</compile_context>

<pallas_src>
import numpy as np
import jax
import jax.numpy as jnp
from jax.experimental import pallas as pl
from jax.experimental.pallas import tpu as pltpu

SIZE = 32             # hidden size (PyTorch default 100; small for the demo)
NUM_PARAMS = 5
MAX_NODES = 8         # padded per-tree node count (post-order; children < parent)
TREE_BLOCK = 128      # trees per grid step, mapped onto the 128-lane axis
NUM_TREES = 1024      # grid of 8 steps (>= 4 per TensorCore on v7x)


def grnn_kernel(meta_ref, times_ref,                 # per-tree data (VMEM blocks)
                wv3_ref, wb3_ref, ustk_ref, ubstk_ref,  # packed weights (VMEM)
                hroot_ref,                           # (SIZE, TREE_BLOCK) output
                ch_ref):                             # VMEM scratch: node states
    S = SIZE
    S2 = 2 * SIZE
    B = hroot_ref.shape[1]                           # TREE_BLOCK (lane axis)

    meta = meta_ref[...]                             # (2*MAX_NODES+1, B) int32
    left = meta[0:MAX_NODES]                         # (MAX_NODES, B); -1 == leaf/pad
    right = meta[MAX_NODES:2 * MAX_NODES]
    root = meta[2 * MAX_NODES:2 * MAX_NODES + 1]     # (1, B) root node index
    times = times_ref[...]                           # (MAX_NODES, B) f32

    # hoisted broadcasts (JAX does not CSE broadcast_in_dim -> do them once)
    wv3 = jnp.broadcast_to(wv3_ref[...], (3 * S, B))     # [Wi; Wu; Wo] weight cols
    wb3 = jnp.broadcast_to(wb3_ref[...], (3 * S, B))     # [Wi; Wu; Wo] bias cols
    ubstk = jnp.broadcast_to(ubstk_ref[...], (5 * S, B))  # [bf; bf; 2bi; 2bu; 2bo]
    ustk = ustk_ref[...]                                  # (5S, 2S) bf16, block U

    h_root = jnp.zeros((S, B), jnp.float32)

    # fully unrolled post-order sweep (children always precede parents)
    for n in range(MAX_NODES):
        t = times[n:n + 1]                           # (1, B)
        wx = wv3 * t + wb3                           # (3S, B): [Wi*t+bi; Wu*t+bu; Wo*t+bo]

        # ---- leaf branch (computed for every tree, selected per lane) ----
        i_l = jax.nn.sigmoid(wx[0:S])
        u_l = jax.nn.relu(wx[S:2 * S])
        c_l = i_l * u_l
        o_l = jax.nn.sigmoid(wx[2 * S:3 * S])
        h_l = o_l * jax.nn.relu(c_l)
        ch_l = jnp.concatenate([c_l, h_l], axis=0)   # (2S, B)

        if n == 0:
            # node 0 can never have children (post-order) -> always a leaf
            ch_sel = ch_l
        else:
            lrow = left[n:n + 1]                     # (1, B)
            rrow = right[n:n + 1]

            # gather children states per lane via selects over earlier node slots;
            # each candidate state is loaded from VMEM once and reused for l and r
            ch1 = jnp.zeros((S2, B), jnp.float32)
            ch2 = jnp.zeros((S2, B), jnp.float32)
            for m in range(n):
                chm = ch_ref[m]                      # (2S, B)
                ch1 = jnp.where(lrow == m, chm, ch1)
                ch2 = jnp.where(rrow == m, chm, ch2)
            c1, h1 = ch1[0:S], ch1[S:S2]
            c2, h2 = ch2[0:S], ch2[S:S2]

            # ---- internal branch: single fused block-structured MXU op ----
            hcat = jnp.concatenate([h1, h2], axis=0).astype(jnp.bfloat16)  # (2S, B)
            g = jnp.dot(ustk, hcat, preferred_element_type=jnp.float32)    # (5S, B)
            a = g + ubstk
            #   a[0:S]   = Uf@h1 + bf          a[S:2S]  = Uf@h2 + bf
            #   a[2S:3S] = Ui@(h1+h2) + 2*bi   a[3S:4S] = Uu@(h1+h2) + 2*bu
            #   a[4S:5S] = Uo@(h1+h2) + 2*bo
            #   (doubled bias on purpose: each child's Linear adds its own bias)
            f1 = jax.nn.sigmoid(a[0:S])
            f2 = jax.nn.sigmoid(a[S:2 * S])
            aiuo = a[2 * S:5 * S] + wx               # W*(x) + U*(h1) + U*(h2)
            i_n = jax.nn.sigmoid(aiuo[0:S])
            u_n = jax.nn.relu(aiuo[S:2 * S])
            c_n = i_n * u_n + f1 * c1 + f2 * c2
            o_n = jax.nn.sigmoid(aiuo[2 * S:3 * S])
            h_n = o_n * jax.nn.relu(c_n)
            ch_n = jnp.concatenate([c_n, h_n], axis=0)

            ch_sel = jnp.where(lrow < 0, ch_l, ch_n)

        ch_ref[n] = ch_sel                           # park node state in VMEM scratch
        # fold root selection into the main loop
        h_root = jnp.where(root == n, ch_sel[S:S2], h_root)

    hroot_ref[...] = h_root


def grnn_forward(left, right, nnodes, times, wv, wb, um, ub, pw, pb):
    """left/right/times: (num_trees, MAX_NODES); nnodes: (num_trees,).
    wv, wb: (3, SIZE) rows [Wi, Wu, Wo];  um: (4, SIZE, SIZE), ub: (4, SIZE)
    stored so linear(h) = h @ um[k] + ub[k], rows [Uf, Ui, Uu, Uo];
    pw: (SIZE, NUM_PARAMS), pb: (1, NUM_PARAMS)."""
    num_trees = left.shape[0]
    assert num_trees % TREE_BLOCK == 0
    S = SIZE

    # ---- trees-on-lanes data packing (wrapper-side, tiny) ----
    left_t = jnp.asarray(left, jnp.int32).T                  # (MAX_NODES, T)
    right_t = jnp.asarray(right, jnp.int32).T
    root_t = (jnp.asarray(nnodes, jnp.int32) - 1)[None, :]   # (1, T)
    meta = jnp.concatenate([left_t, right_t, root_t], axis=0)  # one int32 input
    times_t = jnp.asarray(times, jnp.float32).T              # (MAX_NODES, T)

    # Linear(1, size) gates packed along sublanes: [Wi; Wu; Wo]
    wv3 = jnp.concatenate([wv[0], wv[1], wv[2]], axis=0)[:, None]   # (3S, 1)
    wb3 = jnp.concatenate([wb[0], wb[1], wb[2]], axis=0)[:, None]   # (3S, 1)

    # stacked U weights (column-vector convention: U(h) = um[k].T @ h + ub[k])
    UfT, UiT, UuT, UoT = um[0].T, um[1].T, um[2].T, um[3].T
    Z = jnp.zeros((S, S), jnp.float32)
    ustk = jnp.concatenate([
        jnp.concatenate([UfT, Z], axis=1),       # rows 0:S    -> Uf @ h1
        jnp.concatenate([Z, UfT], axis=1),       # rows S:2S   -> Uf @ h2
        jnp.concatenate([UiT, UiT], axis=1),     # rows 2S:3S  -> Ui @ (h1+h2)
        jnp.concatenate([UuT, UuT], axis=1),     # rows 3S:4S  -> Uu @ (h1+h2)
        jnp.concatenate([UoT, UoT], axis=1),     # rows 4S:5S  -> Uo @ (h1+h2)
    ], axis=0).astype(jnp.bfloat16)              # (5S, 2S) bf16 MXU operand
    ubstk = jnp.concatenate(
        [ub[0], ub[0], 2.0 * ub[1], 2.0 * ub[2], 2.0 * ub[3]], axis=0)[:, None]  # (5S, 1)

    block = lambda rows: pl.BlockSpec((rows, TREE_BLOCK), lambda i: (0, i))
    full = lambda a: pl.BlockSpec(a.shape, lambda i: (0, 0))

    h_roots = pl.pallas_call(
        grnn_kernel,
        out_shape=jax.ShapeDtypeStruct((S, num_trees), jnp.float32),
        grid_spec=pltpu.PrefetchScalarGridSpec(
            num_scalar_prefetch=0,
            grid=(num_trees // TREE_BLOCK,),
            in_specs=[block(2 * MAX_NODES + 1),    # meta = [left | right | root]
                      block(MAX_NODES),            # times
                      full(wv3), full(wb3), full(ustk), full(ubstk)],
            out_specs=pl.BlockSpec((S, TREE_BLOCK), lambda i: (0, i)),
            scratch_shapes=[pltpu.VMEM((MAX_NODES, 2 * S, TREE_BLOCK), jnp.float32)]),
        compiler_params=pltpu.CompilerParams(
            dimension_semantics=("parallel",)),   # per-block outputs -> safe to shard
    )(meta, times_t, wv3, wb3, ustk, ubstk)

    # tiny (num_trees, 32) @ (32, 5) projection stays in the XLA wrapper
    return h_roots.T @ pw + pb


def ref_forward(left, right, nnodes, times, wv, wb, um, ub, pw, pb):
    """Pure-numpy mirror of the PyTorch recursive traverse()."""
    left, right = np.asarray(left), np.asarray(right)
    nnodes, times = np.asarray(nnodes), np.asarray(times)
    wv, wb = np.asarray(wv), np.asarray(wb)
    um, ub = np.asarray(um), np.asarray(ub)
    pw, pb = np.asarray(pw), np.asarray(pb)
    sigmoid = lambda x: 1.0 / (1.0 + np.exp(-x))
    relu = lambda x: np.maximum(x, 0.0)

    outs = []
    for t in range(left.shape[0]):
        def trav(node):
            tm = times[t, node]
            wi = tm * wv[0] + wb[0]
            wu = tm * wv[1] + wb[1]
            wo = tm * wv[2] + wb[2]
            l, r = left[t, node], right[t, node]
            if l < 0:   # leaf
                i = sigmoid(wi); u = relu(wu); c = i * u
                o = sigmoid(wo); h = o * relu(c)
            else:       # binary internal node
                c1, h1 = trav(l)
                c2, h2 = trav(r)
                f1 = sigmoid(h1 @ um[0] + ub[0])
                f2 = sigmoid(h2 @ um[0] + ub[0])
                i = sigmoid(wi + (h1 @ um[1] + ub[1]) + (h2 @ um[1] + ub[1]))
                u = relu(wu + (h1 @ um[2] + ub[2]) + (h2 @ um[2] + ub[2]))
                c = i * u + f1 * c1 + f2 * c2
                o = sigmoid(wo + (h1 @ um[3] + ub[3]) + (h2 @ um[3] + ub[3]))
                h = o * relu(c)
            return c, h
        _, h = trav(nnodes[t] - 1)
        outs.append(h @ pw + pb[0])
    return np.stack(outs, 0)


if __name__ == "__main__":
    key = jax.random.PRNGKey(0)
    ks = jax.random.split(key, 8)

    # deterministic synthetic parameters (shapes follow gRNN.__init__ with size=SIZE)
    wv = jax.random.normal(ks[0], (3, SIZE), jnp.float32) * 0.5
    wb = jax.random.normal(ks[1], (3, SIZE), jnp.float32) * 0.1
    um = jax.random.normal(ks[2], (4, SIZE, SIZE), jnp.float32) * (1.0 / np.sqrt(SIZE))
    ub = jax.random.normal(ks[3], (4, SIZE), jnp.float32) * 0.1
    pw = jax.random.normal(ks[4], (SIZE, NUM_PARAMS), jnp.float32) * (1.0 / np.sqrt(SIZE))
    pb = jax.random.normal(ks[5], (1, NUM_PARAMS), jnp.float32) * 0.1

    # synthetic binary trees, flattened post-order (children before parents),
    # padded to MAX_NODES; child index -1 marks a leaf / padding.
    left = -np.ones((NUM_TREES, MAX_NODES), np.int32)
    right = -np.ones((NUM_TREES, MAX_NODES), np.int32)
    nnodes = np.zeros((NUM_TREES,), np.int32)

    def topo_full7(t):       # balanced, 7 nodes
        left[t, 4], right[t, 4] = 0, 1
        left[t, 5], right[t, 5] = 2, 3
        left[t, 6], right[t, 6] = 4, 5
        nnodes[t] = 7

    def topo_five(t):        # 5 nodes
        left[t, 3], right[t, 3] = 0, 1
        left[t, 4], right[t, 4] = 3, 2
        nnodes[t] = 5

    def topo_three(t):       # 3 nodes
        left[t, 2], right[t, 2] = 0, 1
        nnodes[t] = 3

    def topo_chain7(t):      # left-leaning chain, 7 nodes
        left[t, 2], right[t, 2] = 0, 1
        left[t, 4], right[t, 4] = 2, 3
        left[t, 6], right[t, 6] = 4, 5
        nnodes[t] = 7

    def topo_leaf(t):        # single leaf
        nnodes[t] = 1

    topos = [topo_full7, topo_five, topo_three, topo_chain7, topo_leaf]
    for t in range(NUM_TREES):
        topos[t % len(topos)](t)

    times = jax.random.uniform(ks[6], (NUM_TREES, MAX_NODES), jnp.float32,
                               minval=0.1, maxval=2.0)

    out = grnn_forward(left, right, nnodes, times, wv, wb, um, ub, pw, pb)
    out = jax.block_until_ready(out)

    ref = ref_forward(left, right, nnodes, times, wv, wb, um, ub, pw, pb)
    np.testing.assert_allclose(np.asarray(out), ref, rtol=5e-2, atol=5e-2)

    print("KERNEL_OK")
</pallas_src>

<mosaic_0001>
module attributes {stable_mosaic.version = 11 : i64} {
  func.func @grnn_kernel(%arg0: i32, %arg1: memref<17x128xi32, #tpu.memory_space<vmem>>, %arg2: memref<8x128xf32, #tpu.memory_space<vmem>>, %arg3: memref<96x1xf32, #tpu.memory_space<vmem>>, %arg4: memref<96x1xf32, #tpu.memory_space<vmem>>, %arg5: memref<160x64xbf16, #tpu.memory_space<vmem>>, %arg6: memref<160x1xf32, #tpu.memory_space<vmem>>, %arg7: memref<32x128xf32, #tpu.memory_space<vmem>>, %arg8: memref<8x64x128xf32, #tpu.memory_space<vmem>>) attributes {dimension_semantics = [#tpu.dimension_semantics<parallel>], iteration_bounds = array<i64: 8>, scalar_prefetch = 0 : i64, scratch_operands = 1 : i64, tpu.core_type = #tpu.core_type<tc>, window_params = [{transform_indices = @transform_0, window_bounds = array<i64: 17, 128>}, {transform_indices = @transform_1, window_bounds = array<i64: 8, 128>}, {pipeline_mode = #tpu.pipeline_mode<synchronous>, transform_indices = @transform_2, window_bounds = array<i64: 96, 1>}, {pipeline_mode = #tpu.pipeline_mode<synchronous>, transform_indices = @transform_3, window_bounds = array<i64: 96, 1>}, {pipeline_mode = #tpu.pipeline_mode<synchronous>, transform_indices = @transform_4, window_bounds = array<i64: 160, 64>}, {pipeline_mode = #tpu.pipeline_mode<synchronous>, transform_indices = @transform_5, window_bounds = array<i64: 160, 1>}, {transform_indices = @transform_6, window_bounds = array<i64: 32, 128>}]} {
    %c0 = arith.constant 0 : index
    %c0_0 = arith.constant 0 : index
    %0 = vector.load %arg1[%c0, %c0_0] : memref<17x128xi32, #tpu.memory_space<vmem>>, vector<17x128xi32>
    %1 = vector.extract_strided_slice %0 {offsets = [0, 0], sizes = [8, 128], strides = [1, 1]} : vector<17x128xi32> to vector<8x128xi32>
    %2 = vector.extract_strided_slice %0 {offsets = [8, 0], sizes = [8, 128], strides = [1, 1]} : vector<17x128xi32> to vector<8x128xi32>
    %3 = vector.extract_strided_slice %0 {offsets = [16, 0], sizes = [1, 128], strides = [1, 1]} : vector<17x128xi32> to vector<1x128xi32>
    %c0_1 = arith.constant 0 : index
    %c0_2 = arith.constant 0 : index
    %4 = vector.load %arg2[%c0_1, %c0_2] : memref<8x128xf32, #tpu.memory_space<vmem>>, vector<8x128xf32>
    %c0_3 = arith.constant 0 : index
    %c0_4 = arith.constant 0 : index
    %5 = vector.load %arg3[%c0_3, %c0_4] : memref<96x1xf32, #tpu.memory_space<vmem>>, vector<96x1xf32>
    %6 = vector.shape_cast %5 : vector<96x1xf32> to vector<96x1xf32>
    %7 = vector.broadcast %6 : vector<96x1xf32> to vector<96x128xf32>
    %c0_5 = arith.constant 0 : index
    %c0_6 = arith.constant 0 : index
    %8 = vector.load %arg4[%c0_5, %c0_6] : memref<96x1xf32, #tpu.memory_space<vmem>>, vector<96x1xf32>
    %9 = vector.shape_cast %8 : vector<96x1xf32> to vector<96x1xf32>
    %10 = vector.broadcast %9 : vector<96x1xf32> to vector<96x128xf32>
    %c0_7 = arith.constant 0 : index
    %c0_8 = arith.constant 0 : index
    %11 = vector.load %arg6[%c0_7, %c0_8] : memref<160x1xf32, #tpu.memory_space<vmem>>, vector<160x1xf32>
    %12 = vector.shape_cast %11 : vector<160x1xf32> to vector<160x1xf32>
    %13 = vector.broadcast %12 : vector<160x1xf32> to vector<160x128xf32>
    %c0_9 = arith.constant 0 : index
    %c0_10 = arith.constant 0 : index
    %14 = vector.load %arg5[%c0_9, %c0_10] : memref<160x64xbf16, #tpu.memory_space<vmem>>, vector<160x64xbf16>
    %cst = arith.constant 0.000000e+00 : f32
    %15 = vector.broadcast %cst : f32 to vector<32x128xf32>
    %16 = vector.extract_strided_slice %4 {offsets = [0, 0], sizes = [1, 128], strides = [1, 1]} : vector<8x128xf32> to vector<1x128xf32>
    %17 = vector.broadcast %16 : vector<1x128xf32> to vector<96x128xf32>
    %18 = arith.mulf %7, %17 : vector<96x128xf32>
    %19 = arith.addf %18, %10 : vector<96x128xf32>
    %20 = vector.extract_strided_slice %19 {offsets = [0, 0], sizes = [32, 128], strides = [1, 1]} : vector<96x128xf32> to vector<32x128xf32>
    %21 = arith.negf %20 : vector<32x128xf32>
    %22 = math.exp %21 : vector<32x128xf32>
    %cst_11 = arith.constant 1.000000e+00 : f32
    %23 = vector.broadcast %cst_11 : f32 to vector<32x128xf32>
    %24 = arith.addf %23, %22 : vector<32x128xf32>
    %25 = arith.divf %23, %24 : vector<32x128xf32>
    %26 = vector.extract_strided_slice %19 {offsets = [32, 0], sizes = [32, 128], strides = [1, 1]} : vector<96x128xf32> to vector<32x128xf32>
    %cst_12 = arith.constant 0.000000e+00 : f32
    %27 = vector.broadcast %cst_12 : f32 to vector<32x128xf32>
    %28 = arith.maximumf %26, %27 : vector<32x128xf32>
    %29 = arith.mulf %25, %28 : vector<32x128xf32>
    %30 = vector.extract_strided_slice %19 {offsets = [64, 0], sizes = [32, 128], strides = [1, 1]} : vector<96x128xf32> to vector<32x128xf32>
    %31 = arith.negf %30 : vector<32x128xf32>
    %32 = math.exp %31 : vector<32x128xf32>
    %cst_13 = arith.constant 1.000000e+00 : f32
    %33 = vector.broadcast %cst_13 : f32 to vector<32x128xf32>
    %34 = arith.addf %33, %32 : vector<32x128xf32>
    %35 = arith.divf %33, %34 : vector<32x128xf32>
    %cst_14 = arith.constant 0.000000e+00 : f32
    %36 = vector.broadcast %cst_14 : f32 to vector<32x128xf32>
    %37 = arith.maximumf %29, %36 : vector<32x128xf32>
    %38 = arith.mulf %35, %37 : vector<32x128xf32>
    %39 = tpu.concatenate %29, %38 in 0 : vector<32x128xf32>, vector<32x128xf32> -> vector<64x128xf32>
    %c0_15 = arith.constant 0 : index
    %c0_16 = arith.constant 0 : index
    %c0_17 = arith.constant 0 : index
    %40 = vector.load %arg8[%c0_15, %c0_16, %c0_17] : memref<8x64x128xf32, #tpu.memory_space<vmem>>, vector<1x64x128xf32>
    %41 = vector.shape_cast %40 : vector<1x64x128xf32> to vector<64x128xf32>
    %42 = vector.shape_cast %39 : vector<64x128xf32> to vector<1x64x128xf32>
    tpu.vector_store %arg8[%c0_15, %c0_16, %c0_17], %42 {strides = array<i32>} : memref<8x64x128xf32, #tpu.memory_space<vmem>>, vector<1x64x128xf32>,
    %c0_i32 = arith.constant 0 : i32
    %43 = vector.broadcast %c0_i32 : i32 to vector<1x128xi32>
    %44 = arith.cmpi eq, %3, %43 : vector<1x128xi32>
    %45 = vector.extract_strided_slice %39 {offsets = [32, 0], sizes = [32, 128], strides = [1, 1]} : vector<64x128xf32> to vector<32x128xf32>
    %46 = vector.shape_cast %44 : vector<1x128xi1> to vector<1x128xi1>
    %47 = vector.broadcast %46 : vector<1x128xi1> to vector<32x128xi1>
    %48 = arith.select %47, %45, %15 : vector<32x128xi1>, vector<32x128xf32>
    %49 = vector.extract_strided_slice %4 {offsets = [1, 0], sizes = [1, 128], strides = [1, 1]} : vector<8x128xf32> to vector<1x128xf32>
    %50 = vector.broadcast %49 : vector<1x128xf32> to vector<96x128xf32>
    %51 = arith.mulf %7, %50 : vector<96x128xf32>
    %52 = arith.addf %51, %10 : vector<96x128xf32>
    %53 = vector.extract_strided_slice %52 {offsets = [0, 0], sizes = [32, 128], strides = [1, 1]} : vector<96x128xf32> to vector<32x128xf32>
    %54 = arith.negf %53 : vector<32x128xf32>
    %55 = math.exp %54 : vector<32x128xf32>
    %cst_18 = arith.constant 1.000000e+00 : f32
    %56 = vector.broadcast %cst_18 : f32 to vector<32x128xf32>
    %57 = arith.addf %56, %55 : vector<32x128xf32>
    %58 = arith.divf %56, %57 : vector<32x128xf32>
    %59 = vector.extract_strided_slice %52 {offsets = [32, 0], sizes = [32, 128], strides = [1, 1]} : vector<96x128xf32> to vector<32x128xf32>
    %cst_19 = arith.constant 0.000000e+00 : f32
    %60 = vector.broadcast %cst_19 : f32 to vector<32x128xf32>
    %61 = arith.maximumf %59, %60 : vector<32x128xf32>
    %62 = arith.mulf %58, %61 : vector<32x128xf32>
    %63 = vector.extract_strided_slice %52 {offsets = [64, 0], sizes = [32, 128], strides = [1, 1]} : vector<96x128xf32> to vector<32x128xf32>
    %64 = arith.negf %63 : vector<32x128xf32>
    %65 = math.exp %64 : vector<32x128xf32>
    %cst_20 = arith.constant 1.000000e+00 : f32
    %66 = vector.broadcast %cst_20 : f32 to vector<32x128xf32>
    %67 = arith.addf %66, %65 : vector<32x128xf32>
    %68 = arith.divf %66, %67 : vector<32x128xf32>
    %cst_21 = arith.constant 0.000000e+00 : f32
    %69 = vector.broadcast %cst_21 : f32 to vector<32x128xf32>
    %70 = arith.maximumf %62, %69 : vector<32x128xf32>
    %71 = arith.mulf %68, %70 : vector<32x128xf32>
    %72 = tpu.concatenate %62, %71 in 0 : vector<32x128xf32>, vector<32x128xf32> -> vector<64x128xf32>
    %73 = vector.extract_strided_slice %1 {offsets = [1, 0], sizes = [1, 128], strides = [1, 1]} : vector<8x128xi32> to vector<1x128xi32>
    %74 = vector.extract_strided_slice %2 {offsets = [1, 0], sizes = [1, 128], strides = [1, 1]} : vector<8x128xi32> to vector<1x128xi32>
    %cst_22 = arith.constant 0.000000e+00 : f32
    %75 = vector.broadcast %cst_22 : f32 to vector<64x128xf32>
    %cst_23 = arith.constant 0.000000e+00 : f32
    %76 = vector.broadcast %cst_23 : f32 to vector<64x128xf32>
    %c0_24 = arith.constant 0 : index
    %c0_25 = arith.constant 0 : index
    %c0_26 = arith.constant 0 : index
    %77 = vector.load %arg8[%c0_24, %c0_25, %c0_26] : memref<8x64x128xf32, #tpu.memory_space<vmem>>, vector<1x64x128xf32>
    %78 = vector.shape_cast %77 : vector<1x64x128xf32> to vector<64x128xf32>
    %c0_i32_27 = arith.constant 0 : i32
    %79 = vector.broadcast %c0_i32_27 : i32 to vector<1x128xi32>
    %80 = arith.cmpi eq, %73, %79 : vector<1x128xi32>
    %81 = vector.shape_cast %80 : vector<1x128xi1> to vector<1x128xi1>
    %82 = vector.broadcast %81 : vector<1x128xi1> to vector<64x128xi1>
    %83 = arith.select %82, %78, %75 : vector<64x128xi1>, vector<64x128xf32>
    %c0_i32_28 = arith.constant 0 : i32
    %84 = vector.broadcast %c0_i32_28 : i32 to vector<1x128xi32>
    %85 = arith.cmpi eq, %74, %84 : vector<1x128xi32>
    %86 = vector.shape_cast %85 : vector<1x128xi1> to vector<1x128xi1>
    %87 = vector.broadcast %86 : vector<1x128xi1> to vector<64x128xi1>
    %88 = arith.select %87, %78, %76 : vector<64x128xi1>, vector<64x128xf32>
    %89 = vector.extract_strided_slice %83 {offsets = [0, 0], sizes = [32, 128], strides = [1, 1]} : vector<64x128xf32> to vector<32x128xf32>
    %90 = vector.extract_strided_slice %83 {offsets = [32, 0], sizes = [32, 128], strides = [1, 1]} : vector<64x128xf32> to vector<32x128xf32>
    %91 = vector.extract_strided_slice %88 {offsets = [0, 0], sizes = [32, 128], strides = [1, 1]} : vector<64x128xf32> to vector<32x128xf32>
    %92 = vector.extract_strided_slice %88 {offsets = [32, 0], sizes = [32, 128], strides = [1, 1]} : vector<64x128xf32> to vector<32x128xf32>
    %93 = tpu.concatenate %90, %92 in 0 : vector<32x128xf32>, vector<32x128xf32> -> vector<64x128xf32>
    %94 = arith.truncf %93 : vector<64x128xf32> to vector<64x128xbf16>
    %cst_29 = arith.constant dense<0.000000e+00> : vector<160x128xf32>
    %95 = tpu.matmul %14, %94, %cst_29 {dimension_numbers = #tpu.dot_dimension_numbers<[1], [0], [0], [1], [0, 0, 1, 1], [], []>} : vector<160x64xbf16>, vector<64x128xbf16>, vector<160x128xf32> -> vector<160x128xf32>
    %96 = arith.addf %95, %13 : vector<160x128xf32>
    %97 = vector.extract_strided_slice %96 {offsets = [0, 0], sizes = [32, 128], strides = [1, 1]} : vector<160x128xf32> to vector<32x128xf32>
    %98 = arith.negf %97 : vector<32x128xf32>
    %99 = math.exp %98 : vector<32x128xf32>
    %cst_30 = arith.constant 1.000000e+00 : f32
    %100 = vector.broadcast %cst_30 : f32 to vector<32x128xf32>
    %101 = arith.addf %100, %99 : vector<32x128xf32>
    %102 = arith.divf %100, %101 : vector<32x128xf32>
    %103 = vector.extract_strided_slice %96 {offsets = [32, 0], sizes = [32, 128], strides = [1, 1]} : vector<160x128xf32> to vector<32x128xf32>
    %104 = arith.negf %103 : vector<32x128xf32>
    %105 = math.exp %104 : vector<32x128xf32>
    %cst_31 = arith.constant 1.000000e+00 : f32
    %106 = vector.broadcast %cst_31 : f32 to vector<32x128xf32>
    %107 = arith.addf %106, %105 : vector<32x128xf32>
    %108 = arith.divf %106, %107 : vector<32x128xf32>
    %109 = vector.extract_strided_slice %96 {offsets = [64, 0], sizes = [96, 128], strides = [1, 1]} : vector<160x128xf32> to vector<96x128xf32>
    %110 = arith.addf %109, %52 : vector<96x128xf32>
    %111 = vector.extract_strided_slice %110 {offsets = [0, 0], sizes = [32, 128], strides = [1, 1]} : vector<96x128xf32> to vector<32x128xf32>
    %112 = arith.negf %111 : vector<32x128xf32>
    %113 = math.exp %112 : vector<32x128xf32>
    %cst_32 = arith.constant 1.000000e+00 : f32
    %114 = vector.broadcast %cst_32 : f32 to vector<32x128xf32>
    %115 = arith.addf %114, %113 : vector<32x128xf32>
    %116 = arith.divf %114, %115 : vector<32x128xf32>
    %117 = vector.extract_strided_slice %110 {offsets = [32, 0], sizes = [32, 128], strides = [1, 1]} : vector<96x128xf32> to vector<32x128xf32>
    %cst_33 = arith.constant 0.000000e+00 : f32
    %118 = vector.broadcast %cst_33 : f32 to vector<32x128xf32>
    %119 = arith.maximumf %117, %118 : vector<32x128xf32>
    %120 = arith.mulf %116, %119 : vector<32x128xf32>
    %121 = arith.mulf %102, %89 : vector<32x128xf32>
    %122 = arith.addf %120, %121 : vector<32x128xf32>
    %123 = arith.mulf %108, %91 : vector<32x128xf32>
    %124 = arith.addf %122, %123 : vector<32x128xf32>
    %125 = vector.extract_strided_slice %110 {offsets = [64, 0], sizes = [32, 128], strides = [1, 1]} : vector<96x128xf32> to vector<32x128xf32>
    %126 = arith.negf %125 : vector<32x128xf32>
    %127 = math.exp %126 : vector<32x128xf32>
    %cst_34 = arith.constant 1.000000e+00 : f32
    %128 = vector.broadcast %cst_34 : f32 to vector<32x128xf32>
    %129 = arith.addf %128, %127 : vector<32x128xf32>
    %130 = arith.divf %128, %129 : vector<32x128xf32>
    %cst_35 = arith.constant 0.000000e+00 : f32
    %131 = vector.broadcast %cst_35 : f32 to vector<32x128xf32>
    %132 = arith.maximumf %124, %131 : vector<32x128xf32>
    %133 = arith.mulf %130, %132 : vector<32x128xf32>
    %134 = tpu.concatenate %124, %133 in 0 : vector<32x128xf32>, vector<32x128xf32> -> vector<64x128xf32>
    %c0_i32_36 = arith.constant 0 : i32
    %135 = vector.broadcast %c0_i32_36 : i32 to vector<1x128xi32>
    %136 = arith.cmpi slt, %73, %135 : vector<1x128xi32>
    %137 = vector.shape_cast %136 : vector<1x128xi1> to vector<1x128xi1>
    %138 = vector.broadcast %137 : vector<1x128xi1> to vector<64x128xi1>
    %139 = arith.select %138, %72, %134 : vector<64x128xi1>, vector<64x128xf32>
    %c1 = arith.constant 1 : index
    %c0_37 = arith.constant 0 : index
    %c0_38 = arith.constant 0 : index
    %140 = vector.load %arg8[%c1, %c0_37, %c0_38] : memref<8x64x128xf32, #tpu.memory_space<vmem>>, vector<1x64x128xf32>
    %141 = vector.shape_cast %140 : vector<1x64x128xf32> to vector<64x128xf32>
    %142 = vector.shape_cast %139 : vector<64x128xf32> to vector<1x64x128xf32>
    tpu.vector_store %arg8[%c1, %c0_37, %c0_38], %142 {strides = array<i32>} : memref<8x64x128xf32, #tpu.memory_space<vmem>>, vector<1x64x128xf32>,
    %c1_i32 = arith.constant 1 : i32
    %143 = vector.broadcast %c1_i32 : i32 to vector<1x128xi32>
    %144 = arith.cmpi eq, %3, %143 : vector<1x128xi32>
    %145 = vector.extract_strided_slice %139 {offsets = [32, 0], sizes = [32, 128], strides = [1, 1]} : vector<64x128xf32> to vector<32x128xf32>
    %146 = vector.shape_cast %144 : vector<1x128xi1> to vector<1x128xi1>
    %147 = vector.broadcast %146 : vector<1x128xi1> to vector<32x128xi1>
    %148 = arith.select %147, %145, %48 : vector<32x128xi1>, vector<32x128xf32>
    %149 = vector.extract_strided_slice %4 {offsets = [2, 0], sizes = [1, 128], strides = [1, 1]} : vector<8x128xf32> to vector<1x128xf32>
    %150 = vector.broadcast %149 : vector<1x128xf32> to vector<96x128xf32>
    %151 = arith.mulf %7, %150 : vector<96x128xf32>
    %152 = arith.addf %151, %10 : vector<96x128xf32>
    %153 = vector.extract_strided_slice %152 {offsets = [0, 0], sizes = [32, 128], strides = [1, 1]} : vector<96x128xf32> to vector<32x128xf32>
    %154 = arith.negf %153 : vector<32x128xf32>
    %155 = math.exp %154 : vector<32x128xf32>
    %cst_39 = arith.constant 1.000000e+00 : f32
    %156 = vector.broadcast %cst_39 : f32 to vector<32x128xf32>
    %157 = arith.addf %156, %155 : vector<32x128xf32>
    %158 = arith.divf %156, %157 : vector<32x128xf32>
    %159 = vector.extract_strided_slice %152 {offsets = [32, 0], sizes = [32, 128], strides = [1, 1]} : vector<96x128xf32> to vector<32x128xf32>
    %cst_40 = arith.constant 0.000000e+00 : f32
    %160 = vector.broadcast %cst_40 : f32 to vector<32x128xf32>
    %161 = arith.maximumf %159, %160 : vector<32x128xf32>
    %162 = arith.mulf %158, %161 : vector<32x128xf32>
    %163 = vector.extract_strided_slice %152 {offsets = [64, 0], sizes = [32, 128], strides = [1, 1]} : vector<96x128xf32> to vector<32x128xf32>
    %164 = arith.negf %163 : vector<32x128xf32>
    %165 = math.exp %164 : vector<32x128xf32>
    %cst_41 = arith.constant 1.000000e+00 : f32
    %166 = vector.broadcast %cst_41 : f32 to vector<32x128xf32>
    %167 = arith.addf %166, %165 : vector<32x128xf32>
    %168 = arith.divf %166, %167 : vector<32x128xf32>
    %cst_42 = arith.constant 0.000000e+00 : f32
    %169 = vector.broadcast %cst_42 : f32 to vector<32x128xf32>
    %170 = arith.maximumf %162, %169 : vector<32x128xf32>
    %171 = arith.mulf %168, %170 : vector<32x128xf32>
    %172 = tpu.concatenate %162, %171 in 0 : vector<32x128xf32>, vector<32x128xf32> -> vector<64x128xf32>
    %173 = vector.extract_strided_slice %1 {offsets = [2, 0], sizes = [1, 128], strides = [1, 1]} : vector<8x128xi32> to vector<1x128xi32>
    %174 = vector.extract_strided_slice %2 {offsets = [2, 0], sizes = [1, 128], strides = [1, 1]} : vector<8x128xi32> to vector<1x128xi32>
    %cst_43 = arith.constant 0.000000e+00 : f32
    %175 = vector.broadcast %cst_43 : f32 to vector<64x128xf32>
    %cst_44 = arith.constant 0.000000e+00 : f32
    %176 = vector.broadcast %cst_44 : f32 to vector<64x128xf32>
    %c0_45 = arith.constant 0 : index
    %c0_46 = arith.constant 0 : index
    %c0_47 = arith.constant 0 : index
    %177 = vector.load %arg8[%c0_45, %c0_46, %c0_47] : memref<8x64x128xf32, #tpu.memory_space<vmem>>, vector<1x64x128xf32>
    %178 = vector.shape_cast %177 : vector<1x64x128xf32> to vector<64x128xf32>
    %c0_i32_48 = arith.constant 0 : i32
    %179 = vector.broadcast %c0_i32_48 : i32 to vector<1x128xi32>
    %180 = arith.cmpi eq, %173, %179 : vector<1x128xi32>
    %181 = vector.shape_cast %180 : vector<1x128xi1> to vector<1x128xi1>
    %182 = vector.broadcast %181 : vector<1x128xi1> to vector<64x128xi1>
    %183 = arith.select %182, %178, %175 : vector<64x128xi1>, vector<64x128xf32>
    %c0_i32_49 = arith.constant 0 : i32
    %184 = vector.broadcast %c0_i32_49 : i32 to vector<1x128xi32>
    %185 = arith.cmpi eq, %174, %184 : vector<1x128xi32>
    %186 = vector.shape_cast %185 : vector<1x128xi1> to vector<1x128xi1>
    %187 = vector.broadcast %186 : vector<1x128xi1> to vector<64x128xi1>
    %188 = arith.select %187, %178, %176 : vector<64x128xi1>, vector<64x128xf32>
    %c1_50 = arith.constant 1 : index
    %c0_51 = arith.constant 0 : index
    %c0_52 = arith.constant 0 : index
    %189 = vector.load %arg8[%c1_50, %c0_51, %c0_52] : memref<8x64x128xf32, #tpu.memory_space<vmem>>, vector<1x64x128xf32>
    %190 = vector.shape_cast %189 : vector<1x64x128xf32> to vector<64x128xf32>
    %c1_i32_53 = arith.constant 1 : i32
    %191 = vector.broadcast %c1_i32_53 : i32 to vector<1x128xi32>
    %192 = arith.cmpi eq, %173, %191 : vector<1x128xi32>
    %193 = vector.shape_cast %192 : vector<1x128xi1> to vector<1x128xi1>
    %194 = vector.broadcast %193 : vector<1x128xi1> to vector<64x128xi1>
    %195 = arith.select %194, %190, %183 : vector<64x128xi1>, vector<64x128xf32>
    %c1_i32_54 = arith.constant 1 : i32
    %196 = vector.broadcast %c1_i32_54 : i32 to vector<1x128xi32>
    %197 = arith.cmpi eq, %174, %196 : vector<1x128xi32>
    %198 = vector.shape_cast %197 : vector<1x128xi1> to vector<1x128xi1>
    %199 = vector.broadcast %198 : vector<1x128xi1> to vector<64x128xi1>
    %200 = arith.select %199, %190, %188 : vector<64x128xi1>, vector<64x128xf32>
    %201 = vector.extract_strided_slice %195 {offsets = [0, 0], sizes = [32, 128], strides = [1, 1]} : vector<64x128xf32> to vector<32x128xf32>
    %202 = vector.extract_strided_slice %195 {offsets = [32, 0], sizes = [32, 128], strides = [1, 1]} : vector<64x128xf32> to vector<32x128xf32>
    %203 = vector.extract_strided_slice %200 {offsets = [0, 0], sizes = [32, 128], strides = [1, 1]} : vector<64x128xf32> to vector<32x128xf32>
    %204 = vector.extract_strided_slice %200 {offsets = [32, 0], sizes = [32, 128], strides = [1, 1]} : vector<64x128xf32> to vector<32x128xf32>
    %205 = tpu.concatenate %202, %204 in 0 : vector<32x128xf32>, vector<32x128xf32> -> vector<64x128xf32>
    %206 = arith.truncf %205 : vector<64x128xf32> to vector<64x128xbf16>
    %cst_55 = arith.constant dense<0.000000e+00> : vector<160x128xf32>
    %207 = tpu.matmul %14, %206, %cst_55 {dimension_numbers = #tpu.dot_dimension_numbers<[1], [0], [0], [1], [0, 0, 1, 1], [], []>} : vector<160x64xbf16>, vector<64x128xbf16>, vector<160x128xf32> -> vector<160x128xf32>
    %208 = arith.addf %207, %13 : vector<160x128xf32>
    %209 = vector.extract_strided_slice %208 {offsets = [0, 0], sizes = [32, 128], strides = [1, 1]} : vector<160x128xf32> to vector<32x128xf32>
    %210 = arith.negf %209 : vector<32x128xf32>
    %211 = math.exp %210 : vector<32x128xf32>
    %cst_56 = arith.constant 1.000000e+00 : f32
    %212 = vector.broadcast %cst_56 : f32 to vector<32x128xf32>
    %213 = arith.addf %212, %211 : vector<32x128xf32>
    %214 = arith.divf %212, %213 : vector<32x128xf32>
    %215 = vector.extract_strided_slice %208 {offsets = [32, 0], sizes = [32, 128], strides = [1, 1]} : vector<160x128xf32> to vector<32x128xf32>
    %216 = arith.negf %215 : vector<32x128xf32>
    %217 = math.exp %216 : vector<32x128xf32>
    %cst_57 = arith.constant 1.000000e+00 : f32
    %218 = vector.broadcast %cst_57 : f32 to vector<32x128xf32>
    %219 = arith.addf %218, %217 : vector<32x128xf32>
    %220 = arith.divf %218, %219 : vector<32x128xf32>
    %221 = vector.extract_strided_slice %208 {offsets = [64, 0], sizes = [96, 128], strides = [1, 1]} : vector<160x128xf32> to vector<96x128xf32>
    %222 = arith.addf %221, %152 : vector<96x128xf32>
    %223 = vector.extract_strided_slice %222 {offsets = [0, 0], sizes = [32, 128], strides = [1, 1]} : vector<96x128xf32> to vector<32x128xf32>
    %224 = arith.negf %223 : vector<32x128xf32>
    %225 = math.exp %224 : vector<32x128xf32>
    %cst_58 = arith.constant 1.000000e+00 : f32
    %226 = vector.broadcast %cst_58 : f32 to vector<32x128xf32>
    %227 = arith.addf %226, %225 : vector<32x128xf32>
    %228 = arith.divf %226, %227 : vector<32x128xf32>
    %229 = vector.extract_strided_slice %222 {offsets = [32, 0], sizes = [32, 128], strides = [1, 1]} : vector<96x128xf32> to vector<32x128xf32>
    %cst_59 = arith.constant 0.000000e+00 : f32
    %230 = vector.broadcast %cst_59 : f32 to vector<32x128xf32>
    %231 = arith.maximumf %229, %230 : vector<32x128xf32>
    %232 = arith.mulf %228, %231 : vector<32x128xf32>
    %233 = arith.mulf %214, %201 : vector<32x128xf32>
    %234 = arith.addf %232, %233 : vector<32x128xf32>
    %235 = arith.mulf %220, %203 : vector<32x128xf32>
    %236 = arith.addf %234, %235 : vector<32x128xf32>
    %237 = vector.extract_strided_slice %222 {offsets = [64, 0], sizes = [32, 128], strides = [1, 1]} : vector<96x128xf32> to vector<32x128xf32>
    %238 = arith.negf %237 : vector<32x128xf32>
    %239 = math.exp %238 : vector<32x128xf32>
    %cst_60 = arith.constant 1.000000e+00 : f32
    %240 = vector.broadcast %cst_60 : f32 to vector<32x128xf32>
    %241 = arith.addf %240, %239 : vector<32x128xf32>
    %242 = arith.divf %240, %241 : vector<32x128xf32>
    %cst_61 = arith.constant 0.000000e+00 : f32
    %243 = vector.broadcast %cst_61 : f32 to vector<32x128xf32>
    %244 = arith.maximumf %236, %243 : vector<32x128xf32>
    %245 = arith.mulf %242, %244 : vector<32x128xf32>
    %246 = tpu.concatenate %236, %245 in 0 : vector<32x128xf32>, vector<32x128xf32> -> vector<64x128xf32>
    %c0_i32_62 = arith.constant 0 : i32
    %247 = vector.broadcast %c0_i32_62 : i32 to vector<1x128xi32>
    %248 = arith.cmpi slt, %173, %247 : vector<1x128xi32>
    %249 = vector.shape_cast %248 : vector<1x128xi1> to vector<1x128xi1>
    %250 = vector.broadcast %249 : vector<1x128xi1> to vector<64x128xi1>
    %251 = arith.select %250, %172, %246 : vector<64x128xi1>, vector<64x128xf32>
    %c2 = arith.constant 2 : index
    %c0_63 = arith.constant 0 : index
    %c0_64 = arith.constant 0 : index
    %252 = vector.load %arg8[%c2, %c0_63, %c0_64] : memref<8x64x128xf32, #tpu.memory_space<vmem>>, vector<1x64x128xf32>
    %253 = vector.shape_cast %252 : vector<1x64x128xf32> to vector<64x128xf32>
    %254 = vector.shape_cast %251 : vector<64x128xf32> to vector<1x64x128xf32>
    tpu.vector_store %arg8[%c2, %c0_63, %c0_64], %254 {strides = array<i32>} : memref<8x64x128xf32, #tpu.memory_space<vmem>>, vector<1x64x128xf32>,
    %c2_i32 = arith.constant 2 : i32
    %255 = vector.broadcast %c2_i32 : i32 to vector<1x128xi32>
    %256 = arith.cmpi eq, %3, %255 : vector<1x128xi32>
    %257 = vector.extract_strided_slice %251 {offsets = [32, 0], sizes = [32, 128], strides = [1, 1]} : vector<64x128xf32> to vector<32x128xf32>
    %258 = vector.shape_cast %256 : vector<1x128xi1> to vector<1x128xi1>
    %259 = vector.broadcast %258 : vector<1x128xi1> to vector<32x128xi1>
    %260 = arith.select %259, %257, %148 : vector<32x128xi1>, vector<32x128xf32>
    %261 = vector.extract_strided_slice %4 {offsets = [3, 0], sizes = [1, 128], strides = [1, 1]} : vector<8x128xf32> to vector<1x128xf32>
    %262 = vector.broadcast %261 : vector<1x128xf32> to vector<96x128xf32>
    %263 = arith.mulf %7, %262 : vector<96x128xf32>
    %264 = arith.addf %263, %10 : vector<96x128xf32>
    %265 = vector.extract_strided_slice %264 {offsets = [0, 0], sizes = [32, 128], strides = [1, 1]} : vector<96x128xf32> to vector<32x128xf32>
    %266 = arith.negf %265 : vector<32x128xf32>
    %267 = math.exp %266 : vector<32x128xf32>
    %cst_65 = arith.constant 1.000000e+00 : f32
    %268 = vector.broadcast %cst_65 : f32 to vector<32x128xf32>
    %269 = arith.addf %268, %267 : vector<32x128xf32>
    %270 = arith.divf %268, %269 : vector<32x128xf32>
    %271 = vector.extract_strided_slice %264 {offsets = [32, 0], sizes = [32, 128], strides = [1, 1]} : vector<96x128xf32> to vector<32x128xf32>
    %cst_66 = arith.constant 0.000000e+00 : f32
    %272 = vector.broadcast %cst_66 : f32 to vector<32x128xf32>
    %273 = arith.maximumf %271, %272 : vector<32x128xf32>
    %274 = arith.mulf %270, %273 : vector<32x128xf32>
    %275 = vector.extract_strided_slice %264 {offsets = [64, 0], sizes = [32, 128], strides = [1, 1]} : vector<96x128xf32> to vector<32x128xf32>
    %276 = arith.negf %275 : vector<32x128xf32>
    %277 = math.exp %276 : vector<32x128xf32>
    %cst_67 = arith.constant 1.000000e+00 : f32
    %278 = vector.broadcast %cst_67 : f32 to vector<32x128xf32>
    %279 = arith.addf %278, %277 : vector<32x128xf32>
    %280 = arith.divf %278, %279 : vector<32x128xf32>
    %cst_68 = arith.constant 0.000000e+00 : f32
    %281 = vector.broadcast %cst_68 : f32 to vector<32x128xf32>
    %282 = arith.maximumf %274, %281 : vector<32x128xf32>
    %283 = arith.mulf %280, %282 : vector<32x128xf32>
    %284 = tpu.concatenate %274, %283 in 0 : vector<32x128xf32>, vector<32x128xf32> -> vector<64x128xf32>
    %285 = vector.extract_strided_slice %1 {offsets = [3, 0], sizes = [1, 128], strides = [1, 1]} : vector<8x128xi32> to vector<1x128xi32>
    %286 = vector.extract_strided_slice %2 {offsets = [3, 0], sizes = [1, 128], strides = [1, 1]} : vector<8x128xi32> to vector<1x128xi32>
    %cst_69 = arith.constant 0.000000e+00 : f32
    %287 = vector.broadcast %cst_69 : f32 to vector<64x128xf32>
    %cst_70 = arith.constant 0.000000e+00 : f32
    %288 = vector.broadcast %cst_70 : f32 to vector<64x128xf32>
    %c0_71 = arith.constant 0 : index
    %c0_72 = arith.constant 0 : index
    %c0_73 = arith.constant 0 : index
    %289 = vector.load %arg8[%c0_71, %c0_72, %c0_73] : memref<8x64x128xf32, #tpu.memory_space<vmem>>, vector<1x64x128xf32>
    %290 = vector.shape_cast %289 : vector<1x64x128xf32> to vector<64x128xf32>
    %c0_i32_74 = arith.constant 0 : i32
    %291 = vector.broadcast %c0_i32_74 : i32 to vector<1x128xi32>
    %292 = arith.cmpi eq, %285, %291 : vector<1x128xi32>
    %293 = vector.shape_cast %292 : vector<1x128xi1> to vector<1x128xi1>
    %294 = vector.broadcast %293 : vector<1x128xi1> to vector<64x128xi1>
    %295 = arith.select %294, %290, %287 : vector<64x128xi1>, vector<64x128xf32>
    %c0_i32_75 = arith.constant 0 : i32
    %296 = vector.broadcast %c0_i32_75 : i32 to vector<1x128xi32>
    %297 = arith.cmpi eq, %286, %296 : vector<1x128xi32>
    %298 = vector.shape_cast %297 : vector<1x128xi1> to vector<1x128xi1>
    %299 = vector.broadcast %298 : vector<1x128xi1> to vector<64x128xi1>
    %300 = arith.select %299, %290, %288 : vector<64x128xi1>, vector<64x128xf32>
    %c1_76 = arith.constant 1 : index
    %c0_77 = arith.constant 0 : index
    %c0_78 = arith.constant 0 : index
    %301 = vector.load %arg8[%c1_76, %c0_77, %c0_78] : memref<8x64x128xf32, #tpu.memory_space<vmem>>, vector<1x64x128xf32>
    %302 = vector.shape_cast %301 : vector<1x64x128xf32> to vector<64x128xf32>
    %c1_i32_79 = arith.constant 1 : i32
    %303 = vector.broadcast %c1_i32_79 : i32 to vector<1x128xi32>
    %304 = arith.cmpi eq, %285, %303 : vector<1x128xi32>
    %305 = vector.shape_cast %304 : vector<1x128xi1> to vector<1x128xi1>
    %306 = vector.broadcast %305 : vector<1x128xi1> to vector<64x128xi1>
    %307 = arith.select %306, %302, %295 : vector<64x128xi1>, vector<64x128xf32>
    %c1_i32_80 = arith.constant 1 : i32
    %308 = vector.broadcast %c1_i32_80 : i32 to vector<1x128xi32>
    %309 = arith.cmpi eq, %286, %308 : vector<1x128xi32>
    %310 = vector.shape_cast %309 : vector<1x128xi1> to vector<1x128xi1>
    %311 = vector.broadcast %310 : vector<1x128xi1> to vector<64x128xi1>
    %312 = arith.select %311, %302, %300 : vector<64x128xi1>, vector<64x128xf32>
    %c2_81 = arith.constant 2 : index
    %c0_82 = arith.constant 0 : index
    %c0_83 = arith.constant 0 : index
    %313 = vector.load %arg8[%c2_81, %c0_82, %c0_83] : memref<8x64x128xf32, #tpu.memory_space<vmem>>, vector<1x64x128xf32>
    %314 = vector.shape_cast %313 : vector<1x64x128xf32> to vector<64x128xf32>
    %c2_i32_84 = arith.constant 2 : i32
    %315 = vector.broadcast %c2_i32_84 : i32 to vector<1x128xi32>
    %316 = arith.cmpi eq, %285, %315 : vector<1x128xi32>
    %317 = vector.shape_cast %316 : vector<1x128xi1> to vector<1x128xi1>
    %318 = vector.broadcast %317 : vector<1x128xi1> to vector<64x128xi1>
    %319 = arith.select %318, %314, %307 : vector<64x128xi1>, vector<64x128xf32>
    %c2_i32_85 = arith.constant 2 : i32
    %320 = vector.broadcast %c2_i32_85 : i32 to vector<1x128xi32>
    %321 = arith.cmpi eq, %286, %320 : vector<1x128xi32>
    %322 = vector.shape_cast %321 : vector<1x128xi1> to vector<1x128xi1>
    %323 = vector.broadcast %322 : vector<1x128xi1> to vector<64x128xi1>
    %324 = arith.select %323, %314, %312 : vector<64x128xi1>, vector<64x128xf32>
    %325 = vector.extract_strided_slice %319 {offsets = [0, 0], sizes = [32, 128], strides = [1, 1]} : vector<64x128xf32> to vector<32x128xf32>
    %326 = vector.extract_strided_slice %319 {offsets = [32, 0], sizes = [32, 128], strides = [1, 1]} : vector<64x128xf32> to vector<32x128xf32>
    %327 = vector.extract_strided_slice %324 {offsets = [0, 0], sizes = [32, 128], strides = [1, 1]} : vector<64x128xf32> to vector<32x128xf32>
    %328 = vector.extract_strided_slice %324 {offsets = [32, 0], sizes = [32, 128], strides = [1, 1]} : vector<64x128xf32> to vector<32x128xf32>
    %329 = tpu.concatenate %326, %328 in 0 : vector<32x128xf32>, vector<32x128xf32> -> vector<64x128xf32>
    %330 = arith.truncf %329 : vector<64x128xf32> to vector<64x128xbf16>
    %cst_86 = arith.constant dense<0.000000e+00> : vector<160x128xf32>
    %331 = tpu.matmul %14, %330, %cst_86 {dimension_numbers = #tpu.dot_dimension_numbers<[1], [0], [0], [1], [0, 0, 1, 1], [], []>} : vector<160x64xbf16>, vector<64x128xbf16>, vector<160x128xf32> -> vector<160x128xf32>
    %332 = arith.addf %331, %13 : vector<160x128xf32>
    %333 = vector.extract_strided_slice %332 {offsets = [0, 0], sizes = [32, 128], strides = [1, 1]} : vector<160x128xf32> to vector<32x128xf32>
    %334 = arith.negf %333 : vector<32x128xf32>
    %335 = math.exp %334 : vector<32x128xf32>
    %cst_87 = arith.constant 1.000000e+00 : f32
    %336 = vector.broadcast %cst_87 : f32 to vector<32x128xf32>
    %337 = arith.addf %336, %335 : vector<32x128xf32>
    %338 = arith.divf %336, %337 : vector<32x128xf32>
    %339 = vector.extract_strided_slice %332 {offsets = [32, 0], sizes = [32, 128], strides = [1, 1]} : vector<160x128xf32> to vector<32x128xf32>
    %340 = arith.negf %339 : vector<32x128xf32>
    %341 = math.exp %340 : vector<32x128xf32>
    %cst_88 = arith.constant 1.000000e+00 : f32
    %342 = vector.broadcast %cst_88 : f32 to vector<32x128xf32>
    %343 = arith.addf %342, %341 : vector<32x128xf32>
    %344 = arith.divf %342, %343 : vector<32x128xf32>
    %345 = vector.extract_strided_slice %332 {offsets = [64, 0], sizes = [96, 128], strides = [1, 1]} : vector<160x128xf32> to vector<96x128xf32>
    %346 = arith.addf %345, %264 : vector<96x128xf32>
    %347 = vector.extract_strided_slice %346 {offsets = [0, 0], sizes = [32, 128], strides = [1, 1]} : vector<96x128xf32> to vector<32x128xf32>
    %348 = arith.negf %347 : vector<32x128xf32>
    %349 = math.exp %348 : vector<32x128xf32>
    %cst_89 = arith.constant 1.000000e+00 : f32
    %350 = vector.broadcast %cst_89 : f32 to vector<32x128xf32>
    %351 = arith.addf %350, %349 : vector<32x128xf32>
    %352 = arith.divf %350, %351 : vector<32x128xf32>
    %353 = vector.extract_strided_slice %346 {offsets = [32, 0], sizes = [32, 128], strides = [1, 1]} : vector<96x128xf32> to vector<32x128xf32>
    %cst_90 = arith.constant 0.000000e+00 : f32
    %354 = vector.broadcast %cst_90 : f32 to vector<32x128xf32>
    %355 = arith.maximumf %353, %354 : vector<32x128xf32>
    %356 = arith.mulf %352, %355 : vector<32x128xf32>
    %357 = arith.mulf %338, %325 : vector<32x128xf32>
    %358 = arith.addf %356, %357 : vector<32x128xf32>
    %359 = arith.mulf %344, %327 : vector<32x128xf32>
    %360 = arith.addf %358, %359 : vector<32x128xf32>
    %361 = vector.extract_strided_slice %346 {offsets = [64, 0], sizes = [32, 128], strides = [1, 1]} : vector<96x128xf32> to vector<32x128xf32>
    %362 = arith.negf %361 : vector<32x128xf32>
    %363 = math.exp %362 : vector<32x128xf32>
    %cst_91 = arith.constant 1.000000e+00 : f32
    %364 = vector.broadcast %cst_91 : f32 to vector<32x128xf32>
    %365 = arith.addf %364, %363 : vector<32x128xf32>
    %366 = arith.divf %364, %365 : vector<32x128xf32>
    %cst_92 = arith.constant 0.000000e+00 : f32
    %367 = vector.broadcast %cst_92 : f32 to vector<32x128xf32>
    %368 = arith.maximumf %360, %367 : vector<32x128xf32>
    %369 = arith.mulf %366, %368 : vector<32x128xf32>
    %370 = tpu.concatenate %360, %369 in 0 : vector<32x128xf32>, vector<32x128xf32> -> vector<64x128xf32>
    %c0_i32_93 = arith.constant 0 : i32
    %371 = vector.broadcast %c0_i32_93 : i32 to vector<1x128xi32>
    %372 = arith.cmpi slt, %285, %371 : vector<1x128xi32>
    %373 = vector.shape_cast %372 : vector<1x128xi1> to vector<1x128xi1>
    %374 = vector.broadcast %373 : vector<1x128xi1> to vector<64x128xi1>
    %375 = arith.select %374, %284, %370 : vector<64x128xi1>, vector<64x128xf32>
    %c3 = arith.constant 3 : index
    %c0_94 = arith.constant 0 : index
    %c0_95 = arith.constant 0 : index
    %376 = vector.load %arg8[%c3, %c0_94, %c0_95] : memref<8x64x128xf32, #tpu.memory_space<vmem>>, vector<1x64x128xf32>
    %377 = vector.shape_cast %376 : vector<1x64x128xf32> to vector<64x128xf32>
    %378 = vector.shape_cast %375 : vector<64x128xf32> to vector<1x64x128xf32>
    tpu.vector_store %arg8[%c3, %c0_94, %c0_95], %378 {strides = array<i32>} : memref<8x64x128xf32, #tpu.memory_space<vmem>>, vector<1x64x128xf32>,
    %c3_i32 = arith.constant 3 : i32
    %379 = vector.broadcast %c3_i32 : i32 to vector<1x128xi32>
    %380 = arith.cmpi eq, %3, %379 : vector<1x128xi32>
    %381 = vector.extract_strided_slice %375 {offsets = [32, 0], sizes = [32, 128], strides = [1, 1]} : vector<64x128xf32> to vector<32x128xf32>
    %382 = vector.shape_cast %380 : vector<1x128xi1> to vector<1x128xi1>
    %383 = vector.broadcast %382 : vector<1x128xi1> to vector<32x128xi1>
    %384 = arith.select %383, %381, %260 : vector<32x128xi1>, vector<32x128xf32>
    %385 = vector.extract_strided_slice %4 {offsets = [4, 0], sizes = [1, 128], strides = [1, 1]} : vector<8x128xf32> to vector<1x128xf32>
    %386 = vector.broadcast %385 : vector<1x128xf32> to vector<96x128xf32>
    %387 = arith.mulf %7, %386 : vector<96x128xf32>
    %388 = arith.addf %387, %10 : vector<96x128xf32>
    %389 = vector.extract_strided_slice %388 {offsets = [0, 0], sizes = [32, 128], strides = [1, 1]} : vector<96x128xf32> to vector<32x128xf32>
    %390 = arith.negf %389 : vector<32x128xf32>
    %391 = math.exp %390 : vector<32x128xf32>
    %cst_96 = arith.constant 1.000000e+00 : f32
    %392 = vector.broadcast %cst_96 : f32 to vector<32x128xf32>
    %393 = arith.addf %392, %391 : vector<32x128xf32>
    %394 = arith.divf %392, %393 : vector<32x128xf32>
    %395 = vector.extract_strided_slice %388 {offsets = [32, 0], sizes = [32, 128], strides = [1, 1]} : vector<96x128xf32> to vector<32x128xf32>
    %cst_97 = arith.constant 0.000000e+00 : f32
    %396 = vector.broadcast %cst_97 : f32 to vector<32x128xf32>
    %397 = arith.maximumf %395, %396 : vector<32x128xf32>
    %398 = arith.mulf %394, %397 : vector<32x128xf32>
    %399 = vector.extract_strided_slice %388 {offsets = [64, 0], sizes = [32, 128], strides = [1, 1]} : vector<96x128xf32> to vector<32x128xf32>
    %400 = arith.negf %399 : vector<32x128xf32>
    %401 = math.exp %400 : vector<32x128xf32>
    %cst_98 = arith.constant 1.000000e+00 : f32
    %402 = vector.broadcast %cst_98 : f32 to vector<32x128xf32>
    %403 = arith.addf %402, %401 : vector<32x128xf32>
    %404 = arith.divf %402, %403 : vector<32x128xf32>
    %cst_99 = arith.constant 0.000000e+00 : f32
    %405 = vector.broadcast %cst_99 : f32 to vector<32x128xf32>
    %406 = arith.maximumf %398, %405 : vector<32x128xf32>
    %407 = arith.mulf %404, %406 : vector<32x128xf32>
    %408 = tpu.concatenate %398, %407 in 0 : vector<32x128xf32>, vector<32x128xf32> -> vector<64x128xf32>
    %409 = vector.extract_strided_slice %1 {offsets = [4, 0], sizes = [1, 128], strides = [1, 1]} : vector<8x128xi32> to vector<1x128xi32>
    %410 = vector.extract_strided_slice %2 {offsets = [4, 0], sizes = [1, 128], strides = [1, 1]} : vector<8x128xi32> to vector<1x128xi32>
    %cst_100 = arith.constant 0.000000e+00 : f32
    %411 = vector.broadcast %cst_100 : f32 to vector<64x128xf32>
    %cst_101 = arith.constant 0.000000e+00 : f32
    %412 = vector.broadcast %cst_101 : f32 to vector<64x128xf32>
    %c0_102 = arith.constant 0 : index
    %c0_103 = arith.constant 0 : index
    %c0_104 = arith.constant 0 : index
    %413 = vector.load %arg8[%c0_102, %c0_103, %c0_104] : memref<8x64x128xf32, #tpu.memory_space<vmem>>, vector<1x64x128xf32>
    %414 = vector.shape_cast %413 : vector<1x64x128xf32> to vector<64x128xf32>
    %c0_i32_105 = arith.constant 0 : i32
    %415 = vector.broadcast %c0_i32_105 : i32 to vector<1x128xi32>
    %416 = arith.cmpi eq, %409, %415 : vector<1x128xi32>
    %417 = vector.shape_cast %416 : vector<1x128xi1> to vector<1x128xi1>
    %418 = vector.broadcast %417 : vector<1x128xi1> to vector<64x128xi1>
    %419 = arith.select %418, %414, %411 : vector<64x128xi1>, vector<64x128xf32>
    %c0_i32_106 = arith.constant 0 : i32
    %420 = vector.broadcast %c0_i32_106 : i32 to vector<1x128xi32>
    %421 = arith.cmpi eq, %410, %420 : vector<1x128xi32>
    %422 = vector.shape_cast %421 : vector<1x128xi1> to vector<1x128xi1>
    %423 = vector.broadcast %422 : vector<1x128xi1> to vector<64x128xi1>
    %424 = arith.select %423, %414, %412 : vector<64x128xi1>, vector<64x128xf32>
    %c1_107 = arith.constant 1 : index
    %c0_108 = arith.constant 0 : index
    %c0_109 = arith.constant 0 : index
    %425 = vector.load %arg8[%c1_107, %c0_108, %c0_109] : memref<8x64x128xf32, #tpu.memory_space<vmem>>, vector<1x64x128xf32>
    %426 = vector.shape_cast %425 : vector<1x64x128xf32> to vector<64x128xf32>
    %c1_i32_110 = arith.constant 1 : i32
    %427 = vector.broadcast %c1_i32_110 : i32 to vector<1x128xi32>
    %428 = arith.cmpi eq, %409, %427 : vector<1x128xi32>
    %429 = vector.shape_cast %428 : vector<1x128xi1> to vector<1x128xi1>
    %430 = vector.broadcast %429 : vector<1x128xi1> to vector<64x128xi1>
    %431 = arith.select %430, %426, %419 : vector<64x128xi1>, vector<64x128xf32>
    %c1_i32_111 = arith.constant 1 : i32
    %432 = vector.broadcast %c1_i32_111 : i32 to vector<1x128xi32>
    %433 = arith.cmpi eq, %410, %432 : vector<1x128xi32>
    %434 = vector.shape_cast %433 : vector<1x128xi1> to vector<1x128xi1>
    %435 = vector.broadcast %434 : vector<1x128xi1> to vector<64x128xi1>
    %436 = arith.select %435, %426, %424 : vector<64x128xi1>, vector<64x128xf32>
    %c2_112 = arith.constant 2 : index
    %c0_113 = arith.constant 0 : index
    %c0_114 = arith.constant 0 : index
    %437 = vector.load %arg8[%c2_112, %c0_113, %c0_114] : memref<8x64x128xf32, #tpu.memory_space<vmem>>, vector<1x64x128xf32>
    %438 = vector.shape_cast %437 : vector<1x64x128xf32> to vector<64x128xf32>
    %c2_i32_115 = arith.constant 2 : i32
    %439 = vector.broadcast %c2_i32_115 : i32 to vector<1x128xi32>
    %440 = arith.cmpi eq, %409, %439 : vector<1x128xi32>
    %441 = vector.shape_cast %440 : vector<1x128xi1> to vector<1x128xi1>
    %442 = vector.broadcast %441 : vector<1x128xi1> to vector<64x128xi1>
    %443 = arith.select %442, %438, %431 : vector<64x128xi1>, vector<64x128xf32>
    %c2_i32_116 = arith.constant 2 : i32
    %444 = vector.broadcast %c2_i32_116 : i32 to vector<1x128xi32>
    %445 = arith.cmpi eq, %410, %444 : vector<1x128xi32>
    %446 = vector.shape_cast %445 : vector<1x128xi1> to vector<1x128xi1>
    %447 = vector.broadcast %446 : vector<1x128xi1> to vector<64x128xi1>
    %448 = arith.select %447, %438, %436 : vector<64x128xi1>, vector<64x128xf32>
    %c3_117 = arith.constant 3 : index
    %c0_118 = arith.constant 0 : index
    %c0_119 = arith.constant 0 : index
    %449 = vector.load %arg8[%c3_117, %c0_118, %c0_119] : memref<8x64x128xf32, #tpu.memory_space<vmem>>, vector<1x64x128xf32>
    %450 = vector.shape_cast %449 : vector<1x64x128xf32> to vector<64x128xf32>
    %c3_i32_120 = arith.constant 3 : i32
    %451 = vector.broadcast %c3_i32_120 : i32 to vector<1x128xi32>
    %452 = arith.cmpi eq, %409, %451 : vector<1x128xi32>
    %453 = vector.shape_cast %452 : vector<1x128xi1> to vector<1x128xi1>
    %454 = vector.broadcast %453 : vector<1x128xi1> to vector<64x128xi1>
    %455 = arith.select %454, %450, %443 : vector<64x128xi1>, vector<64x128xf32>
    %c3_i32_121 = arith.constant 3 : i32
    %456 = vector.broadcast %c3_i32_121 : i32 to vector<1x128xi32>
    %457 = arith.cmpi eq, %410, %456 : vector<1x128xi32>
    %458 = vector.shape_cast %457 : vector<1x128xi1> to vector<1x128xi1>
    %459 = vector.broadcast %458 : vector<1x128xi1> to vector<64x128xi1>
    %460 = arith.select %459, %450, %448 : vector<64x128xi1>, vector<64x128xf32>
    %461 = vector.extract_strided_slice %455 {offsets = [0, 0], sizes = [32, 128], strides = [1, 1]} : vector<64x128xf32> to vector<32x128xf32>
    %462 = vector.extract_strided_slice %455 {offsets = [32, 0], sizes = [32, 128], strides = [1, 1]} : vector<64x128xf32> to vector<32x128xf32>
    %463 = vector.extract_strided_slice %460 {offsets = [0, 0], sizes = [32, 128], strides = [1, 1]} : vector<64x128xf32> to vector<32x128xf32>
    %464 = vector.extract_strided_slice %460 {offsets = [32, 0], sizes = [32, 128], strides = [1, 1]} : vector<64x128xf32> to vector<32x128xf32>
    %465 = tpu.concatenate %462, %464 in 0 : vector<32x128xf32>, vector<32x128xf32> -> vector<64x128xf32>
    %466 = arith.truncf %465 : vector<64x128xf32> to vector<64x128xbf16>
    %cst_122 = arith.constant dense<0.000000e+00> : vector<160x128xf32>
    %467 = tpu.matmul %14, %466, %cst_122 {dimension_numbers = #tpu.dot_dimension_numbers<[1], [0], [0], [1], [0, 0, 1, 1], [], []>} : vector<160x64xbf16>, vector<64x128xbf16>, vector<160x128xf32> -> vector<160x128xf32>
    %468 = arith.addf %467, %13 : vector<160x128xf32>
    %469 = vector.extract_strided_slice %468 {offsets = [0, 0], sizes = [32, 128], strides = [1, 1]} : vector<160x128xf32> to vector<32x128xf32>
    %470 = arith.negf %469 : vector<32x128xf32>
    %471 = math.exp %470 : vector<32x128xf32>
    %cst_123 = arith.constant 1.000000e+00 : f32
    %472 = vector.broadcast %cst_123 : f32 to vector<32x128xf32>
    %473 = arith.addf %472, %471 : vector<32x128xf32>
    %474 = arith.divf %472, %473 : vector<32x128xf32>
    %475 = vector.extract_strided_slice %468 {offsets = [32, 0], sizes = [32, 128], strides = [1, 1]} : vector<160x128xf32> to vector<32x128xf32>
    %476 = arith.negf %475 : vector<32x128xf32>
    %477 = math.exp %476 : vector<32x128xf32>
    %cst_124 = arith.constant 1.000000e+00 : f32
    %478 = vector.broadcast %cst_124 : f32 to vector<32x128xf32>
    %479 = arith.addf %478, %477 : vector<32x128xf32>
    %480 = arith.divf %478, %479 : vector<32x128xf32>
    %481 = vector.extract_strided_slice %468 {offsets = [64, 0], sizes = [96, 128], strides = [1, 1]} : vector<160x128xf32> to vector<96x128xf32>
    %482 = arith.addf %481, %388 : vector<96x128xf32>
    %483 = vector.extract_strided_slice %482 {offsets = [0, 0], sizes = [32, 128], strides = [1, 1]} : vector<96x128xf32> to vector<32x128xf32>
    %484 = arith.negf %483 : vector<32x128xf32>
    %485 = math.exp %484 : vector<32x128xf32>
    %cst_125 = arith.constant 1.000000e+00 : f32
    %486 = vector.broadcast %cst_125 : f32 to vector<32x128xf32>
    %487 = arith.addf %486, %485 : vector<32x128xf32>
    %488 = arith.divf %486, %487 : vector<32x128xf32>
    %489 = vector.extract_strided_slice %482 {offsets = [32, 0], sizes = [32, 128], strides = [1, 1]} : vector<96x128xf32> to vector<32x128xf32>
    %cst_126 = arith.constant 0.000000e+00 : f32
    %490 = vector.broadcast %cst_126 : f32 to vector<32x128xf32>
    %491 = arith.maximumf %489, %490 : vector<32x128xf32>
    %492 = arith.mulf %488, %491 : vector<32x128xf32>
    %493 = arith.mulf %474, %461 : vector<32x128xf32>
    %494 = arith.addf %492, %493 : vector<32x128xf32>
    %495 = arith.mulf %480, %463 : vector<32x128xf32>
    %496 = arith.addf %494, %495 : vector<32x128xf32>
    %497 = vector.extract_strided_slice %482 {offsets = [64, 0], sizes = [32, 128], strides = [1, 1]} : vector<96x128xf32> to vector<32x128xf32>
    %498 = arith.negf %497 : vector<32x128xf32>
    %499 = math.exp %498 : vector<32x128xf32>
    %cst_127 = arith.constant 1.000000e+00 : f32
    %500 = vector.broadcast %cst_127 : f32 to vector<32x128xf32>
    %501 = arith.addf %500, %499 : vector<32x128xf32>
    %502 = arith.divf %500, %501 : vector<32x128xf32>
    %cst_128 = arith.constant 0.000000e+00 : f32
    %503 = vector.broadcast %cst_128 : f32 to vector<32x128xf32>
    %504 = arith.maximumf %496, %503 : vector<32x128xf32>
    %505 = arith.mulf %502, %504 : vector<32x128xf32>
    %506 = tpu.concatenate %496, %505 in 0 : vector<32x128xf32>, vector<32x128xf32> -> vector<64x128xf32>
    %c0_i32_129 = arith.constant 0 : i32
    %507 = vector.broadcast %c0_i32_129 : i32 to vector<1x128xi32>
    %508 = arith.cmpi slt, %409, %507 : vector<1x128xi32>
    %509 = vector.shape_cast %508 : vector<1x128xi1> to vector<1x128xi1>
    %510 = vector.broadcast %509 : vector<1x128xi1> to vector<64x128xi1>
    %511 = arith.select %510, %408, %506 : vector<64x128xi1>, vector<64x128xf32>
    %c4 = arith.constant 4 : index
    %c0_130 = arith.constant 0 : index
    %c0_131 = arith.constant 0 : index
    %512 = vector.load %arg8[%c4, %c0_130, %c0_131] : memref<8x64x128xf32, #tpu.memory_space<vmem>>, vector<1x64x128xf32>
    %513 = vector.shape_cast %512 : vector<1x64x128xf32> to vector<64x128xf32>
    %514 = vector.shape_cast %511 : vector<64x128xf32> to vector<1x64x128xf32>
    tpu.vector_store %arg8[%c4, %c0_130, %c0_131], %514 {strides = array<i32>} : memref<8x64x128xf32, #tpu.memory_space<vmem>>, vector<1x64x128xf32>,
    %c4_i32 = arith.constant 4 : i32
    %515 = vector.broadcast %c4_i32 : i32 to vector<1x128xi32>
    %516 = arith.cmpi eq, %3, %515 : vector<1x128xi32>
    %517 = vector.extract_strided_slice %511 {offsets = [32, 0], sizes = [32, 128], strides = [1, 1]} : vector<64x128xf32> to vector<32x128xf32>
    %518 = vector.shape_cast %516 : vector<1x128xi1> to vector<1x128xi1>
    %519 = vector.broadcast %518 : vector<1x128xi1> to vector<32x128xi1>
    %520 = arith.select %519, %517, %384 : vector<32x128xi1>, vector<32x128xf32>
    %521 = vector.extract_strided_slice %4 {offsets = [5, 0], sizes = [1, 128], strides = [1, 1]} : vector<8x128xf32> to vector<1x128xf32>
    %522 = vector.broadcast %521 : vector<1x128xf32> to vector<96x128xf32>
    %523 = arith.mulf %7, %522 : vector<96x128xf32>
    %524 = arith.addf %523, %10 : vector<96x128xf32>
    %525 = vector.extract_strided_slice %524 {offsets = [0, 0], sizes = [32, 128], strides = [1, 1]} : vector<96x128xf32> to vector<32x128xf32>
    %526 = arith.negf %525 : vector<32x128xf32>
    %527 = math.exp %526 : vector<32x128xf32>
    %cst_132 = arith.constant 1.000000e+00 : f32
    %528 = vector.broadcast %cst_132 : f32 to vector<32x128xf32>
    %529 = arith.addf %528, %527 : vector<32x128xf32>
    %530 = arith.divf %528, %529 : vector<32x128xf32>
    %531 = vector.extract_strided_slice %524 {offsets = [32, 0], sizes = [32, 128], strides = [1, 1]} : vector<96x128xf32> to vector<32x128xf32>
    %cst_133 = arith.constant 0.000000e+00 : f32
    %532 = vector.broadcast %cst_133 : f32 to vector<32x128xf32>
    %533 = arith.maximumf %531, %532 : vector<32x128xf32>
    %534 = arith.mulf %530, %533 : vector<32x128xf32>
    %535 = vector.extract_strided_slice %524 {offsets = [64, 0], sizes = [32, 128], strides = [1, 1]} : vector<96x128xf32> to vector<32x128xf32>
    %536 = arith.negf %535 : vector<32x128xf32>
    %537 = math.exp %536 : vector<32x128xf32>
    %cst_134 = arith.constant 1.000000e+00 : f32
    %538 = vector.broadcast %cst_134 : f32 to vector<32x128xf32>
    %539 = arith.addf %538, %537 : vector<32x128xf32>
    %540 = arith.divf %538, %539 : vector<32x128xf32>
    %cst_135 = arith.constant 0.000000e+00 : f32
    %541 = vector.broadcast %cst_135 : f32 to vector<32x128xf32>
    %542 = arith.maximumf %534, %541 : vector<32x128xf32>
    %543 = arith.mulf %540, %542 : vector<32x128xf32>
    %544 = tpu.concatenate %534, %543 in 0 : vector<32x128xf32>, vector<32x128xf32> -> vector<64x128xf32>
    %545 = vector.extract_strided_slice %1 {offsets = [5, 0], sizes = [1, 128], strides = [1, 1]} : vector<8x128xi32> to vector<1x128xi32>
    %546 = vector.extract_strided_slice %2 {offsets = [5, 0], sizes = [1, 128], strides = [1, 1]} : vector<8x128xi32> to vector<1x128xi32>
    %cst_136 = arith.constant 0.000000e+00 : f32
    %547 = vector.broadcast %cst_136 : f32 to vector<64x128xf32>
    %cst_137 = arith.constant 0.000000e+00 : f32
    %548 = vector.broadcast %cst_137 : f32 to vector<64x128xf32>
    %c0_138 = arith.constant 0 : index
    %c0_139 = arith.constant 0 : index
    %c0_140 = arith.constant 0 : index
    %549 = vector.load %arg8[%c0_138, %c0_139, %c0_140] : memref<8x64x128xf32, #tpu.memory_space<vmem>>, vector<1x64x128xf32>
    %550 = vector.shape_cast %549 : vector<1x64x128xf32> to vector<64x128xf32>
    %c0_i32_141 = arith.constant 0 : i32
    %551 = vector.broadcast %c0_i32_141 : i32 to vector<1x128xi32>
    %552 = arith.cmpi eq, %545, %551 : vector<1x128xi32>
    %553 = vector.shape_cast %552 : vector<1x128xi1> to vector<1x128xi1>
    %554 = vector.broadcast %553 : vector<1x128xi1> to vector<64x128xi1>
    %555 = arith.select %554, %550, %547 : vector<64x128xi1>, vector<64x128xf32>
    %c0_i32_142 = arith.constant 0 : i32
    %556 = vector.broadcast %c0_i32_142 : i32 to vector<1x128xi32>
    %557 = arith.cmpi eq, %546, %556 : vector<1x128xi32>
    %558 = vector.shape_cast %557 : vector<1x128xi1> to vector<1x128xi1>
    %559 = vector.broadcast %558 : vector<1x128xi1> to vector<64x128xi1>
    %560 = arith.select %559, %550, %548 : vector<64x128xi1>, vector<64x128xf32>
    %c1_143 = arith.constant 1 : index
    %c0_144 = arith.constant 0 : index
    %c0_145 = arith.constant 0 : index
    %561 = vector.load %arg8[%c1_143, %c0_144, %c0_145] : memref<8x64x128xf32, #tpu.memory_space<vmem>>, vector<1x64x128xf32>
    %562 = vector.shape_cast %561 : vector<1x64x128xf32> to vector<64x128xf32>
    %c1_i32_146 = arith.constant 1 : i32
    %563 = vector.broadcast %c1_i32_146 : i32 to vector<1x128xi32>
    %564 = arith.cmpi eq, %545, %563 : vector<1x128xi32>
    %565 = vector.shape_cast %564 : vector<1x128xi1> to vector<1x128xi1>
    %566 = vector.broadcast %565 : vector<1x128xi1> to vector<64x128xi1>
    %567 = arith.select %566, %562, %555 : vector<64x128xi1>, vector<64x128xf32>
    %c1_i32_147 = arith.constant 1 : i32
    %568 = vector.broadcast %c1_i32_147 : i32 to vector<1x128xi32>
    %569 = arith.cmpi eq, %546, %568 : vector<1x128xi32>
    %570 = vector.shape_cast %569 : vector<1x128xi1> to vector<1x128xi1>
    %571 = vector.broadcast %570 : vector<1x128xi1> to vector<64x128xi1>
    %572 = arith.select %571, %562, %560 : vector<64x128xi1>, vector<64x128xf32>
    %c2_148 = arith.constant 2 : index
    %c0_149 = arith.constant 0 : index
    %c0_150 = arith.constant 0 : index
    %573 = vector.load %arg8[%c2_148, %c0_149, %c0_150] : memref<8x64x128xf32, #tpu.memory_space<vmem>>, vector<1x64x128xf32>
    %574 = vector.shape_cast %573 : vector<1x64x128xf32> to vector<64x128xf32>
    %c2_i32_151 = arith.constant 2 : i32
    %575 = vector.broadcast %c2_i32_151 : i32 to vector<1x128xi32>
    %576 = arith.cmpi eq, %545, %575 : vector<1x128xi32>
    %577 = vector.shape_cast %576 : vector<1x128xi1> to vector<1x128xi1>
    %578 = vector.broadcast %577 : vector<1x128xi1> to vector<64x128xi1>
    %579 = arith.select %578, %574, %567 : vector<64x128xi1>, vector<64x128xf32>
    %c2_i32_152 = arith.constant 2 : i32
    %580 = vector.broadcast %c2_i32_152 : i32 to vector<1x128xi32>
    %581 = arith.cmpi eq, %546, %580 : vector<1x128xi32>
    %582 = vector.shape_cast %581 : vector<1x128xi1> to vector<1x128xi1>
    %583 = vector.broadcast %582 : vector<1x128xi1> to vector<64x128xi1>
    %584 = arith.select %583, %574, %572 : vector<64x128xi1>, vector<64x128xf32>
    %c3_153 = arith.constant 3 : index
    %c0_154 = arith.constant 0 : index
    %c0_155 = arith.constant 0 : index
    %585 = vector.load %arg8[%c3_153, %c0_154, %c0_155] : memref<8x64x128xf32, #tpu.memory_space<vmem>>, vector<1x64x128xf32>
    %586 = vector.shape_cast %585 : vector<1x64x128xf32> to vector<64x128xf32>
    %c3_i32_156 = arith.constant 3 : i32
    %587 = vector.broadcast %c3_i32_156 : i32 to vector<1x128xi32>
    %588 = arith.cmpi eq, %545, %587 : vector<1x128xi32>
    %589 = vector.shape_cast %588 : vector<1x128xi1> to vector<1x128xi1>
    %590 = vector.broadcast %589 : vector<1x128xi1> to vector<64x128xi1>
    %591 = arith.select %590, %586, %579 : vector<64x128xi1>, vector<64x128xf32>
    %c3_i32_157 = arith.constant 3 : i32
    %592 = vector.broadcast %c3_i32_157 : i32 to vector<1x128xi32>
    %593 = arith.cmpi eq, %546, %592 : vector<1x128xi32>
    %594 = vector.shape_cast %593 : vector<1x128xi1> to vector<1x128xi1>
    %595 = vector.broadcast %594 : vector<1x128xi1> to vector<64x128xi1>
    %596 = arith.select %595, %586, %584 : vector<64x128xi1>, vector<64x128xf32>
    %c4_158 = arith.constant 4 : index
    %c0_159 = arith.constant 0 : index
    %c0_160 = arith.constant 0 : index
    %597 = vector.load %arg8[%c4_158, %c0_159, %c0_160] : memref<8x64x128xf32, #tpu.memory_space<vmem>>, vector<1x64x128xf32>
    %598 = vector.shape_cast %597 : vector<1x64x128xf32> to vector<64x128xf32>
    %c4_i32_161 = arith.constant 4 : i32
    %599 = vector.broadcast %c4_i32_161 : i32 to vector<1x128xi32>
    %600 = arith.cmpi eq, %545, %599 : vector<1x128xi32>
    %601 = vector.shape_cast %600 : vector<1x128xi1> to vector<1x128xi1>
    %602 = vector.broadcast %601 : vector<1x128xi1> to vector<64x128xi1>
    %603 = arith.select %602, %598, %591 : vector<64x128xi1>, vector<64x128xf32>
    %c4_i32_162 = arith.constant 4 : i32
    %604 = vector.broadcast %c4_i32_162 : i32 to vector<1x128xi32>
    %605 = arith.cmpi eq, %546, %604 : vector<1x128xi32>
    %606 = vector.shape_cast %605 : vector<1x128xi1> to vector<1x128xi1>
    %607 = vector.broadcast %606 : vector<1x128xi1> to vector<64x128xi1>
    %608 = arith.select %607, %598, %596 : vector<64x128xi1>, vector<64x128xf32>
    %609 = vector.extract_strided_slice %603 {offsets = [0, 0], sizes = [32, 128], strides = [1, 1]} : vector<64x128xf32> to vector<32x128xf32>
    %610 = vector.extract_strided_slice %603 {offsets = [32, 0], sizes = [32, 128], strides = [1, 1]} : vector<64x128xf32> to vector<32x128xf32>
    %611 = vector.extract_strided_slice %608 {offsets = [0, 0], sizes = [32, 128], strides = [1, 1]} : vector<64x128xf32> to vector<32x128xf32>
    %612 = vector.extract_strided_slice %608 {offsets = [32, 0], sizes = [32, 128], strides = [1, 1]} : vector<64x128xf32> to vector<32x128xf32>
    %613 = tpu.concatenate %610, %612 in 0 : vector<32x128xf32>, vector<32x128xf32> -> vector<64x128xf32>
    %614 = arith.truncf %613 : vector<64x128xf32> to vector<64x128xbf16>
    %cst_163 = arith.constant dense<0.000000e+00> : vector<160x128xf32>
    %615 = tpu.matmul %14, %614, %cst_163 {dimension_numbers = #tpu.dot_dimension_numbers<[1], [0], [0], [1], [0, 0, 1, 1], [], []>} : vector<160x64xbf16>, vector<64x128xbf16>, vector<160x128xf32> -> vector<160x128xf32>
    %616 = arith.addf %615, %13 : vector<160x128xf32>
    %617 = vector.extract_strided_slice %616 {offsets = [0, 0], sizes = [32, 128], strides = [1, 1]} : vector<160x128xf32> to vector<32x128xf32>
    %618 = arith.negf %617 : vector<32x128xf32>
    %619 = math.exp %618 : vector<32x128xf32>
    %cst_164 = arith.constant 1.000000e+00 : f32
    %620 = vector.broadcast %cst_164 : f32 to vector<32x128xf32>
    %621 = arith.addf %620, %619 : vector<32x128xf32>
    %622 = arith.divf %620, %621 : vector<32x128xf32>
    %623 = vector.extract_strided_slice %616 {offsets = [32, 0], sizes = [32, 128], strides = [1, 1]} : vector<160x128xf32> to vector<32x128xf32>
    %624 = arith.negf %623 : vector<32x128xf32>
    %625 = math.exp %624 : vector<32x128xf32>
    %cst_165 = arith.constant 1.000000e+00 : f32
    %626 = vector.broadcast %cst_165 : f32 to vector<32x128xf32>
    %627 = arith.addf %626, %625 : vector<32x128xf32>
    %628 = arith.divf %626, %627 : vector<32x128xf32>
    %629 = vector.extract_strided_slice %616 {offsets = [64, 0], sizes = [96, 128], strides = [1, 1]} : vector<160x128xf32> to vector<96x128xf32>
    %630 = arith.addf %629, %524 : vector<96x128xf32>
    %631 = vector.extract_strided_slice %630 {offsets = [0, 0], sizes = [32, 128], strides = [1, 1]} : vector<96x128xf32> to vector<32x128xf32>
    %632 = arith.negf %631 : vector<32x128xf32>
    %633 = math.exp %632 : vector<32x128xf32>
    %cst_166 = arith.constant 1.000000e+00 : f32
    %634 = vector.broadcast %cst_166 : f32 to vector<32x128xf32>
    %635 = arith.addf %634, %633 : vector<32x128xf32>
    %636 = arith.divf %634, %635 : vector<32x128xf32>
    %637 = vector.extract_strided_slice %630 {offsets = [32, 0], sizes = [32, 128], strides = [1, 1]} : vector<96x128xf32> to vector<32x128xf32>
    %cst_167 = arith.constant 0.000000e+00 : f32
    %638 = vector.broadcast %cst_167 : f32 to vector<32x128xf32>
    %639 = arith.maximumf %637, %638 : vector<32x128xf32>
    %640 = arith.mulf %636, %639 : vector<32x128xf32>
    %641 = arith.mulf %622, %609 : vector<32x128xf32>
    %642 = arith.addf %640, %641 : vector<32x128xf32>
    %643 = arith.mulf %628, %611 : vector<32x128xf32>
    %644 = arith.addf %642, %643 : vector<32x128xf32>
    %645 = vector.extract_strided_slice %630 {offsets = [64, 0], sizes = [32, 128], strides = [1, 1]} : vector<96x128xf32> to vector<32x128xf32>
    %646 = arith.negf %645 : vector<32x128xf32>
    %647 = math.exp %646 : vector<32x128xf32>
    %cst_168 = arith.constant 1.000000e+00 : f32
    %648 = vector.broadcast %cst_168 : f32 to vector<32x128xf32>
    %649 = arith.addf %648, %647 : vector<32x128xf32>
    %650 = arith.divf %648, %649 : vector<32x128xf32>
    %cst_169 = arith.constant 0.000000e+00 : f32
    %651 = vector.broadcast %cst_169 : f32 to vector<32x128xf32>
    %652 = arith.maximumf %644, %651 : vector<32x128xf32>
    %653 = arith.mulf %650, %652 : vector<32x128xf32>
    %654 = tpu.concatenate %644, %653 in 0 : vector<32x128xf32>, vector<32x128xf32> -> vector<64x128xf32>
    %c0_i32_170 = arith.constant 0 : i32
    %655 = vector.broadcast %c0_i32_170 : i32 to vector<1x128xi32>
    %656 = arith.cmpi slt, %545, %655 : vector<1x128xi32>
    %657 = vector.shape_cast %656 : vector<1x128xi1> to vector<1x128xi1>
    %658 = vector.broadcast %657 : vector<1x128xi1> to vector<64x128xi1>
    %659 = arith.select %658, %544, %654 : vector<64x128xi1>, vector<64x128xf32>
    %c5 = arith.constant 5 : index
    %c0_171 = arith.constant 0 : index
    %c0_172 = arith.constant 0 : index
    %660 = vector.load %arg8[%c5, %c0_171, %c0_172] : memref<8x64x128xf32, #tpu.memory_space<vmem>>, vector<1x64x128xf32>
    %661 = vector.shape_cast %660 : vector<1x64x128xf32> to vector<64x128xf32>
    %662 = vector.shape_cast %659 : vector<64x128xf32> to vector<1x64x128xf32>
    tpu.vector_store %arg8[%c5, %c0_171, %c0_172], %662 {strides = array<i32>} : memref<8x64x128xf32, #tpu.memory_space<vmem>>, vector<1x64x128xf32>,
    %c5_i32 = arith.constant 5 : i32
    %663 = vector.broadcast %c5_i32 : i32 to vector<1x128xi32>
    %664 = arith.cmpi eq, %3, %663 : vector<1x128xi32>
    %665 = vector.extract_strided_slice %659 {offsets = [32, 0], sizes = [32, 128], strides = [1, 1]} : vector<64x128xf32> to vector<32x128xf32>
    %666 = vector.shape_cast %664 : vector<1x128xi1> to vector<1x128xi1>
    %667 = vector.broadcast %666 : vector<1x128xi1> to vector<32x128xi1>
    %668 = arith.select %667, %665, %520 : vector<32x128xi1>, vector<32x128xf32>
    %669 = vector.extract_strided_slice %4 {offsets = [6, 0], sizes = [1, 128], strides = [1, 1]} : vector<8x128xf32> to vector<1x128xf32>
    %670 = vector.broadcast %669 : vector<1x128xf32> to vector<96x128xf32>
    %671 = arith.mulf %7, %670 : vector<96x128xf32>
    %672 = arith.addf %671, %10 : vector<96x128xf32>
    %673 = vector.extract_strided_slice %672 {offsets = [0, 0], sizes = [32, 128], strides = [1, 1]} : vector<96x128xf32> to vector<32x128xf32>
    %674 = arith.negf %673 : vector<32x128xf32>
    %675 = math.exp %674 : vector<32x128xf32>
    %cst_173 = arith.constant 1.000000e+00 : f32
    %676 = vector.broadcast %cst_173 : f32 to vector<32x128xf32>
    %677 = arith.addf %676, %675 : vector<32x128xf32>
    %678 = arith.divf %676, %677 : vector<32x128xf32>
    %679 = vector.extract_strided_slice %672 {offsets = [32, 0], sizes = [32, 128], strides = [1, 1]} : vector<96x128xf32> to vector<32x128xf32>
    %cst_174 = arith.constant 0.000000e+00 : f32
    %680 = vector.broadcast %cst_174 : f32 to vector<32x128xf32>
    %681 = arith.maximumf %679, %680 : vector<32x128xf32>
    %682 = arith.mulf %678, %681 : vector<32x128xf32>
    %683 = vector.extract_strided_slice %672 {offsets = [64, 0], sizes = [32, 128], strides = [1, 1]} : vector<96x128xf32> to vector<32x128xf32>
    %684 = arith.negf %683 : vector<32x128xf32>
    %685 = math.exp %684 : vector<32x128xf32>
    %cst_175 = arith.constant 1.000000e+00 : f32
    %686 = vector.broadcast %cst_175 : f32 to vector<32x128xf32>
    %687 = arith.addf %686, %685 : vector<32x128xf32>
    %688 = arith.divf %686, %687 : vector<32x128xf32>
    %cst_176 = arith.constant 0.000000e+00 : f32
    %689 = vector.broadcast %cst_176 : f32 to vector<32x128xf32>
    %690 = arith.maximumf %682, %689 : vector<32x128xf32>
    %691 = arith.mulf %688, %690 : vector<32x128xf32>
    %692 = tpu.concatenate %682, %691 in 0 : vector<32x128xf32>, vector<32x128xf32> -> vector<64x128xf32>
    %693 = vector.extract_strided_slice %1 {offsets = [6, 0], sizes = [1, 128], strides = [1, 1]} : vector<8x128xi32> to vector<1x128xi32>
    %694 = vector.extract_strided_slice %2 {offsets = [6, 0], sizes = [1, 128], strides = [1, 1]} : vector<8x128xi32> to vector<1x128xi32>
    %cst_177 = arith.constant 0.000000e+00 : f32
    %695 = vector.broadcast %cst_177 : f32 to vector<64x128xf32>
    %cst_178 = arith.constant 0.000000e+00 : f32
    %696 = vector.broadcast %cst_178 : f32 to vector<64x128xf32>
    %c0_179 = arith.constant 0 : index
    %c0_180 = arith.constant 0 : index
    %c0_181 = arith.constant 0 : index
    %697 = vector.load %arg8[%c0_179, %c0_180, %c0_181] : memref<8x64x128xf32, #tpu.memory_space<vmem>>, vector<1x64x128xf32>
    %698 = vector.shape_cast %697 : vector<1x64x128xf32> to vector<64x128xf32>
    %c0_i32_182 = arith.constant 0 : i32
    %699 = vector.broadcast %c0_i32_182 : i32 to vector<1x128xi32>
    %700 = arith.cmpi eq, %693, %699 : vector<1x128xi32>
    %701 = vector.shape_cast %700 : vector<1x128xi1> to vector<1x128xi1>
    %702 = vector.broadcast %701 : vector<1x128xi1> to vector<64x128xi1>
    %703 = arith.select %702, %698, %695 : vector<64x128xi1>, vector<64x128xf32>
    %c0_i32_183 = arith.constant 0 : i32
    %704 = vector.broadcast %c0_i32_183 : i32 to vector<1x128xi32>
    %705 = arith.cmpi eq, %694, %704 : vector<1x128xi32>
    %706 = vector.shape_cast %705 : vector<1x128xi1> to vector<1x128xi1>
    %707 = vector.broadcast %706 : vector<1x128xi1> to vector<64x128xi1>
    %708 = arith.select %707, %698, %696 : vector<64x128xi1>, vector<64x128xf32>
    %c1_184 = arith.constant 1 : index
    %c0_185 = arith.constant 0 : index
    %c0_186 = arith.constant 0 : index
    %709 = vector.load %arg8[%c1_184, %c0_185, %c0_186] : memref<8x64x128xf32, #tpu.memory_space<vmem>>, vector<1x64x128xf32>
    %710 = vector.shape_cast %709 : vector<1x64x128xf32> to vector<64x128xf32>
    %c1_i32_187 = arith.constant 1 : i32
    %711 = vector.broadcast %c1_i32_187 : i32 to vector<1x128xi32>
    %712 = arith.cmpi eq, %693, %711 : vector<1x128xi32>
    %713 = vector.shape_cast %712 : vector<1x128xi1> to vector<1x128xi1>
    %714 = vector.broadcast %713 : vector<1x128xi1> to vector<64x128xi1>
    %715 = arith.select %714, %710, %703 : vector<64x128xi1>, vector<64x128xf32>
    %c1_i32_188 = arith.constant 1 : i32
    %716 = vector.broadcast %c1_i32_188 : i32 to vector<1x128xi32>
    %717 = arith.cmpi eq, %694, %716 : vector<1x128xi32>
    %718 = vector.shape_cast %717 : vector<1x128xi1> to vector<1x128xi1>
    %719 = vector.broadcast %718 : vector<1x128xi1> to vector<64x128xi1>
    %720 = arith.select %719, %710, %708 : vector<64x128xi1>, vector<64x128xf32>
    %c2_189 = arith.constant 2 : index
    %c0_190 = arith.constant 0 : index
    %c0_191 = arith.constant 0 : index
    %721 = vector.load %arg8[%c2_189, %c0_190, %c0_191] : memref<8x64x128xf32, #tpu.memory_space<vmem>>, vector<1x64x128xf32>
    %722 = vector.shape_cast %721 : vector<1x64x128xf32> to vector<64x128xf32>
    %c2_i32_192 = arith.constant 2 : i32
    %723 = vector.broadcast %c2_i32_192 : i32 to vector<1x128xi32>
    %724 = arith.cmpi eq, %693, %723 : vector<1x128xi32>
    %725 = vector.shape_cast %724 : vector<1x128xi1> to vector<1x128xi1>
    %726 = vector.broadcast %725 : vector<1x128xi1> to vector<64x128xi1>
    %727 = arith.select %726, %722, %715 : vector<64x128xi1>, vector<64x128xf32>
    %c2_i32_193 = arith.constant 2 : i32
    %728 = vector.broadcast %c2_i32_193 : i32 to vector<1x128xi32>
    %729 = arith.cmpi eq, %694, %728 : vector<1x128xi32>
    %730 = vector.shape_cast %729 : vector<1x128xi1> to vector<1x128xi1>
    %731 = vector.broadcast %730 : vector<1x128xi1> to vector<64x128xi1>
    %732 = arith.select %731, %722, %720 : vector<64x128xi1>, vector<64x128xf32>
    %c3_194 = arith.constant 3 : index
    %c0_195 = arith.constant 0 : index
    %c0_196 = arith.constant 0 : index
    %733 = vector.load %arg8[%c3_194, %c0_195, %c0_196] : memref<8x64x128xf32, #tpu.memory_space<vmem>>, vector<1x64x128xf32>
    %734 = vector.shape_cast %733 : vector<1x64x128xf32> to vector<64x128xf32>
    %c3_i32_197 = arith.constant 3 : i32
    %735 = vector.broadcast %c3_i32_197 : i32 to vector<1x128xi32>
    %736 = arith.cmpi eq, %693, %735 : vector<1x128xi32>
    %737 = vector.shape_cast %736 : vector<1x128xi1> to vector<1x128xi1>
    %738 = vector.broadcast %737 : vector<1x128xi1> to vector<64x128xi1>
    %739 = arith.select %738, %734, %727 : vector<64x128xi1>, vector<64x128xf32>
    %c3_i32_198 = arith.constant 3 : i32
    %740 = vector.broadcast %c3_i32_198 : i32 to vector<1x128xi32>
    %741 = arith.cmpi eq, %694, %740 : vector<1x128xi32>
    %742 = vector.shape_cast %741 : vector<1x128xi1> to vector<1x128xi1>
    %743 = vector.broadcast %742 : vector<1x128xi1> to vector<64x128xi1>
    %744 = arith.select %743, %734, %732 : vector<64x128xi1>, vector<64x128xf32>
    %c4_199 = arith.constant 4 : index
    %c0_200 = arith.constant 0 : index
    %c0_201 = arith.constant 0 : index
    %745 = vector.load %arg8[%c4_199, %c0_200, %c0_201] : memref<8x64x128xf32, #tpu.memory_space<vmem>>, vector<1x64x128xf32>
    %746 = vector.shape_cast %745 : vector<1x64x128xf32> to vector<64x128xf32>
    %c4_i32_202 = arith.constant 4 : i32
    %747 = vector.broadcast %c4_i32_202 : i32 to vector<1x128xi32>
    %748 = arith.cmpi eq, %693, %747 : vector<1x128xi32>
    %749 = vector.shape_cast %748 : vector<1x128xi1> to vector<1x128xi1>
    %750 = vector.broadcast %749 : vector<1x128xi1> to vector<64x128xi1>
    %751 = arith.select %750, %746, %739 : vector<64x128xi1>, vector<64x128xf32>
    %c4_i32_203 = arith.constant 4 : i32
    %752 = vector.broadcast %c4_i32_203 : i32 to vector<1x128xi32>
    %753 = arith.cmpi eq, %694, %752 : vector<1x128xi32>
    %754 = vector.shape_cast %753 : vector<1x128xi1> to vector<1x128xi1>
    %755 = vector.broadcast %754 : vector<1x128xi1> to vector<64x128xi1>
    %756 = arith.select %755, %746, %744 : vector<64x128xi1>, vector<64x128xf32>
    %c5_204 = arith.constant 5 : index
    %c0_205 = arith.constant 0 : index
    %c0_206 = arith.constant 0 : index
    %757 = vector.load %arg8[%c5_204, %c0_205, %c0_206] : memref<8x64x128xf32, #tpu.memory_space<vmem>>, vector<1x64x128xf32>
    %758 = vector.shape_cast %757 : vector<1x64x128xf32> to vector<64x128xf32>
    %c5_i32_207 = arith.constant 5 : i32
    %759 = vector.broadcast %c5_i32_207 : i32 to vector<1x128xi32>
    %760 = arith.cmpi eq, %693, %759 : vector<1x128xi32>
    %761 = vector.shape_cast %760 : vector<1x128xi1> to vector<1x128xi1>
    %762 = vector.broadcast %761 : vector<1x128xi1> to vector<64x128xi1>
    %763 = arith.select %762, %758, %751 : vector<64x128xi1>, vector<64x128xf32>
    %c5_i32_208 = arith.constant 5 : i32
    %764 = vector.broadcast %c5_i32_208 : i32 to vector<1x128xi32>
    %765 = arith.cmpi eq, %694, %764 : vector<1x128xi32>
    %766 = vector.shape_cast %765 : vector<1x128xi1> to vector<1x128xi1>
    %767 = vector.broadcast %766 : vector<1x128xi1> to vector<64x128xi1>
    %768 = arith.select %767, %758, %756 : vector<64x128xi1>, vector<64x128xf32>
    %769 = vector.extract_strided_slice %763 {offsets = [0, 0], sizes = [32, 128], strides = [1, 1]} : vector<64x128xf32> to vector<32x128xf32>
    %770 = vector.extract_strided_slice %763 {offsets = [32, 0], sizes = [32, 128], strides = [1, 1]} : vector<64x128xf32> to vector<32x128xf32>
    %771 = vector.extract_strided_slice %768 {offsets = [0, 0], sizes = [32, 128], strides = [1, 1]} : vector<64x128xf32> to vector<32x128xf32>
    %772 = vector.extract_strided_slice %768 {offsets = [32, 0], sizes = [32, 128], strides = [1, 1]} : vector<64x128xf32> to vector<32x128xf32>
    %773 = tpu.concatenate %770, %772 in 0 : vector<32x128xf32>, vector<32x128xf32> -> vector<64x128xf32>
    %774 = arith.truncf %773 : vector<64x128xf32> to vector<64x128xbf16>
    %cst_209 = arith.constant dense<0.000000e+00> : vector<160x128xf32>
    %775 = tpu.matmul %14, %774, %cst_209 {dimension_numbers = #tpu.dot_dimension_numbers<[1], [0], [0], [1], [0, 0, 1, 1], [], []>} : vector<160x64xbf16>, vector<64x128xbf16>, vector<160x128xf32> -> vector<160x128xf32>
    %776 = arith.addf %775, %13 : vector<160x128xf32>
    %777 = vector.extract_strided_slice %776 {offsets = [0, 0], sizes = [32, 128], strides = [1, 1]} : vector<160x128xf32> to vector<32x128xf32>
    %778 = arith.negf %777 : vector<32x128xf32>
    %779 = math.exp %778 : vector<32x128xf32>
    %cst_210 = arith.constant 1.000000e+00 : f32
    %780 = vector.broadcast %cst_210 : f32 to vector<32x128xf32>
    %781 = arith.addf %780, %779 : vector<32x128xf32>
    %782 = arith.divf %780, %781 : vector<32x128xf32>
    %783 = vector.extract_strided_slice %776 {offsets = [32, 0], sizes = [32, 128], strides = [1, 1]} : vector<160x128xf32> to vector<32x128xf32>
    %784 = arith.negf %783 : vector<32x128xf32>
    %785 = math.exp %784 : vector<32x128xf32>
    %cst_211 = arith.constant 1.000000e+00 : f32
    %786 = vector.broadcast %cst_211 : f32 to vector<32x128xf32>
    %787 = arith.addf %786, %785 : vector<32x128xf32>
    %788 = arith.divf %786, %787 : vector<32x128xf32>
    %789 = vector.extract_strided_slice %776 {offsets = [64, 0], sizes = [96, 128], strides = [1, 1]} : vector<160x128xf32> to vector<96x128xf32>
    %790 = arith.addf %789, %672 : vector<96x128xf32>
    %791 = vector.extract_strided_slice %790 {offsets = [0, 0], sizes = [32, 128], strides = [1, 1]} : vector<96x128xf32> to vector<32x128xf32>
    %792 = arith.negf %791 : vector<32x128xf32>
    %793 = math.exp %792 : vector<32x128xf32>
    %cst_212 = arith.constant 1.000000e+00 : f32
    %794 = vector.broadcast %cst_212 : f32 to vector<32x128xf32>
    %795 = arith.addf %794, %793 : vector<32x128xf32>
    %796 = arith.divf %794, %795 : vector<32x128xf32>
    %797 = vector.extract_strided_slice %790 {offsets = [32, 0], sizes = [32, 128], strides = [1, 1]} : vector<96x128xf32> to vector<32x128xf32>
    %cst_213 = arith.constant 0.000000e+00 : f32
    %798 = vector.broadcast %cst_213 : f32 to vector<32x128xf32>
    %799 = arith.maximumf %797, %798 : vector<32x128xf32>
    %800 = arith.mulf %796, %799 : vector<32x128xf32>
    %801 = arith.mulf %782, %769 : vector<32x128xf32>
    %802 = arith.addf %800, %801 : vector<32x128xf32>
    %803 = arith.mulf %788, %771 : vector<32x128xf32>
    %804 = arith.addf %802, %803 : vector<32x128xf32>
    %805 = vector.extract_strided_slice %790 {offsets = [64, 0], sizes = [32, 128], strides = [1, 1]} : vector<96x128xf32> to vector<32x128xf32>
    %806 = arith.negf %805 : vector<32x128xf32>
    %807 = math.exp %806 : vector<32x128xf32>
    %cst_214 = arith.constant 1.000000e+00 : f32
    %808 = vector.broadcast %cst_214 : f32 to vector<32x128xf32>
    %809 = arith.addf %808, %807 : vector<32x128xf32>
    %810 = arith.divf %808, %809 : vector<32x128xf32>
    %cst_215 = arith.constant 0.000000e+00 : f32
    %811 = vector.broadcast %cst_215 : f32 to vector<32x128xf32>
    %812 = arith.maximumf %804, %811 : vector<32x128xf32>
    %813 = arith.mulf %810, %812 : vector<32x128xf32>
    %814 = tpu.concatenate %804, %813 in 0 : vector<32x128xf32>, vector<32x128xf32> -> vector<64x128xf32>
    %c0_i32_216 = arith.constant 0 : i32
    %815 = vector.broadcast %c0_i32_216 : i32 to vector<1x128xi32>
    %816 = arith.cmpi slt, %693, %815 : vector<1x128xi32>
    %817 = vector.shape_cast %816 : vector<1x128xi1> to vector<1x128xi1>
    %818 = vector.broadcast %817 : vector<1x128xi1> to vector<64x128xi1>
    %819 = arith.select %818, %692, %814 : vector<64x128xi1>, vector<64x128xf32>
    %c6 = arith.constant 6 : index
    %c0_217 = arith.constant 0 : index
    %c0_218 = arith.constant 0 : index
    %820 = vector.load %arg8[%c6, %c0_217, %c0_218] : memref<8x64x128xf32, #tpu.memory_space<vmem>>, vector<1x64x128xf32>
    %821 = vector.shape_cast %820 : vector<1x64x128xf32> to vector<64x128xf32>
    %822 = vector.shape_cast %819 : vector<64x128xf32> to vector<1x64x128xf32>
    tpu.vector_store %arg8[%c6, %c0_217, %c0_218], %822 {strides = array<i32>} : memref<8x64x128xf32, #tpu.memory_space<vmem>>, vector<1x64x128xf32>,
    %c6_i32 = arith.constant 6 : i32
    %823 = vector.broadcast %c6_i32 : i32 to vector<1x128xi32>
    %824 = arith.cmpi eq, %3, %823 : vector<1x128xi32>
    %825 = vector.extract_strided_slice %819 {offsets = [32, 0], sizes = [32, 128], strides = [1, 1]} : vector<64x128xf32> to vector<32x128xf32>
    %826 = vector.shape_cast %824 : vector<1x128xi1> to vector<1x128xi1>
    %827 = vector.broadcast %826 : vector<1x128xi1> to vector<32x128xi1>
    %828 = arith.select %827, %825, %668 : vector<32x128xi1>, vector<32x128xf32>
    %829 = vector.extract_strided_slice %4 {offsets = [7, 0], sizes = [1, 128], strides = [1, 1]} : vector<8x128xf32> to vector<1x128xf32>
    %830 = vector.broadcast %829 : vector<1x128xf32> to vector<96x128xf32>
    %831 = arith.mulf %7, %830 : vector<96x128xf32>
    %832 = arith.addf %831, %10 : vector<96x128xf32>
    %833 = vector.extract_strided_slice %832 {offsets = [0, 0], sizes = [32, 128], strides = [1, 1]} : vector<96x128xf32> to vector<32x128xf32>
    %834 = arith.negf %833 : vector<32x128xf32>
    %835 = math.exp %834 : vector<32x128xf32>
    %cst_219 = arith.constant 1.000000e+00 : f32
    %836 = vector.broadcast %cst_219 : f32 to vector<32x128xf32>
    %837 = arith.addf %836, %835 : vector<32x128xf32>
    %838 = arith.divf %836, %837 : vector<32x128xf32>
    %839 = vector.extract_strided_slice %832 {offsets = [32, 0], sizes = [32, 128], strides = [1, 1]} : vector<96x128xf32> to vector<32x128xf32>
    %cst_220 = arith.constant 0.000000e+00 : f32
    %840 = vector.broadcast %cst_220 : f32 to vector<32x128xf32>
    %841 = arith.maximumf %839, %840 : vector<32x128xf32>
    %842 = arith.mulf %838, %841 : vector<32x128xf32>
    %843 = vector.extract_strided_slice %832 {offsets = [64, 0], sizes = [32, 128], strides = [1, 1]} : vector<96x128xf32> to vector<32x128xf32>
    %844 = arith.negf %843 : vector<32x128xf32>
    %845 = math.exp %844 : vector<32x128xf32>
    %cst_221 = arith.constant 1.000000e+00 : f32
    %846 = vector.broadcast %cst_221 : f32 to vector<32x128xf32>
    %847 = arith.addf %846, %845 : vector<32x128xf32>
    %848 = arith.divf %846, %847 : vector<32x128xf32>
    %cst_222 = arith.constant 0.000000e+00 : f32
    %849 = vector.broadcast %cst_222 : f32 to vector<32x128xf32>
    %850 = arith.maximumf %842, %849 : vector<32x128xf32>
    %851 = arith.mulf %848, %850 : vector<32x128xf32>
    %852 = tpu.concatenate %842, %851 in 0 : vector<32x128xf32>, vector<32x128xf32> -> vector<64x128xf32>
    %853 = vector.extract_strided_slice %1 {offsets = [7, 0], sizes = [1, 128], strides = [1, 1]} : vector<8x128xi32> to vector<1x128xi32>
    %854 = vector.extract_strided_slice %2 {offsets = [7, 0], sizes = [1, 128], strides = [1, 1]} : vector<8x128xi32> to vector<1x128xi32>
    %cst_223 = arith.constant 0.000000e+00 : f32
    %855 = vector.broadcast %cst_223 : f32 to vector<64x128xf32>
    %cst_224 = arith.constant 0.000000e+00 : f32
    %856 = vector.broadcast %cst_224 : f32 to vector<64x128xf32>
    %c0_225 = arith.constant 0 : index
    %c0_226 = arith.constant 0 : index
    %c0_227 = arith.constant 0 : index
    %857 = vector.load %arg8[%c0_225, %c0_226, %c0_227] : memref<8x64x128xf32, #tpu.memory_space<vmem>>, vector<1x64x128xf32>
    %858 = vector.shape_cast %857 : vector<1x64x128xf32> to vector<64x128xf32>
    %c0_i32_228 = arith.constant 0 : i32
    %859 = vector.broadcast %c0_i32_228 : i32 to vector<1x128xi32>
    %860 = arith.cmpi eq, %853, %859 : vector<1x128xi32>
    %861 = vector.shape_cast %860 : vector<1x128xi1> to vector<1x128xi1>
    %862 = vector.broadcast %861 : vector<1x128xi1> to vector<64x128xi1>
    %863 = arith.select %862, %858, %855 : vector<64x128xi1>, vector<64x128xf32>
    %c0_i32_229 = arith.constant 0 : i32
    %864 = vector.broadcast %c0_i32_229 : i32 to vector<1x128xi32>
    %865 = arith.cmpi eq, %854, %864 : vector<1x128xi32>
    %866 = vector.shape_cast %865 : vector<1x128xi1> to vector<1x128xi1>
    %867 = vector.broadcast %866 : vector<1x128xi1> to vector<64x128xi1>
    %868 = arith.select %867, %858, %856 : vector<64x128xi1>, vector<64x128xf32>
    %c1_230 = arith.constant 1 : index
    %c0_231 = arith.constant 0 : index
    %c0_232 = arith.constant 0 : index
    %869 = vector.load %arg8[%c1_230, %c0_231, %c0_232] : memref<8x64x128xf32, #tpu.memory_space<vmem>>, vector<1x64x128xf32>
    %870 = vector.shape_cast %869 : vector<1x64x128xf32> to vector<64x128xf32>
    %c1_i32_233 = arith.constant 1 : i32
    %871 = vector.broadcast %c1_i32_233 : i32 to vector<1x128xi32>
    %872 = arith.cmpi eq, %853, %871 : vector<1x128xi32>
    %873 = vector.shape_cast %872 : vector<1x128xi1> to vector<1x128xi1>
    %874 = vector.broadcast %873 : vector<1x128xi1> to vector<64x128xi1>
    %875 = arith.select %874, %870, %863 : vector<64x128xi1>, vector<64x128xf32>
    %c1_i32_234 = arith.constant 1 : i32
    %876 = vector.broadcast %c1_i32_234 : i32 to vector<1x128xi32>
    %877 = arith.cmpi eq, %854, %876 : vector<1x128xi32>
    %878 = vector.shape_cast %877 : vector<1x128xi1> to vector<1x128xi1>
    %879 = vector.broadcast %878 : vector<1x128xi1> to vector<64x128xi1>
    %880 = arith.select %879, %870, %868 : vector<64x128xi1>, vector<64x128xf32>
    %c2_235 = arith.constant 2 : index
    %c0_236 = arith.constant 0 : index
    %c0_237 = arith.constant 0 : index
    %881 = vector.load %arg8[%c2_235, %c0_236, %c0_237] : memref<8x64x128xf32, #tpu.memory_space<vmem>>, vector<1x64x128xf32>
    %882 = vector.shape_cast %881 : vector<1x64x128xf32> to vector<64x128xf32>
    %c2_i32_238 = arith.constant 2 : i32
    %883 = vector.broadcast %c2_i32_238 : i32 to vector<1x128xi32>
    %884 = arith.cmpi eq, %853, %883 : vector<1x128xi32>
    %885 = vector.shape_cast %884 : vector<1x128xi1> to vector<1x128xi1>
    %886 = vector.broadcast %885 : vector<1x128xi1> to vector<64x128xi1>
    %887 = arith.select %886, %882, %875 : vector<64x128xi1>, vector<64x128xf32>
    %c2_i32_239 = arith.constant 2 : i32
    %888 = vector.broadcast %c2_i32_239 : i32 to vector<1x128xi32>
    %889 = arith.cmpi eq, %854, %888 : vector<1x128xi32>
    %890 = vector.shape_cast %889 : vector<1x128xi1> to vector<1x128xi1>
    %891 = vector.broadcast %890 : vector<1x128xi1> to vector<64x128xi1>
    %892 = arith.select %891, %882, %880 : vector<64x128xi1>, vector<64x128xf32>
    %c3_240 = arith.constant 3 : index
    %c0_241 = arith.constant 0 : index
    %c0_242 = arith.constant 0 : index
    %893 = vector.load %arg8[%c3_240, %c0_241, %c0_242] : memref<8x64x128xf32, #tpu.memory_space<vmem>>, vector<1x64x128xf32>
    %894 = vector.shape_cast %893 : vector<1x64x128xf32> to vector<64x128xf32>
    %c3_i32_243 = arith.constant 3 : i32
    %895 = vector.broadcast %c3_i32_243 : i32 to vector<1x128xi32>
    %896 = arith.cmpi eq, %853, %895 : vector<1x128xi32>
    %897 = vector.shape_cast %896 : vector<1x128xi1> to vector<1x128xi1>
    %898 = vector.broadcast %897 : vector<1x128xi1> to vector<64x128xi1>
    %899 = arith.select %898, %894, %887 : vector<64x128xi1>, vector<64x128xf32>
    %c3_i32_244 = arith.constant 3 : i32
    %900 = vector.broadcast %c3_i32_244 : i32 to vector<1x128xi32>
    %901 = arith.cmpi eq, %854, %900 : vector<1x128xi32>
    %902 = vector.shape_cast %901 : vector<1x128xi1> to vector<1x128xi1>
    %903 = vector.broadcast %902 : vector<1x128xi1> to vector<64x128xi1>
    %904 = arith.select %903, %894, %892 : vector<64x128xi1>, vector<64x128xf32>
    %c4_245 = arith.constant 4 : index
    %c0_246 = arith.constant 0 : index
    %c0_247 = arith.constant 0 : index
    %905 = vector.load %arg8[%c4_245, %c0_246, %c0_247] : memref<8x64x128xf32, #tpu.memory_space<vmem>>, vector<1x64x128xf32>
    %906 = vector.shape_cast %905 : vector<1x64x128xf32> to vector<64x128xf32>
    %c4_i32_248 = arith.constant 4 : i32
    %907 = vector.broadcast %c4_i32_248 : i32 to vector<1x128xi32>
    %908 = arith.cmpi eq, %853, %907 : vector<1x128xi32>
    %909 = vector.shape_cast %908 : vector<1x128xi1> to vector<1x128xi1>
    %910 = vector.broadcast %909 : vector<1x128xi1> to vector<64x128xi1>
    %911 = arith.select %910, %906, %899 : vector<64x128xi1>, vector<64x128xf32>
    %c4_i32_249 = arith.constant 4 : i32
    %912 = vector.broadcast %c4_i32_249 : i32 to vector<1x128xi32>
    %913 = arith.cmpi eq, %854, %912 : vector<1x128xi32>
    %914 = vector.shape_cast %913 : vector<1x128xi1> to vector<1x128xi1>
    %915 = vector.broadcast %914 : vector<1x128xi1> to vector<64x128xi1>
    %916 = arith.select %915, %906, %904 : vector<64x128xi1>, vector<64x128xf32>
    %c5_250 = arith.constant 5 : index
    %c0_251 = arith.constant 0 : index
    %c0_252 = arith.constant 0 : index
    %917 = vector.load %arg8[%c5_250, %c0_251, %c0_252] : memref<8x64x128xf32, #tpu.memory_space<vmem>>, vector<1x64x128xf32>
    %918 = vector.shape_cast %917 : vector<1x64x128xf32> to vector<64x128xf32>
    %c5_i32_253 = arith.constant 5 : i32
    %919 = vector.broadcast %c5_i32_253 : i32 to vector<1x128xi32>
    %920 = arith.cmpi eq, %853, %919 : vector<1x128xi32>
    %921 = vector.shape_cast %920 : vector<1x128xi1> to vector<1x128xi1>
    %922 = vector.broadcast %921 : vector<1x128xi1> to vector<64x128xi1>
    %923 = arith.select %922, %918, %911 : vector<64x128xi1>, vector<64x128xf32>
    %c5_i32_254 = arith.constant 5 : i32
    %924 = vector.broadcast %c5_i32_254 : i32 to vector<1x128xi32>
    %925 = arith.cmpi eq, %854, %924 : vector<1x128xi32>
    %926 = vector.shape_cast %925 : vector<1x128xi1> to vector<1x128xi1>
    %927 = vector.broadcast %926 : vector<1x128xi1> to vector<64x128xi1>
    %928 = arith.select %927, %918, %916 : vector<64x128xi1>, vector<64x128xf32>
    %c6_255 = arith.constant 6 : index
    %c0_256 = arith.constant 0 : index
    %c0_257 = arith.constant 0 : index
    %929 = vector.load %arg8[%c6_255, %c0_256, %c0_257] : memref<8x64x128xf32, #tpu.memory_space<vmem>>, vector<1x64x128xf32>
    %930 = vector.shape_cast %929 : vector<1x64x128xf32> to vector<64x128xf32>
    %c6_i32_258 = arith.constant 6 : i32
    %931 = vector.broadcast %c6_i32_258 : i32 to vector<1x128xi32>
    %932 = arith.cmpi eq, %853, %931 : vector<1x128xi32>
    %933 = vector.shape_cast %932 : vector<1x128xi1> to vector<1x128xi1>
    %934 = vector.broadcast %933 : vector<1x128xi1> to vector<64x128xi1>
    %935 = arith.select %934, %930, %923 : vector<64x128xi1>, vector<64x128xf32>
    %c6_i32_259 = arith.constant 6 : i32
    %936 = vector.broadcast %c6_i32_259 : i32 to vector<1x128xi32>
    %937 = arith.cmpi eq, %854, %936 : vector<1x128xi32>
    %938 = vector.shape_cast %937 : vector<1x128xi1> to vector<1x128xi1>
    %939 = vector.broadcast %938 : vector<1x128xi1> to vector<64x128xi1>
    %940 = arith.select %939, %930, %928 : vector<64x128xi1>, vector<64x128xf32>
    %941 = vector.extract_strided_slice %935 {offsets = [0, 0], sizes = [32, 128], strides = [1, 1]} : vector<64x128xf32> to vector<32x128xf32>
    %942 = vector.extract_strided_slice %935 {offsets = [32, 0], sizes = [32, 128], strides = [1, 1]} : vector<64x128xf32> to vector<32x128xf32>
    %943 = vector.extract_strided_slice %940 {offsets = [0, 0], sizes = [32, 128], strides = [1, 1]} : vector<64x128xf32> to vector<32x128xf32>
    %944 = vector.extract_strided_slice %940 {offsets = [32, 0], sizes = [32, 128], strides = [1, 1]} : vector<64x128xf32> to vector<32x128xf32>
    %945 = tpu.concatenate %942, %944 in 0 : vector<32x128xf32>, vector<32x128xf32> -> vector<64x128xf32>
    %946 = arith.truncf %945 : vector<64x128xf32> to vector<64x128xbf16>
    %cst_260 = arith.constant dense<0.000000e+00> : vector<160x128xf32>
    %947 = tpu.matmul %14, %946, %cst_260 {dimension_numbers = #tpu.dot_dimension_numbers<[1], [0], [0], [1], [0, 0, 1, 1], [], []>} : vector<160x64xbf16>, vector<64x128xbf16>, vector<160x128xf32> -> vector<160x128xf32>
    %948 = arith.addf %947, %13 : vector<160x128xf32>
    %949 = vector.extract_strided_slice %948 {offsets = [0, 0], sizes = [32, 128], strides = [1, 1]} : vector<160x128xf32> to vector<32x128xf32>
    %950 = arith.negf %949 : vector<32x128xf32>
    %951 = math.exp %950 : vector<32x128xf32>
    %cst_261 = arith.constant 1.000000e+00 : f32
    %952 = vector.broadcast %cst_261 : f32 to vector<32x128xf32>
    %953 = arith.addf %952, %951 : vector<32x128xf32>
    %954 = arith.divf %952, %953 : vector<32x128xf32>
    %955 = vector.extract_strided_slice %948 {offsets = [32, 0], sizes = [32, 128], strides = [1, 1]} : vector<160x128xf32> to vector<32x128xf32>
    %956 = arith.negf %955 : vector<32x128xf32>
    %957 = math.exp %956 : vector<32x128xf32>
    %cst_262 = arith.constant 1.000000e+00 : f32
    %958 = vector.broadcast %cst_262 : f32 to vector<32x128xf32>
    %959 = arith.addf %958, %957 : vector<32x128xf32>
    %960 = arith.divf %958, %959 : vector<32x128xf32>
    %961 = vector.extract_strided_slice %948 {offsets = [64, 0], sizes = [96, 128], strides = [1, 1]} : vector<160x128xf32> to vector<96x128xf32>
    %962 = arith.addf %961, %832 : vector<96x128xf32>
    %963 = vector.extract_strided_slice %962 {offsets = [0, 0], sizes = [32, 128], strides = [1, 1]} : vector<96x128xf32> to vector<32x128xf32>
    %964 = arith.negf %963 : vector<32x128xf32>
    %965 = math.exp %964 : vector<32x128xf32>
    %cst_263 = arith.constant 1.000000e+00 : f32
    %966 = vector.broadcast %cst_263 : f32 to vector<32x128xf32>
    %967 = arith.addf %966, %965 : vector<32x128xf32>
    %968 = arith.divf %966, %967 : vector<32x128xf32>
    %969 = vector.extract_strided_slice %962 {offsets = [32, 0], sizes = [32, 128], strides = [1, 1]} : vector<96x128xf32> to vector<32x128xf32>
    %cst_264 = arith.constant 0.000000e+00 : f32
    %970 = vector.broadcast %cst_264 : f32 to vector<32x128xf32>
    %971 = arith.maximumf %969, %970 : vector<32x128xf32>
    %972 = arith.mulf %968, %971 : vector<32x128xf32>
    %973 = arith.mulf %954, %941 : vector<32x128xf32>
    %974 = arith.addf %972, %973 : vector<32x128xf32>
    %975 = arith.mulf %960, %943 : vector<32x128xf32>
    %976 = arith.addf %974, %975 : vector<32x128xf32>
    %977 = vector.extract_strided_slice %962 {offsets = [64, 0], sizes = [32, 128], strides = [1, 1]} : vector<96x128xf32> to vector<32x128xf32>
    %978 = arith.negf %977 : vector<32x128xf32>
    %979 = math.exp %978 : vector<32x128xf32>
    %cst_265 = arith.constant 1.000000e+00 : f32
    %980 = vector.broadcast %cst_265 : f32 to vector<32x128xf32>
    %981 = arith.addf %980, %979 : vector<32x128xf32>
    %982 = arith.divf %980, %981 : vector<32x128xf32>
    %cst_266 = arith.constant 0.000000e+00 : f32
    %983 = vector.broadcast %cst_266 : f32 to vector<32x128xf32>
    %984 = arith.maximumf %976, %983 : vector<32x128xf32>
    %985 = arith.mulf %982, %984 : vector<32x128xf32>
    %986 = tpu.concatenate %976, %985 in 0 : vector<32x128xf32>, vector<32x128xf32> -> vector<64x128xf32>
    %c0_i32_267 = arith.constant 0 : i32
    %987 = vector.broadcast %c0_i32_267 : i32 to vector<1x128xi32>
    %988 = arith.cmpi slt, %853, %987 : vector<1x128xi32>
    %989 = vector.shape_cast %988 : vector<1x128xi1> to vector<1x128xi1>
    %990 = vector.broadcast %989 : vector<1x128xi1> to vector<64x128xi1>
    %991 = arith.select %990, %852, %986 : vector<64x128xi1>, vector<64x128xf32>
    %c7 = arith.constant 7 : index
    %c0_268 = arith.constant 0 : index
    %c0_269 = arith.constant 0 : index
    %992 = vector.load %arg8[%c7, %c0_268, %c0_269] : memref<8x64x128xf32, #tpu.memory_space<vmem>>, vector<1x64x128xf32>
    %993 = vector.shape_cast %992 : vector<1x64x128xf32> to vector<64x128xf32>
    %994 = vector.shape_cast %991 : vector<64x128xf32> to vector<1x64x128xf32>
    tpu.vector_store %arg8[%c7, %c0_268, %c0_269], %994 {strides = array<i32>} : memref<8x64x128xf32, #tpu.memory_space<vmem>>, vector<1x64x128xf32>,
    %c7_i32 = arith.constant 7 : i32
    %995 = vector.broadcast %c7_i32 : i32 to vector<1x128xi32>
    %996 = arith.cmpi eq, %3, %995 : vector<1x128xi32>
    %997 = vector.extract_strided_slice %991 {offsets = [32, 0], sizes = [32, 128], strides = [1, 1]} : vector<64x128xf32> to vector<32x128xf32>
    %998 = vector.shape_cast %996 : vector<1x128xi1> to vector<1x128xi1>
    %999 = vector.broadcast %998 : vector<1x128xi1> to vector<32x128xi1>
    %1000 = arith.select %999, %997, %828 : vector<32x128xi1>, vector<32x128xf32>
    %c0_270 = arith.constant 0 : index
    %c0_271 = arith.constant 0 : index
    %1001 = vector.load %arg7[%c0_270, %c0_271] : memref<32x128xf32, #tpu.memory_space<vmem>>, vector<32x128xf32>
    tpu.vector_store %arg7[%c0_270, %c0_271], %1000 {strides = array<i32>} : memref<32x128xf32, #tpu.memory_space<vmem>>, vector<32x128xf32>,
    return
  }
  func.func @transform_0(%arg0: i32) -> (i32, i32) {
    %c0_i32 = arith.constant 0 : i32
    %c0_i32_0 = arith.constant 0 : i32
    return %c0_i32, %arg0 : i32, i32
  }
  func.func @transform_1(%arg0: i32) -> (i32, i32) {
    %c0_i32 = arith.constant 0 : i32
    %c0_i32_0 = arith.constant 0 : i32
    return %c0_i32, %arg0 : i32, i32
  }
  func.func @transform_2(%arg0: i32) -> (i32, i32) {
    %c0_i32 = arith.constant 0 : i32
    %c0_i32_0 = arith.constant 0 : i32
    %c0_i32_1 = arith.constant 0 : i32
    return %c0_i32, %c0_i32_0 : i32, i32
  }
  func.func @transform_3(%arg0: i32) -> (i32, i32) {
    %c0_i32 = arith.constant 0 : i32
    %c0_i32_0 = arith.constant 0 : i32
    %c0_i32_1 = arith.constant 0 : i32
    return %c0_i32, %c0_i32_0 : i32, i32
  }
  func.func @transform_4(%arg0: i32) -> (i32, i32) {
    %c0_i32 = arith.constant 0 : i32
    %c0_i32_0 = arith.constant 0 : i32
    %c0_i32_1 = arith.constant 0 : i32
    return %c0_i32, %c0_i32_0 : i32, i32
  }
  func.func @transform_5(%arg0: i32) -> (i32, i32) {
    %c0_i32 = arith.constant 0 : i32
    %c0_i32_0 = arith.constant 0 : i32
    %c0_i32_1 = arith.constant 0 : i32
    return %c0_i32, %c0_i32_0 : i32, i32
  }
  func.func @transform_6(%arg0: i32) -> (i32, i32) {
    %c0_i32 = arith.constant 0 : i32
    %c0_i32_0 = arith.constant 0 : i32
    return %c0_i32, %arg0 : i32, i32
  }
}

</mosaic_0001>

<llo_original>
// kernel: tpu_custom_call.1
$region0: #{tpu_custom_call.1}
  #allocation0 [shape = 'u32[]', space=smem, size = 0x4, offset = 0x4, fixed_abs, tag = 'smem constant byte address 0x4 - core index']
  #allocation1 [shape = 'u32[144,128]{1,0:T(1,128)}', space=vmem, size = 0x12000, scoped, tag = 'internal scratch']
  #allocation2 [shape = 'f32[8,64,128]{2,1,0:T(8,128)}', space=vmem, size = 0x40000, scoped, tag = 'scratch operand']
  %s0 = inlined_call_operand.vmem [shape: s32[17,1024], index: 0, kind: input, shape index: {}]
  %s1 = inlined_call_operand.vmem [shape: f32[8,1024], index: 1, kind: input, shape index: {}]
  %s2 = inlined_call_operand.vmem [shape: f32[96,1], index: 2, kind: input, shape index: {}]
  %s3 = inlined_call_operand.vmem [shape: f32[96,1], index: 3, kind: input, shape index: {}]
  %s4 = inlined_call_operand.vmem [shape: bf16[160,64], index: 4, kind: input, shape index: {}]
  %s5 = inlined_call_operand.vmem [shape: f32[160,1], index: 5, kind: input, shape index: {}]
  %s6 = inlined_call_operand.hbm [shape: f32[32,1024], index: 6, kind: output, shape index: {}]
  %s7 = sld [smem:[#allocation0]]
  $region95: #{tpu_custom_call.1} parent=0
    _
  %s9 = ssub.s32 1, %s7
  %s10 = scalar_select 0, %s9, %s7
  $region1: #{tpu_custom_call.1} parent=0
    #allocation3 [shape = 'u8[24576]{0}', space=vmem, size = 0x6000, scoped, tag = 'input window, operand 0']
    #allocation4 [shape = 'u8[32768]{0}', space=vmem, size = 0x8000, scoped, tag = 'output window, operand 0']
    #allocation5 [shape = 's32[2]{0}', space=sflag, size = 0x8, scoped, tag = 'scoped memory for tpu_custom_call.1']
    %11 = vsyncpa [#allocation5], 0
    %s12 = scalar_lea.sflag [#allocation5], 1
    %13 = vsyncpa %s12, 0
    loop: start=0, step=1, limit=10
    $region2: #{tpu_custom_call.1} parent=1 // loop_pre_header
      _
    $region3: #{tpu_custom_call.1} parent=1 // loop_header
      %s15 = sphi 0, %s19
      %p16 = scmp.ge.s32.totalorder %s15, 10
      %s25 = sphi 0, %s27
      %s28 = sphi 0, %s25
      %s29 = sphi 0, %s28
      %s45 = sphi 0, %s29
      %s51 = sphi 0, %s53
      %s54 = sphi 0, %s51
      %s55 = sphi 0, %s54
      %s71 = sphi 0, %s55
      %s75 = sphi 0, %s75
      %s77 = sphi 0, %s75
      %s78 = sphi 0, %s77
      %s92 = sphi 0, %s78
      %s96 = sphi 0, %s96
      %s98 = sphi 0, %s96
      %s99 = sphi 0, %s98
      %s113 = sphi 0, %s99
      %s117 = sphi 0, %s117
      %s119 = sphi 0, %s117
      %s120 = sphi 0, %s119
      %s134 = sphi 0, %s120
      %s138 = sphi 0, %s138
      %s140 = sphi 0, %s138
      %s141 = sphi 0, %s140
      %s155 = sphi 0, %s141
      %s161 = sphi 0, %s163
      %s164 = sphi 0, %s161
      %s165 = sphi 0, %s164
      %s181 = sphi 0, %s165
    $region4: #{tpu_custom_call.1} parent=1 // loop_header_branch
      %18 = sbr.rel (%p16) target = $region8
    $region5: #{tpu_custom_call.1} parent=1 // loop_body
      %s20 = ssub.s32 %s15, 1
      %s21 = ssub.s32 %s15, 2
      %s22 = sadd.s32 %s15, 1
      %s23 = ssub.s32 %s15, %s22
      %p24 = scmp.eq.s32.totalorder %s23, 0
      %s26 = sadd.s32 %s25, 1
      %s27 = scalar_select %p24, %s25, %s26
      %p30 = pneg %p24
      %p31 = scmp.eq.s32.totalorder %s15, 7
      %p32 = por %p30, %p31
      %p33 = scmp.ne.s32.totalorder %s25, %s28
      %p34 = scmp.eq.s32.totalorder %s15, 0
      %p35 = por %p33, %p34
      %p36 = scmp.ne.s32.totalorder %s25, %s28
      %p37 = scmp.eq.s32.totalorder %s20, 7
      %p38 = por %p36, %p37
      %p39 = scmp.ne.s32.totalorder %s28, %s29
      %p40 = scmp.eq.s32.totalorder %s20, 0
      %p41 = por %p39, %p40
      %p42 = scmp.ne.s32.totalorder %s28, %s29
      %p43 = scmp.eq.s32.totalorder %s21, 7
      %p44 = por %p42, %p43
      %p46 = scmp.ne.s32.totalorder %s29, %s45
      %p47 = scmp.eq.s32.totalorder %s21, 0
      %p48 = por %p46, %p47
      %s49 = ssub.s32 %s15, %s22
      %p50 = scmp.eq.s32.totalorder %s49, 0
      %s52 = sadd.s32 %s51, 1
      %s53 = scalar_select %p50, %s51, %s52
      %p56 = pneg %p50
      %p57 = scmp.eq.s32.totalorder %s15, 7
      %p58 = por %p56, %p57
      %p59 = scmp.ne.s32.totalorder %s51, %s54
      %p60 = scmp.eq.s32.totalorder %s15, 0
      %p61 = por %p59, %p60
      %p62 = scmp.ne.s32.totalorder %s51, %s54
      %p63 = scmp.eq.s32.totalorder %s20, 7
      %p64 = por %p62, %p63
      %p65 = scmp.ne.s32.totalorder %s54, %s55
      %p66 = scmp.eq.s32.totalorder %s20, 0
      %p67 = por %p65, %p66
      %p68 = scmp.ne.s32.totalorder %s54, %s55
      %p69 = scmp.eq.s32.totalorder %s21, 7
      %p70 = por %p68, %p69
      %p72 = scmp.ne.s32.totalorder %s55, %s71
      %p73 = scmp.eq.s32.totalorder %s21, 0
      %p74 = por %p72, %p73
      %s76 = sadd.s32 %s75, 1
      %p79 = scmp.eq.s32.totalorder %s15, 7
      %p80 = scmp.ne.s32.totalorder %s75, %s77
      %p81 = scmp.eq.s32.totalorder %s15, 0
      %p82 = por %p80, %p81
      %p83 = scmp.ne.s32.totalorder %s75, %s77
      %p84 = scmp.eq.s32.totalorder %s20, 7
      %p85 = por %p83, %p84
      %p86 = scmp.ne.s32.totalorder %s77, %s78
      %p87 = scmp.eq.s32.totalorder %s20, 0
      %p88 = por %p86, %p87
      %p89 = scmp.ne.s32.totalorder %s77, %s78
      %p90 = scmp.eq.s32.totalorder %s21, 7
      %p91 = por %p89, %p90
      %p93 = scmp.ne.s32.totalorder %s78, %s92
      %p94 = scmp.eq.s32.totalorder %s21, 0
      %p95 = por %p93, %p94
      %s97 = sadd.s32 %s96, 1
      %p100 = scmp.eq.s32.totalorder %s15, 7
      %p101 = scmp.ne.s32.totalorder %s96, %s98
      %p102 = scmp.eq.s32.totalorder %s15, 0
      %p103 = por %p101, %p102
      %p104 = scmp.ne.s32.totalorder %s96, %s98
      %p105 = scmp.eq.s32.totalorder %s20, 7
      %p106 = por %p104, %p105
      %p107 = scmp.ne.s32.totalorder %s98, %s99
      %p108 = scmp.eq.s32.totalorder %s20, 0
      %p109 = por %p107, %p108
      %p110 = scmp.ne.s32.totalorder %s98, %s99
      %p111 = scmp.eq.s32.totalorder %s21, 7
      %p112 = por %p110, %p111
      %p114 = scmp.ne.s32.totalorder %s99, %s113
      %p115 = scmp.eq.s32.totalorder %s21, 0
      %p116 = por %p114, %p115
      %s118 = sadd.s32 %s117, 1
      %p121 = scmp.eq.s32.totalorder %s15, 7
      %p122 = scmp.ne.s32.totalorder %s117, %s119
      %p123 = scmp.eq.s32.totalorder %s15, 0
      %p124 = por %p122, %p123
      %p125 = scmp.ne.s32.totalorder %s117, %s119
      %p126 = scmp.eq.s32.totalorder %s20, 7
      %p127 = por %p125, %p126
      %p128 = scmp.ne.s32.totalorder %s119, %s120
      %p129 = scmp.eq.s32.totalorder %s20, 0
      %p130 = por %p128, %p129
      %p131 = scmp.ne.s32.totalorder %s119, %s120
      %p132 = scmp.eq.s32.totalorder %s21, 7
      %p133 = por %p131, %p132
      %p135 = scmp.ne.s32.totalorder %s120, %s134
      %p136 = scmp.eq.s32.totalorder %s21, 0
      %p137 = por %p135, %p136
      %s139 = sadd.s32 %s138, 1
      %p142 = scmp.eq.s32.totalorder %s15, 7
      %p143 = scmp.ne.s32.totalorder %s138, %s140
      %p144 = scmp.eq.s32.totalorder %s15, 0
      %p145 = por %p143, %p144
      %p146 = scmp.ne.s32.totalorder %s138, %s140
      %p147 = scmp.eq.s32.totalorder %s20, 7
      %p148 = por %p146, %p147
      %p149 = scmp.ne.s32.totalorder %s140, %s141
      %p150 = scmp.eq.s32.totalorder %s20, 0
      %p151 = por %p149, %p150
      %p152 = scmp.ne.s32.totalorder %s140, %s141
      %p153 = scmp.eq.s32.totalorder %s21, 7
      %p154 = por %p152, %p153
      %p156 = scmp.ne.s32.totalorder %s141, %s155
      %p157 = scmp.eq.s32.totalorder %s21, 0
      %p158 = por %p156, %p157
      %s159 = ssub.s32 %s15, %s22
      %p160 = scmp.eq.s32.totalorder %s159, 0
      %s162 = sadd.s32 %s161, 1
      %s163 = scalar_select %p160, %s161, %s162
      %p166 = pneg %p160
      %p167 = scmp.eq.s32.totalorder %s15, 7
      %p168 = por %p166, %p167
      %p169 = scmp.ne.s32.totalorder %s161, %s164
      %p170 = scmp.eq.s32.totalorder %s15, 0
      %p171 = por %p169, %p170
      %p172 = scmp.ne.s32.totalorder %s161, %s164
      %p173 = scmp.eq.s32.totalorder %s20, 7
      %p174 = por %p172, %p173
      %p175 = scmp.ne.s32.totalorder %s164, %s165
      %p176 = scmp.eq.s32.totalorder %s20, 0
      %p177 = por %p175, %p176
      %p178 = scmp.ne.s32.totalorder %s164, %s165
      %p179 = scmp.eq.s32.totalorder %s21, 7
      %p180 = por %p178, %p179
      %p182 = scmp.ne.s32.totalorder %s165, %s181
      %p183 = scmp.eq.s32.totalorder %s21, 0
      %p184 = por %p182, %p183
      %p185 = scmp.le.s32.totalorder 1, %s15
      %p186 = scmp.lt.s32.totalorder %s15, 9
      %p187 = pnand %p185, %p186
      %p188 = pneg %p187
      // Predicated region
      $region9: #{tpu_custom_call.1} parent=5 // pred_check
        _
      $region10: #{tpu_custom_call.1} parent=5 // pred_check_branch
        %190 = sbr.rel (%p187) target = $region12
      $region11: #{tpu_custom_call.1} parent=5 // pred_region
        %s191 = ssub.s32 %s15, 1
        // Predicated region
        $region13: #{tpu_custom_call.1} parent=11 // pred_check
          %p192 = pneg %p88
        $region14: #{tpu_custom_call.1} parent=11 // pred_check_branch
          %194 = sbr.rel (%p192) target = $region16
        $region15: #{tpu_custom_call.1} parent=11 // pred_region
          _
        $region16: #{tpu_custom_call.1} parent=11 // pred_fallthru
          _
        // Predicated region
        $region17: #{tpu_custom_call.1} parent=11 // pred_check
          %p195 = pneg %p109
        $region18: #{tpu_custom_call.1} parent=11 // pred_check_branch
          %197 = sbr.rel (%p195) target = $region20
        $region19: #{tpu_custom_call.1} parent=11 // pred_region
          _
        $region20: #{tpu_custom_call.1} parent=11 // pred_fallthru
          _
        // Predicated region
        $region21: #{tpu_custom_call.1} parent=11 // pred_check
          %p198 = pneg %p130
        $region22: #{tpu_custom_call.1} parent=11 // pred_check_branch
          %200 = sbr.rel (%p198) target = $region24
        $region23: #{tpu_custom_call.1} parent=11 // pred_region
          _
        $region24: #{tpu_custom_call.1} parent=11 // pred_fallthru
          _
        // Predicated region
        $region25: #{tpu_custom_call.1} parent=11 // pred_check
          %p201 = pneg %p151
        $region26: #{tpu_custom_call.1} parent=11 // pred_check_branch
          %203 = sbr.rel (%p201) target = $region28
        $region27: #{tpu_custom_call.1} parent=11 // pred_region
          _
        $region28: #{tpu_custom_call.1} parent=11 // pred_fallthru
          _
      $region12: #{tpu_custom_call.1} parent=5 // pred_fallthru
        _
      %p204 = scmp.lt.s32.totalorder %s15, 8
      // Predicated region
      $region29: #{tpu_custom_call.1} parent=5 // pred_check
        %p205 = pneg %p204
      $region30: #{tpu_custom_call.1} parent=5 // pred_check_branch
        %207 = sbr.rel (%p205) target = $region32
      $region31: #{tpu_custom_call.1} parent=5 // pred_region
        // Predicated region
        $region33: #{tpu_custom_call.1} parent=31 // pred_check
          %p208 = pneg %p35
        $region34: #{tpu_custom_call.1} parent=31 // pred_check_branch
          %210 = sbr.rel (%p208) target = $region36
        $region35: #{tpu_custom_call.1} parent=31 // pred_region
          %s211 = sand.u32 %s25, 1
          %s212 = sand.u32 %s25, 1
          %s213 = smul.addr %s212, 24
          %s214 = scalar_lea.vmem [#allocation3], %s213
          %s215 = smul.addr %s15, 8
          %s216 = scalar_lea.vmem %s0, %s215
          // Predicated region
          $region37: #{tpu_custom_call.1} parent=35 // pred_check
            _
          $region38: #{tpu_custom_call.1} parent=35 // pred_check_branch
            %218 = sbr.rel (0) target = $region40
          $region39: #{tpu_custom_call.1} parent=35 // pred_region
            // Predicated region
            $region41: #{tpu_custom_call.1} parent=39 // pred_check
              _
            $region42: #{tpu_custom_call.1} parent=39 // pred_check_branch
              %220 = sbr.rel (0) target = $region44
            $region43: #{tpu_custom_call.1} parent=39 // pred_region
              // Predicated region
              $region56: #{tpu_custom_call.1} parent=43 // pred_check
                _
              $region57: #{tpu_custom_call.1} parent=43 // pred_check_branch
                %239 = sbr.rel (0) target = $region59
              $region58: #{tpu_custom_call.1} parent=43 // pred_region
                loop: start=0, step=1, limit=1
                $region60: #{tpu_custom_call.1} parent=58 // loop_pre_header
                  _
                $region61: #{tpu_custom_call.1} parent=58 // loop_header
                  %s241 = sphi 0, %s245
                  %p242 = scmp.ge.s32.totalorder %s241, 1
                  %s246 = sphi %s216, %s216
                  %s247 = sphi %s214, %s214
                $region62: #{tpu_custom_call.1} parent=58 // loop_header_branch
                  %244 = sbr.rel (%p242) target = $region66
                $region63: #{tpu_custom_call.1} parent=58 // loop_body
                  %v248 = vld [vmem:[%s246] sm:$0xff]
                  %249 = vst [vmem:[%s247] sm:$0xff] %v248
                  %v250 = vld [vmem:[%s246 + $0x40] sm:$0xff]
                  %251 = vst [vmem:[%s247 + $0x8] sm:$0xff] %v250
                  %v252 = vld [vmem:[%s246 + $0x80] sm:$0xff]
                  %253 = vst [vmem:[%s247 + $0x10] sm:$0xff] %v252
                $region64: #{tpu_custom_call.1} parent=58 // loop_footer
                  %s245 = sadd.s32 1, %s241
                $region65: #{tpu_custom_call.1} parent=58 // loop_footer_branch
                  %240 = sbr.rel target = $region61
                $region66: #{tpu_custom_call.1} parent=58 // loop_exit
                  _
              $region59: #{tpu_custom_call.1} parent=43 // pred_fallthru
                _
              // Predicated region
              $region67: #{tpu_custom_call.1} parent=43 // pred_check
                _
              $region68: #{tpu_custom_call.1} parent=43 // pred_check_branch
                %255 = sbr.rel target = $region70
              $region69: #{tpu_custom_call.1} parent=43 // pred_region
                _
              $region70: #{tpu_custom_call.1} parent=43 // pred_fallthru
                _
            $region44: #{tpu_custom_call.1} parent=39 // pred_fallthru
              _
            // Predicated region
            $region45: #{tpu_custom_call.1} parent=39 // pred_check
              _
            $region46: #{tpu_custom_call.1} parent=39 // pred_check_branch
              %222 = sbr.rel target = $region48
            $region47: #{tpu_custom_call.1} parent=39 // pred_region
              loop: start=0, step=1, limit=1
              $region49: #{tpu_custom_call.1} parent=47 // loop_pre_header
                _
              $region50: #{tpu_custom_call.1} parent=47 // loop_header
                %s225 = sphi 0, %s229
                %p226 = scmp.ge.s32.totalorder %s225, 1
                %s230 = sphi %s216, %s216
                %s231 = sphi %s214, %s214
              $region51: #{tpu_custom_call.1} parent=47 // loop_header_branch
                %228 = sbr.rel (%p226) target = $region55
              $region52: #{tpu_custom_call.1} parent=47 // loop_body
                %v232 = vld [vmem:[%s230] sm:$0xff]
                %233 = vst [vmem:[%s231] sm:$0xff] %v232
                %v234 = vld [vmem:[%s230 + $0x40] sm:$0xff]
                %235 = vst [vmem:[%s231 + $0x8] sm:$0xff] %v234
                %v236 = vld [vmem:[%s230 + $0x80] sm:$0xff]
                %237 = vst [vmem:[%s231 + $0x10] sm:$0xff] %v236
              $region53: #{tpu_custom_call.1} parent=47 // loop_footer
                %s229 = sadd.s32 1, %s225
              $region54: #{tpu_custom_call.1} parent=47 // loop_footer_branch
                %224 = sbr.rel target = $region50
              $region55: #{tpu_custom_call.1} parent=47 // loop_exit
                _
            $region48: #{tpu_custom_call.1} parent=39 // pred_fallthru
              _
          $region40: #{tpu_custom_call.1} parent=35 // pred_fallthru
            _
          %256 = vnop
        $region36: #{tpu_custom_call.1} parent=31 // pred_fallthru
          _
        // Predicated region
        $region71: #{tpu_custom_call.1} parent=31 // pred_check
          %p257 = pneg %p61
        $region72: #{tpu_custom_call.1} parent=31 // pred_check_branch
          %259 = sbr.rel (%p257) target = $region74
        $region73: #{tpu_custom_call.1} parent=31 // pred_region
          %p260 = scmp.lt.s32.totalorder %s15, 7
          %s261 = scalar_select %p260, %s15, 7
          %s262 = smul.addr %s261, 8
          %s263 = scalar_lea.vmem %s1, %s262
        $region74: #{tpu_custom_call.1} parent=31 // pred_fallthru
          _
      $region32: #{tpu_custom_call.1} parent=5 // pred_fallthru
        _
      %p264 = scmp.le.s32.totalorder 1, %s15
      %p265 = scmp.lt.s32.totalorder %s15, 9
      %p266 = pnand %p264, %p265
      %p267 = pneg %p266
      // Predicated region
      $region75: #{tpu_custom_call.1} parent=5 // pred_check
        _
      $region76: #{tpu_custom_call.1} parent=5 // pred_check_branch
        %269 = sbr.rel (%p266) target = $region78
      $region77: #{tpu_custom_call.1} parent=5 // pred_region
        %s270 = ssub.s32 %s15, 1
        %s271 = sand.u32 %s28, 1
        %s272 = sand.u32 %s28, 1
        %s273 = smul.addr %s272, 24
        %s274 = scalar_lea.vmem [#allocation3], %s273
        // Predicated region
        $region79: #{tpu_custom_call.1} parent=77 // pred_check
          %p275 = pneg %p41
        $region80: #{tpu_custom_call.1} parent=77 // pred_check_branch
          %277 = sbr.rel (%p275) target = $region82
        $region81: #{tpu_custom_call.1} parent=77 // pred_region
          _
        $region82: #{tpu_custom_call.1} parent=77 // pred_fallthru
          _
        %s278 = sand.u32 %s28, 1
        %s279 = sand.u32 %s28, 1
        %s280 = smul.addr %s279, 24
        %s281 = scalar_lea.vmem [#allocation3], %s280
        %p282 = pneg %p41
        %p283 = pneg %p38
        %p284 = scmp.lt.s32.totalorder %s20, 7
        %s285 = scalar_select %p284, %s20, 7
        %s286 = smul.addr %s285, 8
        %s287 = scalar_lea.vmem %s1, %s286
        %p288 = pneg %p67
        %p289 = pneg %p64
        %p290 = pneg %p88
        %p291 = pneg %p85
        %p292 = pneg %p109
        %p293 = pneg %p106
        %p294 = pneg %p130
        %p295 = pneg %p127
        %p296 = pneg %p151
        %p297 = pneg %p148
        %p298 = pneg %p177
        %p299 = pneg %p174
        %s300 = sand.u32 %s164, 1
        %s301 = scalar_lea.sflag [#allocation5], %s300
        %s302 = sand.u32 %s164, 1
        %s303 = smul.addr %s302, 32
        %s304 = scalar_lea.vmem [#allocation4], %s303
        %p305 = scmp.lt.s32.totalorder %s20, 7
        %s306 = scalar_select %p305, %s20, 7
        %s307 = smul.addr %s306, 8
        %s308 = scalar_lea.vmem %s1, %s307
        %v310 = vld [vmem:[%s274] sm:$0xff]
        %v311 = vld [vmem:[%s274 + $0x8] sm:$0xff]
        %v312 = vld [vmem:[%s274 + $0x10] sm:$0x1]
        %v313 = vld [vmem:[%s308] sm:$0xff]
        %v314 = vld [vmem:[%s2] sm:$0xff]
        %v315 = vld [vmem:[%s2 + $0x8] sm:$0xff]
        %v316 = vld [vmem:[%s2 + $0x10] sm:$0xff]
        %v317 = vld [vmem:[%s2 + $0x18] sm:$0xff]
        %v318 = vld [vmem:[%s2 + $0x20] sm:$0xff]
        %v319 = vld [vmem:[%s2 + $0x28] sm:$0xff]
        %v320 = vld [vmem:[%s2 + $0x30] sm:$0xff]
        %v321 = vld [vmem:[%s2 + $0x38] sm:$0xff]
        %v322 = vld [vmem:[%s2 + $0x40] sm:$0xff]
        %v323 = vld [vmem:[%s2 + $0x48] sm:$0xff]
        %v324 = vld [vmem:[%s2 + $0x50] sm:$0xff]
        %v325 = vld [vmem:[%s2 + $0x58] sm:$0xff]
        %327 = vset.pattern.permute.xlu0 0
        %328 = vperm.xlu0 %327, %v314
        %v329 = vpop.permute.xlu0 %328
        %332 = vset.pattern.permute.xlu0 0
        %333 = vperm.xlu0 %332, %v315
        %v334 = vpop.permute.xlu0 %333
        %337 = vset.pattern.permute.xlu0 0
        %338 = vperm.xlu0 %337, %v316
        %v339 = vpop.permute.xlu0 %338
        %342 = vset.pattern.permute.xlu0 0
        %343 = vperm.xlu0 %342, %v317
        %v344 = vpop.permute.xlu0 %343
        %347 = vset.pattern.permute.xlu0 0
        %348 = vperm.xlu0 %347, %v318
        %v349 = vpop.permute.xlu0 %348
        %352 = vset.pattern.permute.xlu0 0
        %353 = vperm.xlu0 %352, %v319
        %v354 = vpop.permute.xlu0 %353
        %357 = vset.pattern.permute.xlu0 0
        %358 = vperm.xlu0 %357, %v320
        %v359 = vpop.permute.xlu0 %358
        %362 = vset.pattern.permute.xlu0 0
        %363 = vperm.xlu0 %362, %v321
        %v364 = vpop.permute.xlu0 %363
        %367 = vset.pattern.permute.xlu0 0
        %368 = vperm.xlu0 %367, %v322
        %v369 = vpop.permute.xlu0 %368
        %372 = vset.pattern.permute.xlu0 0
        %373 = vperm.xlu0 %372, %v323
        %v374 = vpop.permute.xlu0 %373
        %377 = vset.pattern.permute.xlu0 0
        %378 = vperm.xlu0 %377, %v324
        %v379 = vpop.permute.xlu0 %378
        %382 = vset.pattern.permute.xlu0 0
        %383 = vperm.xlu0 %382, %v325
        %v384 = vpop.permute.xlu0 %383
        %v386 = vld [vmem:[%s3] sm:$0xff]
        %v387 = vld [vmem:[%s3 + $0x8] sm:$0xff]
        %v388 = vld [vmem:[%s3 + $0x10] sm:$0xff]
        %v389 = vld [vmem:[%s3 + $0x18] sm:$0xff]
        %v390 = vld [vmem:[%s3 + $0x20] sm:$0xff]
        %v391 = vld [vmem:[%s3 + $0x28] sm:$0xff]
        %v392 = vld [vmem:[%s3 + $0x30] sm:$0xff]
        %v393 = vld [vmem:[%s3 + $0x38] sm:$0xff]
        %v394 = vld [vmem:[%s3 + $0x40] sm:$0xff]
        %v395 = vld [vmem:[%s3 + $0x48] sm:$0xff]
        %v396 = vld [vmem:[%s3 + $0x50] sm:$0xff]
        %v397 = vld [vmem:[%s3 + $0x58] sm:$0xff]
        %399 = vset.pattern.permute.xlu0 0
        %400 = vperm.xlu0 %399, %v386
        %v401 = vpop.permute.xlu0 %400
        %404 = vset.pattern.permute.xlu0 0
        %405 = vperm.xlu0 %404, %v387
        %v406 = vpop.permute.xlu0 %405
        %409 = vset.pattern.permute.xlu0 0
        %410 = vperm.xlu0 %409, %v388
        %v411 = vpop.permute.xlu0 %410
        %414 = vset.pattern.permute.xlu0 0
        %415 = vperm.xlu0 %414, %v389
        %v416 = vpop.permute.xlu0 %415
        %419 = vset.pattern.permute.xlu0 0
        %420 = vperm.xlu0 %419, %v390
        %v421 = vpop.permute.xlu0 %420
        %424 = vset.pattern.permute.xlu0 0
        %425 = vperm.xlu0 %424, %v391
        %v426 = vpop.permute.xlu0 %425
        %429 = vset.pattern.permute.xlu0 0
        %430 = vperm.xlu0 %429, %v392
        %v431 = vpop.permute.xlu0 %430
        %434 = vset.pattern.permute.xlu0 0
        %435 = vperm.xlu0 %434, %v393
        %v436 = vpop.permute.xlu0 %435
        %439 = vset.pattern.permute.xlu0 0
        %440 = vperm.xlu0 %439, %v394
        %v441 = vpop.permute.xlu0 %440
        %444 = vset.pattern.permute.xlu0 0
        %445 = vperm.xlu0 %444, %v395
        %v446 = vpop.permute.xlu0 %445
        %449 = vset.pattern.permute.xlu0 0
        %450 = vperm.xlu0 %449, %v396
        %v451 = vpop.permute.xlu0 %450
        %454 = vset.pattern.permute.xlu0 0
        %455 = vperm.xlu0 %454, %v397
        %v456 = vpop.permute.xlu0 %455
        %v458 = vld [vmem:[%s5] sm:$0xff]
        %v459 = vld [vmem:[%s5 + $0x8] sm:$0xff]
        %v460 = vld [vmem:[%s5 + $0x10] sm:$0xff]
        %v461 = vld [vmem:[%s5 + $0x18] sm:$0xff]
        %v462 = vld [vmem:[%s5 + $0x20] sm:$0xff]
        %v463 = vld [vmem:[%s5 + $0x28] sm:$0xff]
        %v464 = vld [vmem:[%s5 + $0x30] sm:$0xff]
        %v465 = vld [vmem:[%s5 + $0x38] sm:$0xff]
        %v466 = vld [vmem:[%s5 + $0x40] sm:$0xff]
        %v467 = vld [vmem:[%s5 + $0x48] sm:$0xff]
        %v468 = vld [vmem:[%s5 + $0x50] sm:$0xff]
        %v469 = vld [vmem:[%s5 + $0x58] sm:$0xff]
        %v470 = vld [vmem:[%s5 + $0x60] sm:$0xff]
        %v471 = vld [vmem:[%s5 + $0x68] sm:$0xff]
        %v472 = vld [vmem:[%s5 + $0x70] sm:$0xff]
        %v473 = vld [vmem:[%s5 + $0x78] sm:$0xff]
        %v474 = vld [vmem:[%s5 + $0x80] sm:$0xff]
        %v475 = vld [vmem:[%s5 + $0x88] sm:$0xff]
        %v476 = vld [vmem:[%s5 + $0x90] sm:$0xff]
        %v477 = vld [vmem:[%s5 + $0x98] sm:$0xff]
        %479 = vset.pattern.permute.xlu0 0
        %480 = vperm.xlu0 %479, %v458
        %v481 = vpop.permute.xlu0 %480
        %484 = vset.pattern.permute.xlu0 0
        %485 = vperm.xlu0 %484, %v459
        %v486 = vpop.permute.xlu0 %485
        %489 = vset.pattern.permute.xlu0 0
        %490 = vperm.xlu0 %489, %v460
        %v491 = vpop.permute.xlu0 %490
        %494 = vset.pattern.permute.xlu0 0
        %495 = vperm.xlu0 %494, %v461
        %v496 = vpop.permute.xlu0 %495
        %499 = vset.pattern.permute.xlu0 0
        %500 = vperm.xlu0 %499, %v462
        %v501 = vpop.permute.xlu0 %500
        %504 = vset.pattern.permute.xlu0 0
        %505 = vperm.xlu0 %504, %v463
        %v506 = vpop.permute.xlu0 %505
        %509 = vset.pattern.permute.xlu0 0
        %510 = vperm.xlu0 %509, %v464
        %v511 = vpop.permute.xlu0 %510
        %514 = vset.pattern.permute.xlu0 0
        %515 = vperm.xlu0 %514, %v465
        %v516 = vpop.permute.xlu0 %515
        %519 = vset.pattern.permute.xlu0 0
        %520 = vperm.xlu0 %519, %v466
        %v521 = vpop.permute.xlu0 %520
        %524 = vset.pattern.permute.xlu0 0
        %525 = vperm.xlu0 %524, %v467
        %v526 = vpop.permute.xlu0 %525
        %529 = vset.pattern.permute.xlu0 0
        %530 = vperm.xlu0 %529, %v468
        %v531 = vpop.permute.xlu0 %530
        %534 = vset.pattern.permute.xlu0 0
        %535 = vperm.xlu0 %534, %v469
        %v536 = vpop.permute.xlu0 %535
        %539 = vset.pattern.permute.xlu0 0
        %540 = vperm.xlu0 %539, %v470
        %v541 = vpop.permute.xlu0 %540
        %544 = vset.pattern.permute.xlu0 0
        %545 = vperm.xlu0 %544, %v471
        %v546 = vpop.permute.xlu0 %545
        %549 = vset.pattern.permute.xlu0 0
        %550 = vperm.xlu0 %549, %v472
        %v551 = vpop.permute.xlu0 %550
        %554 = vset.pattern.permute.xlu0 0
        %555 = vperm.xlu0 %554, %v473
        %v556 = vpop.permute.xlu0 %555
        %559 = vset.pattern.permute.xlu0 0
        %560 = vperm.xlu0 %559, %v474
        %v561 = vpop.permute.xlu0 %560
        %564 = vset.pattern.permute.xlu0 0
        %565 = vperm.xlu0 %564, %v475
        %v566 = vpop.permute.xlu0 %565
        %569 = vset.pattern.permute.xlu0 0
        %570 = vperm.xlu0 %569, %v476
        %v571 = vpop.permute.xlu0 %570
        %574 = vset.pattern.permute.xlu0 0
        %575 = vperm.xlu0 %574, %v477
        %v576 = vpop.permute.xlu0 %575
        %v578 = vld [vmem:[%s4] sm:$0xf]
        %v579 = vld [vmem:[%s4 + $0x4] sm:$0xf]
        %v580 = vld [vmem:[%s4 + $0x8] sm:$0xf]
        %v581 = vld [vmem:[%s4 + $0xc] sm:$0xf]
        %v582 = vld [vmem:[%s4 + $0x10] sm:$0xf]
        %v583 = vld [vmem:[%s4 + $0x14] sm:$0xf]
        %v584 = vld [vmem:[%s4 + $0x18] sm:$0xf]
        %v585 = vld [vmem:[%s4 + $0x1c] sm:$0xf]
        %v586 = vld [vmem:[%s4 + $0x20] sm:$0xf]
        %v587 = vld [vmem:[%s4 + $0x24] sm:$0xf]
        %v588 = vld [vmem:[%s4 + $0x28] sm:$0xf]
        %v589 = vld [vmem:[%s4 + $0x2c] sm:$0xf]
        %v590 = vld [vmem:[%s4 + $0x30] sm:$0xf]
        %v591 = vld [vmem:[%s4 + $0x34] sm:$0xf]
        %v592 = vld [vmem:[%s4 + $0x38] sm:$0xf]
        %v593 = vld [vmem:[%s4 + $0x3c] sm:$0xf]
        %v594 = vld [vmem:[%s4 + $0x40] sm:$0xf]
        %v595 = vld [vmem:[%s4 + $0x44] sm:$0xf]
        %v596 = vld [vmem:[%s4 + $0x48] sm:$0xf]
        %v597 = vld [vmem:[%s4 + $0x4c] sm:$0xf]
        %v598 = vlaneseq
        %v599 = vshrl.u32 %v598, 7
        %v600 = vsub.s32 0, %v599
        %v601 = vrot.slane %v313, %v600
        %v602 = vmul.f32 %v329, %v601
        %v603 = vmul.f32 %v334, %v601
        %v604 = vmul.f32 %v339, %v601
        %v605 = vmul.f32 %v344, %v601
        %v606 = vmul.f32 %v349, %v601
        %v607 = vmul.f32 %v354, %v601
        %v608 = vmul.f32 %v359, %v601
        %v609 = vmul.f32 %v364, %v601
        %v610 = vmul.f32 %v369, %v601
        %v611 = vmul.f32 %v374, %v601
        %v612 = vmul.f32 %v379, %v601
        %v613 = vmul.f32 %v384, %v601
        %v614 = vadd.f32 %v602, %v401
        %v615 = vadd.f32 %v603, %v406
        %v616 = vadd.f32 %v604, %v411
        %v617 = vadd.f32 %v605, %v416
        %v618 = vadd.f32 %v606, %v421
        %v619 = vadd.f32 %v607, %v426
        %v620 = vadd.f32 %v608, %v431
        %v621 = vadd.f32 %v609, %v436
        %v622 = vadd.f32 %v610, %v441
        %v623 = vadd.f32 %v611, %v446
        %v624 = vadd.f32 %v612, %v451
        %v625 = vadd.f32 %v613, %v456
        %v626 = vxor.u32 %v614, 2147483648
        %v627 = vxor.u32 %v615, 2147483648
        %v628 = vxor.u32 %v616, 2147483648
        %v629 = vxor.u32 %v617, 2147483648
        %v630 = vmul.f32 %v626, 1.442695
        %v631 = vpow.pop %v630
        %v632 = vmul.f32 %v627, 1.442695
        %v633 = vpow.pop %v632
        %v634 = vmul.f32 %v628, 1.442695
        %v635 = vpow.pop %v634
        %v636 = vmul.f32 %v629, 1.442695
        %v637 = vpow.pop %v636
        %v638 = vadd.f32 %v631, 1.0
        %v639 = vadd.f32 %v633, 1.0
        %v640 = vadd.f32 %v635, 1.0
        %v641 = vadd.f32 %v637, 1.0
        %v642 = vrcp.pop %v638
        %v643 = vmul.f32 1.0, %v642
        %v644 = vrcp.pop %v639
        %v645 = vmul.f32 1.0, %v644
        %v646 = vrcp.pop %v640
        %v647 = vmul.f32 1.0, %v646
        %v648 = vrcp.pop %v641
        %v649 = vmul.f32 1.0, %v648
        %v650 = vmax.f32 %v618, 0.0
        %v651 = vmax.f32 %v619, 0.0
        %v652 = vmax.f32 %v620, 0.0
        %v653 = vmax.f32 %v621, 0.0
        %v654 = vmul.f32 %v643, %v650
        %v655 = vmul.f32 %v645, %v651
        %v656 = vmul.f32 %v647, %v652
        %v657 = vmul.f32 %v649, %v653
        %v658 = vxor.u32 %v622, 2147483648
        %v659 = vxor.u32 %v623, 2147483648
        %v660 = vxor.u32 %v624, 2147483648
        %v661 = vxor.u32 %v625, 2147483648
        %v662 = vmul.f32 %v658, 1.442695
        %v663 = vpow.pop %v662
        %v664 = vmul.f32 %v659, 1.442695
        %v665 = vpow.pop %v664
        %v666 = vmul.f32 %v660, 1.442695
        %v667 = vpow.pop %v666
        %v668 = vmul.f32 %v661, 1.442695
        %v669 = vpow.pop %v668
        %v670 = vadd.f32 %v663, 1.0
        %v671 = vadd.f32 %v665, 1.0
        %v672 = vadd.f32 %v667, 1.0
        %v673 = vadd.f32 %v669, 1.0
        %v674 = vrcp.pop %v670
        %v675 = vmul.f32 1.0, %v674
        %v676 = vrcp.pop %v671
        %v677 = vmul.f32 1.0, %v676
        %v678 = vrcp.pop %v672
        %v679 = vmul.f32 1.0, %v678
        %v680 = vrcp.pop %v673
        %v681 = vmul.f32 1.0, %v680
        %v682 = vmax.f32 %v654, 0.0
        %v683 = vmax.f32 %v655, 0.0
        %v684 = vmax.f32 %v656, 0.0
        %v685 = vmax.f32 %v657, 0.0
        %v686 = vmul.f32 %v675, %v682
        %v687 = vmul.f32 %v677, %v683
        %v688 = vmul.f32 %v679, %v684
        %v689 = vmul.f32 %v681, %v685
        %690 = vst [vmem:[#allocation2] sm:$0xff] %v654
        %691 = vst [vmem:[#allocation2 + $0x8] sm:$0xff] %v655
        %692 = vst [vmem:[#allocation2 + $0x10] sm:$0xff] %v656
        %693 = vst [vmem:[#allocation2 + $0x18] sm:$0xff] %v657
        %694 = vst [vmem:[#allocation2 + $0x20] sm:$0xff] %v686
        %695 = vst [vmem:[#allocation2 + $0x28] sm:$0xff] %v687
        %696 = vst [vmem:[#allocation2 + $0x30] sm:$0xff] %v688
        %697 = vst [vmem:[#allocation2 + $0x38] sm:$0xff] %v689
        %vm698 = vcmp.eq.s32.totalorder %v312, 0
        %v699 = vsel %vm698, 1, 0
        %v700 = vlaneseq
        %v701 = vshrl.u32 %v700, 7
        %v702 = vsub.s32 0, %v701
        %v703 = vrot.slane %v699, %v702
        %vm704 = vcmp.eq.s32.totalorder %v703, 1
        %v705 = vsel %vm704, %v686, 0.0
        %v706 = vsel %vm704, %v687, 0.0
        %v707 = vsel %vm704, %v688, 0.0
        %v708 = vsel %vm704, %v689, 0.0
        %v709 = vlaneseq
        %v710 = vshrl.u32 %v709, 7
        %v711 = vsub.s32 1, %v710
        %v712 = vrot.slane %v313, %v711
        %v713 = vmul.f32 %v329, %v712
        %v714 = vmul.f32 %v334, %v712
        %v715 = vmul.f32 %v339, %v712
        %v716 = vmul.f32 %v344, %v712
        %v717 = vmul.f32 %v349, %v712
        %v718 = vmul.f32 %v354, %v712
        %v719 = vmul.f32 %v359, %v712
        %v720 = vmul.f32 %v364, %v712
        %v721 = vmul.f32 %v369, %v712
        %v722 = vmul.f32 %v374, %v712
        %v723 = vmul.f32 %v379, %v712
        %v724 = vmul.f32 %v384, %v712
        %v725 = vadd.f32 %v713, %v401
        %v726 = vadd.f32 %v714, %v406
        %v727 = vadd.f32 %v715, %v411
        %v728 = vadd.f32 %v716, %v416
        %v729 = vadd.f32 %v717, %v421
        %v730 = vadd.f32 %v718, %v426
        %v731 = vadd.f32 %v719, %v431
        %v732 = vadd.f32 %v720, %v436
        %v733 = vadd.f32 %v721, %v441
        %v734 = vadd.f32 %v722, %v446
        %v735 = vadd.f32 %v723, %v451
        %v736 = vadd.f32 %v724, %v456
        %v737 = vxor.u32 %v725, 2147483648
        %v738 = vxor.u32 %v726, 2147483648
        %v739 = vxor.u32 %v727, 2147483648
        %v740 = vxor.u32 %v728, 2147483648
        %v741 = vmul.f32 %v737, 1.442695
        %v742 = vpow.pop %v741
        %v743 = vmul.f32 %v738, 1.442695
        %v744 = vpow.pop %v743
        %v745 = vmul.f32 %v739, 1.442695
        %v746 = vpow.pop %v745
        %v747 = vmul.f32 %v740, 1.442695
        %v748 = vpow.pop %v747
        %v749 = vadd.f32 %v742, 1.0
        %v750 = vadd.f32 %v744, 1.0
        %v751 = vadd.f32 %v746, 1.0
        %v752 = vadd.f32 %v748, 1.0
        %v753 = vrcp.pop %v749
        %v754 = vmul.f32 1.0, %v753
        %v755 = vrcp.pop %v750
        %v756 = vmul.f32 1.0, %v755
        %v757 = vrcp.pop %v751
        %v758 = vmul.f32 1.0, %v757
        %v759 = vrcp.pop %v752
        %v760 = vmul.f32 1.0, %v759
        %v761 = vmax.f32 %v729, 0.0
        %v762 = vmax.f32 %v730, 0.0
        %v763 = vmax.f32 %v731, 0.0
        %v764 = vmax.f32 %v732, 0.0
        %v765 = vmul.f32 %v754, %v761
        %v766 = vmul.f32 %v756, %v762
        %v767 = vmul.f32 %v758, %v763
        %v768 = vmul.f32 %v760, %v764
        %v769 = vxor.u32 %v733, 2147483648
        %v770 = vxor.u32 %v734, 2147483648
        %v771 = vxor.u32 %v735, 2147483648
        %v772 = vxor.u32 %v736, 2147483648
        %v773 = vmul.f32 %v769, 1.442695
        %v774 = vpow.pop %v773
        %v775 = vmul.f32 %v770, 1.442695
        %v776 = vpow.pop %v775
        %v777 = vmul.f32 %v771, 1.442695
        %v778 = vpow.pop %v777
        %v779 = vmul.f32 %v772, 1.442695
        %v780 = vpow.pop %v779
        %v781 = vadd.f32 %v774, 1.0
        %v782 = vadd.f32 %v776, 1.0
        %v783 = vadd.f32 %v778, 1.0
        %v784 = vadd.f32 %v780, 1.0
        %v785 = vrcp.pop %v781
        %v786 = vmul.f32 1.0, %v785
        %v787 = vrcp.pop %v782
        %v788 = vmul.f32 1.0, %v787
        %v789 = vrcp.pop %v783
        %v790 = vmul.f32 1.0, %v789
        %v791 = vrcp.pop %v784
        %v792 = vmul.f32 1.0, %v791
        %v793 = vmax.f32 %v765, 0.0
        %v794 = vmax.f32 %v766, 0.0
        %v795 = vmax.f32 %v767, 0.0
        %v796 = vmax.f32 %v768, 0.0
        %v797 = vmul.f32 %v786, %v793
        %v798 = vmul.f32 %v788, %v794
        %v799 = vmul.f32 %v790, %v795
        %v800 = vmul.f32 %v792, %v796
        %v801 = vld [vmem:[#allocation2] sm:$0xff]
        %v802 = vld [vmem:[#allocation2 + $0x8] sm:$0xff]
        %v803 = vld [vmem:[#allocation2 + $0x10] sm:$0xff]
        %v804 = vld [vmem:[#allocation2 + $0x18] sm:$0xff]
        %v805 = vld [vmem:[#allocation2 + $0x20] sm:$0xff]
        %v806 = vld [vmem:[#allocation2 + $0x28] sm:$0xff]
        %v807 = vld [vmem:[#allocation2 + $0x30] sm:$0xff]
        %v808 = vld [vmem:[#allocation2 + $0x38] sm:$0xff]
        %vm809 = vcmp.eq.s32.totalorder %v310, 0
        %v810 = vsel %vm809, 1, 0
        %v811 = vlaneseq
        %v812 = vshrl.u32 %v811, 7
        %v813 = vsub.s32 1, %v812
        %v814 = vrot.slane %v810, %v813
        %vm815 = vcmp.eq.s32.totalorder %v814, 1
        %v816 = vsel %vm815, %v801, 0.0
        %v817 = vsel %vm815, %v802, 0.0
        %v818 = vsel %vm815, %v803, 0.0
        %v819 = vsel %vm815, %v804, 0.0
        %v820 = vsel %vm815, %v805, 0.0
        %v821 = vsel %vm815, %v806, 0.0
        %v822 = vsel %vm815, %v807, 0.0
        %v823 = vsel %vm815, %v808, 0.0
        %vm824 = vcmp.eq.s32.totalorder %v311, 0
        %v825 = vsel %vm824, 1, 0
        %v826 = vlaneseq
        %v827 = vshrl.u32 %v826, 7
        %v828 = vsub.s32 1, %v827
        %v829 = vrot.slane %v825, %v828
        %vm830 = vcmp.eq.s32.totalorder %v829, 1
        %v831 = vsel %vm830, %v801, 0.0
        %v832 = vsel %vm830, %v802, 0.0
        %v833 = vsel %vm830, %v803, 0.0
        %v834 = vsel %vm830, %v804, 0.0
        %v835 = vsel %vm830, %v805, 0.0
        %v836 = vsel %vm830, %v806, 0.0
        %v837 = vsel %vm830, %v807, 0.0
        %v838 = vsel %vm830, %v808, 0.0
        %v839 = vpack.c.bf16 %v821, %v820
        %v840 = vpack.c.bf16 %v823, %v822
        %v841 = vpack.c.bf16 %v836, %v835
        %v842 = vpack.c.bf16 %v838, %v837
        %v863 = vunpack.c.l.b16 %v578
        %v864 = vunpack.c.l.b16 %v579
        %v865 = vunpack.c.l.b16 %v580
        %v866 = vunpack.c.l.b16 %v581
        %v867 = vunpack.c.l.b16 %v582
        %v868 = vunpack.c.l.b16 %v583
        %v869 = vunpack.c.l.b16 %v584
        %v870 = vunpack.c.l.b16 %v585
        %v871 = vunpack.c.l.b16 %v586
        %v872 = vunpack.c.l.b16 %v587
        %v873 = vunpack.c.l.b16 %v588
        %v874 = vunpack.c.l.b16 %v589
        %v875 = vunpack.c.l.b16 %v590
        %v876 = vunpack.c.l.b16 %v591
        %v877 = vunpack.c.l.b16 %v592
        %v878 = vunpack.c.l.b16 %v593
        %v879 = vunpack.c.l.b16 %v594
        %v880 = vunpack.c.l.b16 %v595
        %v881 = vunpack.c.l.b16 %v596
        %v882 = vunpack.c.l.b16 %v597
        %v883 = vpack.c.b16 %v864, %v863
        %v884 = vpack.c.b16 %v866, %v865
        %v885 = vpack.c.b16 %v868, %v867
        %v886 = vpack.c.b16 %v870, %v869
        %v887 = vpack.c.b16 %v872, %v871
        %v888 = vpack.c.b16 %v874, %v873
        %v889 = vpack.c.b16 %v876, %v875
        %v890 = vpack.c.b16 %v878, %v877
        %v891 = vpack.c.b16 %v880, %v879
        %v892 = vpack.c.b16 %v882, %v881
        %vm893 = vcmask 523264
        %v895 = vsel %vm893, %v883, 0
        %v898 = vsel %vm893, %v884, 0
        %v901 = vsel %vm893, %v885, 0
        %v904 = vsel %vm893, %v886, 0
        %v907 = vsel %vm893, %v887, 0
        %v910 = vsel %vm893, %v888, 0
        %v913 = vsel %vm893, %v889, 0
        %v916 = vsel %vm893, %v890, 0
        %v919 = vsel %vm893, %v891, 0
        %v922 = vsel %vm893, %v892, 0
        %924 = vmatprep.subr.bf16.mxu0 0
        %925 = vmatpush1.bf16.msra.mxu0 %v839
        %926 = vmatprep.subr.bf16.mxu0 0
        %927 = vmatpush1.bf16.msra.mxu0 %v840
        %928 = vmatprep.subr.bf16.mxu0 0
        %929 = vmatpush1.bf16.msra.mxu0 %v841
        %930 = vmatprep.subr.bf16.mxu0 0
        %931 = vmatpush1.bf16.msra.mxu0 %v842
        %932 = vmatprep.subr.bf16.mxu0 0
        %933 = vmatpush1.bf16.msra.mxu0 0
        %934 = vmatprep.subr.bf16.mxu0 0
        %935 = vmatpush1.bf16.msra.mxu0 0
        %936 = vmatprep.subr.bf16.mxu0 0
        %937 = vmatpush1.bf16.msra.mxu0 0
        %938 = vmatprep.subr.bf16.mxu0 0
        %939 = vmatpush1.bf16.msra.mxu0 0
        %940 = vmatprep.subr.bf16.mxu0 0
        %941 = vmatpush1.bf16.msra.mxu0 0
        %942 = vmatprep.subr.bf16.mxu0 0
        %943 = vmatpush1.bf16.msra.mxu0 0
        %944 = vmatprep.subr.bf16.mxu0 0
        %945 = vmatpush1.bf16.msra.mxu0 0
        %946 = vmatprep.subr.bf16.mxu0 0
        %947 = vmatpush1.bf16.msra.mxu0 0
        %948 = vmatprep.subr.bf16.mxu0 0
        %949 = vmatpush1.bf16.msra.mxu0 0
        %950 = vmatprep.subr.bf16.mxu0 0
        %951 = vmatpush1.bf16.msra.mxu0 0
        %952 = vmatprep.subr.bf16.mxu0 0
        %953 = vmatpush1.bf16.msra.mxu0 0
        %954 = vmatprep.subr.bf16.mxu0 0
        %955 = vmatpush1.bf16.msra.mxu0 0
        %956 = vmatprep.mubr.bf16.mxu0 0
        %957 = vmatmul.mubr.bf16.gmra.mrb[0].mxu0 %v895
        %v958 = vpop.f32.mrb[0].mxu0
        %v959 = vadd.f32 %v481, %v958
        %v960 = vpop.f32.mrb[0].mxu0
        %v961 = vpop.f32.mrb[0].mxu0
        %v962 = vadd.f32 %v486, %v961
        %v963 = vpop.f32.mrb[0].mxu0
        %964 = vmatprep.mubr.bf16.mxu0 0
        %965 = vmatmul.mubr.bf16.gmra.mrb[0].mxu0 %v898
        %v966 = vpop.f32.mrb[0].mxu0
        %v967 = vadd.f32 %v491, %v966
        %v968 = vpop.f32.mrb[0].mxu0
        %v969 = vpop.f32.mrb[0].mxu0
        %v970 = vadd.f32 %v496, %v969
        %v971 = vpop.f32.mrb[0].mxu0
        %972 = vmatprep.mubr.bf16.mxu0 0
        %973 = vmatmul.mubr.bf16.gmra.mrb[0].mxu0 %v901
        %v974 = vpop.f32.mrb[0].mxu0
        %v975 = vadd.f32 %v501, %v974
        %v976 = vpop.f32.mrb[0].mxu0
        %v977 = vpop.f32.mrb[0].mxu0
        %v978 = vadd.f32 %v506, %v977
        %v979 = vpop.f32.mrb[0].mxu0
        %980 = vmatprep.mubr.bf16.mxu0 0
        %981 = vmatmul.mubr.bf16.gmra.mrb[0].mxu0 %v904
        %v982 = vpop.f32.mrb[0].mxu0
        %v983 = vadd.f32 %v511, %v982
        %v984 = vpop.f32.mrb[0].mxu0
        %v985 = vpop.f32.mrb[0].mxu0
        %v986 = vadd.f32 %v516, %v985
        %v987 = vpop.f32.mrb[0].mxu0
        %988 = vmatprep.mubr.bf16.mxu0 0
        %989 = vmatmul.mubr.bf16.gmra.mrb[0].mxu0 %v907
        %v990 = vpop.f32.mrb[0].mxu0
        %v991 = vadd.f32 %v521, %v990
        %v992 = vpop.f32.mrb[0].mxu0
        %v993 = vpop.f32.mrb[0].mxu0
        %v994 = vadd.f32 %v526, %v993
        %v995 = vpop.f32.mrb[0].mxu0
        %996 = vmatprep.mubr.bf16.mxu0 0
        %997 = vmatmul.mubr.bf16.gmra.mrb[0].mxu0 %v910
        %v998 = vpop.f32.mrb[0].mxu0
        %v999 = vadd.f32 %v531, %v998
        %v1000 = vpop.f32.mrb[0].mxu0
        %v1001 = vpop.f32.mrb[0].mxu0
        %v1002 = vadd.f32 %v536, %v1001
        %v1003 = vpop.f32.mrb[0].mxu0
        %1004 = vmatprep.mubr.bf16.mxu0 0
        %1005 = vmatmul.mubr.bf16.gmra.mrb[0].mxu0 %v913
        %v1006 = vpop.f32.mrb[0].mxu0
        %v1007 = vadd.f32 %v541, %v1006
        %v1008 = vpop.f32.mrb[0].mxu0
        %v1009 = vpop.f32.mrb[0].mxu0
        %v1010 = vadd.f32 %v546, %v1009
        %v1011 = vpop.f32.mrb[0].mxu0
        %1012 = vmatprep.mubr.bf16.mxu0 0
        %1013 = vmatmul.mubr.bf16.gmra.mrb[0].mxu0 %v916
        %v1014 = vpop.f32.mrb[0].mxu0
        %v1015 = vadd.f32 %v551, %v1014
        %v1016 = vpop.f32.mrb[0].mxu0
        %v1017 = vpop.f32.mrb[0].mxu0
        %v1018 = vadd.f32 %v556, %v1017
        %v1019 = vpop.f32.mrb[0].mxu0
        %1020 = vmatprep.mubr.bf16.mxu0 0
        %1021 = vmatmul.mubr.bf16.gmra.mrb[0].mxu0 %v919
        %v1022 = vpop.f32.mrb[0].mxu0
        %v1023 = vadd.f32 %v561, %v1022
        %v1024 = vpop.f32.mrb[0].mxu0
        %v1025 = vpop.f32.mrb[0].mxu0
        %v1026 = vadd.f32 %v566, %v1025
        %v1027 = vpop.f32.mrb[0].mxu0
        %1028 = vmatprep.mubr.bf16.mxu0 0
        %1029 = vmatmul.mubr.bf16.gmra.mrb[0].mxu0 %v922
        %v1030 = vpop.f32.mrb[0].mxu0
        %v1031 = vadd.f32 %v571, %v1030
        %v1032 = vpop.f32.mrb[0].mxu0
        %v1033 = vpop.f32.mrb[0].mxu0
        %v1034 = vadd.f32 %v576, %v1033
        %v1035 = vpop.f32.mrb[0].mxu0
        %1036 = vdwg.mxu0
        %v1037 = vxor.u32 %v959, 2147483648
        %v1038 = vxor.u32 %v962, 2147483648
        %v1039 = vxor.u32 %v967, 2147483648
        %v1040 = vxor.u32 %v970, 2147483648
        %v1041 = vmul.f32 %v1037, 1.442695
        %v1042 = vpow.pop %v1041
        %v1043 = vmul.f32 %v1038, 1.442695
        %v1044 = vpow.pop %v1043
        %v1045 = vmul.f32 %v1039, 1.442695
        %v1046 = vpow.pop %v1045
        %v1047 = vmul.f32 %v1040, 1.442695
        %v1048 = vpow.pop %v1047
        %v1049 = vadd.f32 %v1042, 1.0
        %v1050 = vadd.f32 %v1044, 1.0
        %v1051 = vadd.f32 %v1046, 1.0
        %v1052 = vadd.f32 %v1048, 1.0
        %v1053 = vrcp.pop %v1049
        %v1054 = vmul.f32 1.0, %v1053
        %v1055 = vrcp.pop %v1050
        %v1056 = vmul.f32 1.0, %v1055
        %v1057 = vrcp.pop %v1051
        %v1058 = vmul.f32 1.0, %v1057
        %v1059 = vrcp.pop %v1052
        %v1060 = vmul.f32 1.0, %v1059
        %v1061 = vxor.u32 %v975, 2147483648
        %v1062 = vxor.u32 %v978, 2147483648
        %v1063 = vxor.u32 %v983, 2147483648
        %v1064 = vxor.u32 %v986, 2147483648
        %v1065 = vmul.f32 %v1061, 1.442695
        %v1066 = vpow.pop %v1065
        %v1067 = vmul.f32 %v1062, 1.442695
        %v1068 = vpow.pop %v1067
        %v1069 = vmul.f32 %v1063, 1.442695
        %v1070 = vpow.pop %v1069
        %v1071 = vmul.f32 %v1064, 1.442695
        %v1072 = vpow.pop %v1071
        %v1073 = vadd.f32 %v1066, 1.0
        %v1074 = vadd.f32 %v1068, 1.0
        %v1075 = vadd.f32 %v1070, 1.0
        %v1076 = vadd.f32 %v1072, 1.0
        %v1077 = vrcp.pop %v1073
        %v1078 = vmul.f32 1.0, %v1077
        %v1079 = vrcp.pop %v1074
        %v1080 = vmul.f32 1.0, %v1079
        %v1081 = vrcp.pop %v1075
        %v1082 = vmul.f32 1.0, %v1081
        %v1083 = vrcp.pop %v1076
        %v1084 = vmul.f32 1.0, %v1083
        %v1085 = vadd.f32 %v991, %v725
        %v1086 = vadd.f32 %v994, %v726
        %v1087 = vadd.f32 %v999, %v727
        %v1088 = vadd.f32 %v1002, %v728
        %v1089 = vadd.f32 %v1007, %v729
        %v1090 = vadd.f32 %v1010, %v730
        %v1091 = vadd.f32 %v1015, %v731
        %v1092 = vadd.f32 %v1018, %v732
        %v1093 = vadd.f32 %v1023, %v733
        %v1094 = vadd.f32 %v1026, %v734
        %v1095 = vadd.f32 %v1031, %v735
        %v1096 = vadd.f32 %v1034, %v736
        %v1097 = vxor.u32 %v1085, 2147483648
        %v1098 = vxor.u32 %v1086, 2147483648
        %v1099 = vxor.u32 %v1087, 2147483648
        %v1100 = vxor.u32 %v1088, 2147483648
        %v1101 = vmul.f32 %v1097, 1.442695
        %v1102 = vpow.pop %v1101
        %v1103 = vmul.f32 %v1098, 1.442695
        %v1104 = vpow.pop %v1103
        %v1105 = vmul.f32 %v1099, 1.442695
        %v1106 = vpow.pop %v1105
        %v1107 = vmul.f32 %v1100, 1.442695
        %v1108 = vpow.pop %v1107
        %v1109 = vadd.f32 %v1102, 1.0
        %v1110 = vadd.f32 %v1104, 1.0
        %v1111 = vadd.f32 %v1106, 1.0
        %v1112 = vadd.f32 %v1108, 1.0
        %v1113 = vrcp.pop %v1109
        %v1114 = vmul.f32 1.0, %v1113
        %v1115 = vrcp.pop %v1110
        %v1116 = vmul.f32 1.0, %v1115
        %v1117 = vrcp.pop %v1111
        %v1118 = vmul.f32 1.0, %v1117
        %v1119 = vrcp.pop %v1112
        %v1120 = vmul.f32 1.0, %v1119
        %v1121 = vmax.f32 %v1089, 0.0
        %v1122 = vmax.f32 %v1090, 0.0
        %v1123 = vmax.f32 %v1091, 0.0
        %v1124 = vmax.f32 %v1092, 0.0
        %v1125 = vmul.f32 %v1114, %v1121
        %v1126 = vmul.f32 %v1116, %v1122
        %v1127 = vmul.f32 %v1118, %v1123
        %v1128 = vmul.f32 %v1120, %v1124
        %v1129 = vmul.f32 %v1054, %v816
        %v1130 = vmul.f32 %v1056, %v817
        %v1131 = vmul.f32 %v1058, %v818
        %v1132 = vmul.f32 %v1060, %v819
        %v1133 = vadd.f32 %v1125, %v1129
        %v1134 = vadd.f32 %v1126, %v1130
        %v1135 = vadd.f32 %v1127, %v1131
        %v1136 = vadd.f32 %v1128, %v1132
        %v1137 = vmul.f32 %v1078, %v831
        %v1138 = vmul.f32 %v1080, %v832
        %v1139 = vmul.f32 %v1082, %v833
        %v1140 = vmul.f32 %v1084, %v834
        %v1141 = vadd.f32 %v1133, %v1137
        %v1142 = vadd.f32 %v1134, %v1138
        %v1143 = vadd.f32 %v1135, %v1139
        %v1144 = vadd.f32 %v1136, %v1140
        %v1145 = vxor.u32 %v1093, 2147483648
        %v1146 = vxor.u32 %v1094, 2147483648
        %v1147 = vxor.u32 %v1095, 2147483648
        %v1148 = vxor.u32 %v1096, 2147483648
        %v1149 = vmul.f32 %v1145, 1.442695
        %v1150 = vpow.pop %v1149
        %v1151 = vmul.f32 %v1146, 1.442695
        %v1152 = vpow.pop %v1151
        %v1153 = vmul.f32 %v1147, 1.442695
        %v1154 = vpow.pop %v1153
        %v1155 = vmul.f32 %v1148, 1.442695
        %v1156 = vpow.pop %v1155
        %v1157 = vadd.f32 %v1150, 1.0
        %v1158 = vadd.f32 %v1152, 1.0
        %v1159 = vadd.f32 %v1154, 1.0
        %v1160 = vadd.f32 %v1156, 1.0
        %v1161 = vrcp.pop %v1157
        %v1162 = vmul.f32 1.0, %v1161
        %v1163 = vrcp.pop %v1158
        %v1164 = vmul.f32 1.0, %v1163
        %v1165 = vrcp.pop %v1159
        %v1166 = vmul.f32 1.0, %v1165
        %v1167 = vrcp.pop %v1160
        %v1168 = vmul.f32 1.0, %v1167
        %v1169 = vmax.f32 %v1141, 0.0
        %v1170 = vmax.f32 %v1142, 0.0
        %v1171 = vmax.f32 %v1143, 0.0
        %v1172 = vmax.f32 %v1144, 0.0
        %v1173 = vmul.f32 %v1162, %v1169
        %v1174 = vmul.f32 %v1164, %v1170
        %v1175 = vmul.f32 %v1166, %v1171
        %v1176 = vmul.f32 %v1168, %v1172
        %vm1177 = vcmp.lt.s32.totalorder %v310, 0
        %v1178 = vsel %vm1177, 1, 0
        %v1179 = vlaneseq
        %v1180 = vshrl.u32 %v1179, 7
        %v1181 = vsub.s32 1, %v1180
        %v1182 = vrot.slane %v1178, %v1181
        %vm1183 = vcmp.eq.s32.totalorder %v1182, 1
        %v1184 = vsel %vm1183, %v765, %v1141
        %v1185 = vsel %vm1183, %v766, %v1142
        %v1186 = vsel %vm1183, %v767, %v1143
        %v1187 = vsel %vm1183, %v768, %v1144
        %v1188 = vsel %vm1183, %v797, %v1173
        %v1189 = vsel %vm1183, %v798, %v1174
        %v1190 = vsel %vm1183, %v799, %v1175
        %v1191 = vsel %vm1183, %v800, %v1176
        %s1192 = scalar_lea.vmem [#allocation2], 64
        %1193 = vst [vmem:[%s1192] sm:$0xff] %v1184
        %1194 = vst [vmem:[%s1192 + $0x8] sm:$0xff] %v1185
        %1195 = vst [vmem:[%s1192 + $0x10] sm:$0xff] %v1186
        %1196 = vst [vmem:[%s1192 + $0x18] sm:$0xff] %v1187
        %1197 = vst [vmem:[%s1192 + $0x20] sm:$0xff] %v1188
        %1198 = vst [vmem:[%s1192 + $0x28] sm:$0xff] %v1189
        %1199 = vst [vmem:[%s1192 + $0x30] sm:$0xff] %v1190
        %1200 = vst [vmem:[%s1192 + $0x38] sm:$0xff] %v1191
        %vm1201 = vcmp.eq.s32.totalorder %v312, 1
        %v1202 = vsel %vm1201, 1, 0
        %v1203 = vlaneseq
        %v1204 = vshrl.u32 %v1203, 7
        %v1205 = vsub.s32 0, %v1204
        %v1206 = vrot.slane %v1202, %v1205
        %vm1207 = vcmp.eq.s32.totalorder %v1206, 1
        %v1208 = vsel %vm1207, %v1188, %v705
        %v1209 = vsel %vm1207, %v1189, %v706
        %v1210 = vsel %vm1207, %v1190, %v707
        %v1211 = vsel %vm1207, %v1191, %v708
        %v1212 = vlaneseq
        %v1213 = vshrl.u32 %v1212, 7
        %v1214 = vsub.s32 2, %v1213
        %v1215 = vrot.slane %v313, %v1214
        %v1216 = vmul.f32 %v329, %v1215
        %v1217 = vmul.f32 %v334, %v1215
        %v1218 = vmul.f32 %v339, %v1215
        %v1219 = vmul.f32 %v344, %v1215
        %v1220 = vmul.f32 %v349, %v1215
        %v1221 = vmul.f32 %v354, %v1215
        %v1222 = vmul.f32 %v359, %v1215
        %v1223 = vmul.f32 %v364, %v1215
        %v1224 = vmul.f32 %v369, %v1215
        %v1225 = vmul.f32 %v374, %v1215
        %v1226 = vmul.f32 %v379, %v1215
        %v1227 = vmul.f32 %v384, %v1215
        %v1228 = vadd.f32 %v1216, %v401
        %v1229 = vadd.f32 %v1217, %v406
        %v1230 = vadd.f32 %v1218, %v411
        %v1231 = vadd.f32 %v1219, %v416
        %v1232 = vadd.f32 %v1220, %v421
        %v1233 = vadd.f32 %v1221, %v426
        %v1234 = vadd.f32 %v1222, %v431
        %v1235 = vadd.f32 %v1223, %v436
        %v1236 = vadd.f32 %v1224, %v441
        %v1237 = vadd.f32 %v1225, %v446
        %v1238 = vadd.f32 %v1226, %v451
        %v1239 = vadd.f32 %v1227, %v456
        %v1240 = vxor.u32 %v1228, 2147483648
        %v1241 = vxor.u32 %v1229, 2147483648
        %v1242 = vxor.u32 %v1230, 2147483648
        %v1243 = vxor.u32 %v1231, 2147483648
        %v1244 = vmul.f32 %v1240, 1.442695
        %v1245 = vpow.pop %v1244
        %v1246 = vmul.f32 %v1241, 1.442695
        %v1247 = vpow.pop %v1246
        %v1248 = vmul.f32 %v1242, 1.442695
        %v1249 = vpow.pop %v1248
        %v1250 = vmul.f32 %v1243, 1.442695
        %v1251 = vpow.pop %v1250
        %v1252 = vadd.f32 %v1245, 1.0
        %v1253 = vadd.f32 %v1247, 1.0
        %v1254 = vadd.f32 %v1249, 1.0
        %v1255 = vadd.f32 %v1251, 1.0
        %v1256 = vrcp.pop %v1252
        %v1257 = vmul.f32 1.0, %v1256
        %v1258 = vrcp.pop %v1253
        %v1259 = vmul.f32 1.0, %v1258
        %v1260 = vrcp.pop %v1254
        %v1261 = vmul.f32 1.0, %v1260
        %v1262 = vrcp.pop %v1255
        %v1263 = vmul.f32 1.0, %v1262
        %v1264 = vmax.f32 %v1232, 0.0
        %v1265 = vmax.f32 %v1233, 0.0
        %v1266 = vmax.f32 %v1234, 0.0
        %v1267 = vmax.f32 %v1235, 0.0
        %v1268 = vmul.f32 %v1257, %v1264
        %v1269 = vmul.f32 %v1259, %v1265
        %v1270 = vmul.f32 %v1261, %v1266
        %v1271 = vmul.f32 %v1263, %v1267
        %v1272 = vxor.u32 %v1236, 2147483648
        %v1273 = vxor.u32 %v1237, 2147483648
        %v1274 = vxor.u32 %v1238, 2147483648
        %v1275 = vxor.u32 %v1239, 2147483648
        %v1276 = vmul.f32 %v1272, 1.442695
        %v1277 = vpow.pop %v1276
        %v1278 = vmul.f32 %v1273, 1.442695
        %v1279 = vpow.pop %v1278
        %v1280 = vmul.f32 %v1274, 1.442695
        %v1281 = vpow.pop %v1280
        %v1282 = vmul.f32 %v1275, 1.442695
        %v1283 = vpow.pop %v1282
        %v1284 = vadd.f32 %v1277, 1.0
        %v1285 = vadd.f32 %v1279, 1.0
        %v1286 = vadd.f32 %v1281, 1.0
        %v1287 = vadd.f32 %v1283, 1.0
        %v1288 = vrcp.pop %v1284
        %v1289 = vmul.f32 1.0, %v1288
        %v1290 = vrcp.pop %v1285
        %v1291 = vmul.f32 1.0, %v1290
        %v1292 = vrcp.pop %v1286
        %v1293 = vmul.f32 1.0, %v1292
        %v1294 = vrcp.pop %v1287
        %v1295 = vmul.f32 1.0, %v1294
        %v1296 = vmax.f32 %v1268, 0.0
        %v1297 = vmax.f32 %v1269, 0.0
        %v1298 = vmax.f32 %v1270, 0.0
        %v1299 = vmax.f32 %v1271, 0.0
        %v1300 = vmul.f32 %v1289, %v1296
        %v1301 = vmul.f32 %v1291, %v1297
        %v1302 = vmul.f32 %v1293, %v1298
        %v1303 = vmul.f32 %v1295, %v1299
        %v1304 = vld [vmem:[#allocation2] sm:$0xff]
        %v1305 = vld [vmem:[#allocation2 + $0x8] sm:$0xff]
        %v1306 = vld [vmem:[#allocation2 + $0x10] sm:$0xff]
        %v1307 = vld [vmem:[#allocation2 + $0x18] sm:$0xff]
        %v1308 = vld [vmem:[#allocation2 + $0x20] sm:$0xff]
        %v1309 = vld [vmem:[#allocation2 + $0x28] sm:$0xff]
        %v1310 = vld [vmem:[#allocation2 + $0x30] sm:$0xff]
        %v1311 = vld [vmem:[#allocation2 + $0x38] sm:$0xff]
        %v1312 = vlaneseq
        %v1313 = vshrl.u32 %v1312, 7
        %v1314 = vsub.s32 2, %v1313
        %v1315 = vrot.slane %v810, %v1314
        %vm1316 = vcmp.eq.s32.totalorder %v1315, 1
        %v1317 = vsel %vm1316, %v1304, 0.0
        %v1318 = vsel %vm1316, %v1305, 0.0
        %v1319 = vsel %vm1316, %v1306, 0.0
        %v1320 = vsel %vm1316, %v1307, 0.0
        %v1321 = vsel %vm1316, %v1308, 0.0
        %v1322 = vsel %vm1316, %v1309, 0.0
        %v1323 = vsel %vm1316, %v1310, 0.0
        %v1324 = vsel %vm1316, %v1311, 0.0
        %v1325 = vlaneseq
        %v1326 = vshrl.u32 %v1325, 7
        %v1327 = vsub.s32 2, %v1326
        %v1328 = vrot.slane %v825, %v1327
        %vm1329 = vcmp.eq.s32.totalorder %v1328, 1
        %v1330 = vsel %vm1329, %v1304, 0.0
        %v1331 = vsel %vm1329, %v1305, 0.0
        %v1332 = vsel %vm1329, %v1306, 0.0
        %v1333 = vsel %vm1329, %v1307, 0.0
        %v1334 = vsel %vm1329, %v1308, 0.0
        %v1335 = vsel %vm1329, %v1309, 0.0
        %v1336 = vsel %vm1329, %v1310, 0.0
        %v1337 = vsel %vm1329, %v1311, 0.0
        %v1338 = vld [vmem:[%s1192] sm:$0xff]
        %v1339 = vld [vmem:[%s1192 + $0x8] sm:$0xff]
        %v1340 = vld [vmem:[%s1192 + $0x10] sm:$0xff]
        %v1341 = vld [vmem:[%s1192 + $0x18] sm:$0xff]
        %v1342 = vld [vmem:[%s1192 + $0x20] sm:$0xff]
        %v1343 = vld [vmem:[%s1192 + $0x28] sm:$0xff]
        %v1344 = vld [vmem:[%s1192 + $0x30] sm:$0xff]
        %v1345 = vld [vmem:[%s1192 + $0x38] sm:$0xff]
        %vm1346 = vcmp.eq.s32.totalorder %v310, 1
        %v1347 = vsel %vm1346, 1, 0
        %v1348 = vlaneseq
        %v1349 = vshrl.u32 %v1348, 7
        %v1350 = vsub.s32 2, %v1349
        %v1351 = vrot.slane %v1347, %v1350
        %vm1352 = vcmp.eq.s32.totalorder %v1351, 1
        %v1353 = vsel %vm1352, %v1338, %v1317
        %v1354 = vsel %vm1352, %v1339, %v1318
        %v1355 = vsel %vm1352, %v1340, %v1319
        %v1356 = vsel %vm1352, %v1341, %v1320
        %v1357 = vsel %vm1352, %v1342, %v1321
        %v1358 = vsel %vm1352, %v1343, %v1322
        %v1359 = vsel %vm1352, %v1344, %v1323
        %v1360 = vsel %vm1352, %v1345, %v1324
        %vm1361 = vcmp.eq.s32.totalorder %v311, 1
        %v1362 = vsel %vm1361, 1, 0
        %v1363 = vlaneseq
        %v1364 = vshrl.u32 %v1363, 7
        %v1365 = vsub.s32 2, %v1364
        %v1366 = vrot.slane %v1362, %v1365
        %vm1367 = vcmp.eq.s32.totalorder %v1366, 1
        %v1368 = vsel %vm1367, %v1338, %v1330
        %v1369 = vsel %vm1367, %v1339, %v1331
        %v1370 = vsel %vm1367, %v1340, %v1332
        %v1371 = vsel %vm1367, %v1341, %v1333
        %v1372 = vsel %vm1367, %v1342, %v1334
        %v1373 = vsel %vm1367, %v1343, %v1335
        %v1374 = vsel %vm1367, %v1344, %v1336
        %v1375 = vsel %vm1367, %v1345, %v1337
        %v1376 = vpack.c.bf16 %v1358, %v1357
        %v1377 = vpack.c.bf16 %v1360, %v1359
        %v1378 = vpack.c.bf16 %v1373, %v1372
        %v1379 = vpack.c.bf16 %v1375, %v1374
        %1380 = vmatprep.subr.bf16.mxu0 0
        %1381 = vmatpush1.bf16.msra.mxu0 %v1376
        %1382 = vmatprep.subr.bf16.mxu0 0
        %1383 = vmatpush1.bf16.msra.mxu0 %v1377
        %1384 = vmatprep.subr.bf16.mxu0 0
        %1385 = vmatpush1.bf16.msra.mxu0 %v1378
        %1386 = vmatprep.subr.bf16.mxu0 0
        %1387 = vmatpush1.bf16.msra.mxu0 %v1379
        %1388 = vmatprep.subr.bf16.mxu0 0
        %1389 = vmatpush1.bf16.msra.mxu0 0
        %1390 = vmatprep.subr.bf16.mxu0 0
        %1391 = vmatpush1.bf16.msra.mxu0 0
        %1392 = vmatprep.subr.bf16.mxu0 0
        %1393 = vmatpush1.bf16.msra.mxu0 0
        %1394 = vmatprep.subr.bf16.mxu0 0
        %1395 = vmatpush1.bf16.msra.mxu0 0
        %1396 = vmatprep.subr.bf16.mxu0 0
        %1397 = vmatpush1.bf16.msra.mxu0 0
        %1398 = vmatprep.subr.bf16.mxu0 0
        %1399 = vmatpush1.bf16.msra.mxu0 0
        %1400 = vmatprep.subr.bf16.mxu0 0
        %1401 = vmatpush1.bf16.msra.mxu0 0
        %1402 = vmatprep.subr.bf16.mxu0 0
        %1403 = vmatpush1.bf16.msra.mxu0 0
        %1404 = vmatprep.subr.bf16.mxu0 0
        %1405 = vmatpush1.bf16.msra.mxu0 0
        %1406 = vmatprep.subr.bf16.mxu0 0
        %1407 = vmatpush1.bf16.msra.mxu0 0
        %1408 = vmatprep.subr.bf16.mxu0 0
        %1409 = vmatpush1.bf16.msra.mxu0 0
        %1410 = vmatprep.subr.bf16.mxu0 0
        %1411 = vmatpush1.bf16.msra.mxu0 0
        %1412 = vmatprep.mubr.bf16.mxu0 0
        %1413 = vmatmul.mubr.bf16.gmra.mrb[0].mxu0 %v895
        %v1414 = vpop.f32.mrb[0].mxu0
        %v1415 = vadd.f32 %v481, %v1414
        %v1416 = vpop.f32.mrb[0].mxu0
        %v1417 = vpop.f32.mrb[0].mxu0
        %v1418 = vadd.f32 %v486, %v1417
        %v1419 = vpop.f32.mrb[0].mxu0
        %1420 = vmatprep.mubr.bf16.mxu0 0
        %1421 = vmatmul.mubr.bf16.gmra.mrb[0].mxu0 %v898
        %v1422 = vpop.f32.mrb[0].mxu0
        %v1423 = vadd.f32 %v491, %v1422
        %v1424 = vpop.f32.mrb[0].mxu0
        %v1425 = vpop.f32.mrb[0].mxu0
        %v1426 = vadd.f32 %v496, %v1425
        %v1427 = vpop.f32.mrb[0].mxu0
        %1428 = vmatprep.mubr.bf16.mxu0 0
        %1429 = vmatmul.mubr.bf16.gmra.mrb[0].mxu0 %v901
        %v1430 = vpop.f32.mrb[0].mxu0
        %v1431 = vadd.f32 %v501, %v1430
        %v1432 = vpop.f32.mrb[0].mxu0
        %v1433 = vpop.f32.mrb[0].mxu0
        %v1434 = vadd.f32 %v506, %v1433
        %v1435 = vpop.f32.mrb[0].mxu0
        %1436 = vmatprep.mubr.bf16.mxu0 0
        %1437 = vmatmul.mubr.bf16.gmra.mrb[0].mxu0 %v904
        %v1438 = vpop.f32.mrb[0].mxu0
        %v1439 = vadd.f32 %v511, %v1438
        %v1440 = vpop.f32.mrb[0].mxu0
        %v1441 = vpop.f32.mrb[0].mxu0
        %v1442 = vadd.f32 %v516, %v1441
        %v1443 = vpop.f32.mrb[0].mxu0
        %1444 = vmatprep.mubr.bf16.mxu0 0
        %1445 = vmatmul.mubr.bf16.gmra.mrb[0].mxu0 %v907
        %v1446 = vpop.f32.mrb[0].mxu0
        %v1447 = vadd.f32 %v521, %v1446
        %v1448 = vpop.f32.mrb[0].mxu0
        %v1449 = vpop.f32.mrb[0].mxu0
        %v1450 = vadd.f32 %v526, %v1449
        %v1451 = vpop.f32.mrb[0].mxu0
        %1452 = vmatprep.mubr.bf16.mxu0 0
        %1453 = vmatmul.mubr.bf16.gmra.mrb[0].mxu0 %v910
        %v1454 = vpop.f32.mrb[0].mxu0
        %v1455 = vadd.f32 %v531, %v1454
        %v1456 = vpop.f32.mrb[0].mxu0
        %v1457 = vpop.f32.mrb[0].mxu0
        %v1458 = vadd.f32 %v536, %v1457
        %v1459 = vpop.f32.mrb[0].mxu0
        %1460 = vmatprep.mubr.bf16.mxu0 0
        %1461 = vmatmul.mubr.bf16.gmra.mrb[0].mxu0 %v913
        %v1462 = vpop.f32.mrb[0].mxu0
        %v1463 = vadd.f32 %v541, %v1462
        %v1464 = vpop.f32.mrb[0].mxu0
        %v1465 = vpop.f32.mrb[0].mxu0
        %v1466 = vadd.f32 %v546, %v1465
        %v1467 = vpop.f32.mrb[0].mxu0
        %1468 = vmatprep.mubr.bf16.mxu0 0
        %1469 = vmatmul.mubr.bf16.gmra.mrb[0].mxu0 %v916
        %v1470 = vpop.f32.mrb[0].mxu0
        %v1471 = vadd.f32 %v551, %v1470
        %v1472 = vpop.f32.mrb[0].mxu0
        %v1473 = vpop.f32.mrb[0].mxu0
        %v1474 = vadd.f32 %v556, %v1473
        %v1475 = vpop.f32.mrb[0].mxu0
        %1476 = vmatprep.mubr.bf16.mxu0 0
        %1477 = vmatmul.mubr.bf16.gmra.mrb[0].mxu0 %v919
        %v1478 = vpop.f32.mrb[0].mxu0
        %v1479 = vadd.f32 %v561, %v1478
        %v1480 = vpop.f32.mrb[0].mxu0
        %v1481 = vpop.f32.mrb[0].mxu0
        %v1482 = vadd.f32 %v566, %v1481
        %v1483 = vpop.f32.mrb[0].mxu0
        %1484 = vmatprep.mubr.bf16.mxu0 0
        %1485 = vmatmul.mubr.bf16.gmra.mrb[0].mxu0 %v922
        %v1486 = vpop.f32.mrb[0].mxu0
        %v1487 = vadd.f32 %v571, %v1486
        %v1488 = vpop.f32.mrb[0].mxu0
        %v1489 = vpop.f32.mrb[0].mxu0
        %v1490 = vadd.f32 %v576, %v1489
        %v1491 = vpop.f32.mrb[0].mxu0
        %1492 = vdwg.mxu0
        %v1493 = vxor.u32 %v1415, 2147483648
        %v1494 = vxor.u32 %v1418, 2147483648
        %v1495 = vxor.u32 %v1423, 2147483648
        %v1496 = vxor.u32 %v1426, 2147483648
        %v1497 = vmul.f32 %v1493, 1.442695
        %v1498 = vpow.pop %v1497
        %v1499 = vmul.f32 %v1494, 1.442695
        %v1500 = vpow.pop %v1499
        %v1501 = vmul.f32 %v1495, 1.442695
        %v1502 = vpow.pop %v1501
        %v1503 = vmul.f32 %v1496, 1.442695
        %v1504 = vpow.pop %v1503
        %v1505 = vadd.f32 %v1498, 1.0
        %v1506 = vadd.f32 %v1500, 1.0
        %v1507 = vadd.f32 %v1502, 1.0
        %v1508 = vadd.f32 %v1504, 1.0
        %v1509 = vrcp.pop %v1505
        %v1510 = vmul.f32 1.0, %v1509
        %v1511 = vrcp.pop %v1506
        %v1512 = vmul.f32 1.0, %v1511
        %v1513 = vrcp.pop %v1507
        %v1514 = vmul.f32 1.0, %v1513
        %v1515 = vrcp.pop %v1508
        %v1516 = vmul.f32 1.0, %v1515
        %v1517 = vxor.u32 %v1431, 2147483648
        %v1518 = vxor.u32 %v1434, 2147483648
        %v1519 = vxor.u32 %v1439, 2147483648
        %v1520 = vxor.u32 %v1442, 2147483648
        %v1521 = vmul.f32 %v1517, 1.442695
        %v1522 = vpow.pop %v1521
        %v1523 = vmul.f32 %v1518, 1.442695
        %v1524 = vpow.pop %v1523
        %v1525 = vmul.f32 %v1519, 1.442695
        %v1526 = vpow.pop %v1525
        %v1527 = vmul.f32 %v1520, 1.442695
        %v1528 = vpow.pop %v1527
        %v1529 = vadd.f32 %v1522, 1.0
        %v1530 = vadd.f32 %v1524, 1.0
        %v1531 = vadd.f32 %v1526, 1.0
        %v1532 = vadd.f32 %v1528, 1.0
        %v1533 = vrcp.pop %v1529
        %v1534 = vmul.f32 1.0, %v1533
        %v1535 = vrcp.pop %v1530
        %v1536 = vmul.f32 1.0, %v1535
        %v1537 = vrcp.pop %v1531
        %v1538 = vmul.f32 1.0, %v1537
        %v1539 = vrcp.pop %v1532
        %v1540 = vmul.f32 1.0, %v1539
        %v1541 = vadd.f32 %v1447, %v1228
        %v1542 = vadd.f32 %v1450, %v1229
        %v1543 = vadd.f32 %v1455, %v1230
        %v1544 = vadd.f32 %v1458, %v1231
        %v1545 = vadd.f32 %v1463, %v1232
        %v1546 = vadd.f32 %v1466, %v1233
        %v1547 = vadd.f32 %v1471, %v1234
        %v1548 = vadd.f32 %v1474, %v1235
        %v1549 = vadd.f32 %v1479, %v1236
        %v1550 = vadd.f32 %v1482, %v1237
        %v1551 = vadd.f32 %v1487, %v1238
        %v1552 = vadd.f32 %v1490, %v1239
        %v1553 = vxor.u32 %v1541, 2147483648
        %v1554 = vxor.u32 %v1542, 2147483648
        %v1555 = vxor.u32 %v1543, 2147483648
        %v1556 = vxor.u32 %v1544, 2147483648
        %v1557 = vmul.f32 %v1553, 1.442695
        %v1558 = vpow.pop %v1557
        %v1559 = vmul.f32 %v1554, 1.442695
        %v1560 = vpow.pop %v1559
        %v1561 = vmul.f32 %v1555, 1.442695
        %v1562 = vpow.pop %v1561
        %v1563 = vmul.f32 %v1556, 1.442695
        %v1564 = vpow.pop %v1563
        %v1565 = vadd.f32 %v1558, 1.0
        %v1566 = vadd.f32 %v1560, 1.0
        %v1567 = vadd.f32 %v1562, 1.0
        %v1568 = vadd.f32 %v1564, 1.0
        %v1569 = vrcp.pop %v1565
        %v1570 = vmul.f32 1.0, %v1569
        %v1571 = vrcp.pop %v1566
        %v1572 = vmul.f32 1.0, %v1571
        %v1573 = vrcp.pop %v1567
        %v1574 = vmul.f32 1.0, %v1573
        %v1575 = vrcp.pop %v1568
        %v1576 = vmul.f32 1.0, %v1575
        %v1577 = vmax.f32 %v1545, 0.0
        %v1578 = vmax.f32 %v1546, 0.0
        %v1579 = vmax.f32 %v1547, 0.0
        %v1580 = vmax.f32 %v1548, 0.0
        %v1581 = vmul.f32 %v1570, %v1577
        %v1582 = vmul.f32 %v1572, %v1578
        %v1583 = vmul.f32 %v1574, %v1579
        %v1584 = vmul.f32 %v1576, %v1580
        %v1585 = vmul.f32 %v1510, %v1353
        %v1586 = vmul.f32 %v1512, %v1354
        %v1587 = vmul.f32 %v1514, %v1355
        %v1588 = vmul.f32 %v1516, %v1356
        %v1589 = vadd.f32 %v1581, %v1585
        %v1590 = vadd.f32 %v1582, %v1586
        %v1591 = vadd.f32 %v1583, %v1587
        %v1592 = vadd.f32 %v1584, %v1588
        %v1593 = vmul.f32 %v1534, %v1368
        %v1594 = vmul.f32 %v1536, %v1369
        %v1595 = vmul.f32 %v1538, %v1370
        %v1596 = vmul.f32 %v1540, %v1371
        %v1597 = vadd.f32 %v1589, %v1593
        %v1598 = vadd.f32 %v1590, %v1594
        %v1599 = vadd.f32 %v1591, %v1595
        %v1600 = vadd.f32 %v1592, %v1596
        %v1601 = vxor.u32 %v1549, 2147483648
        %v1602 = vxor.u32 %v1550, 2147483648
        %v1603 = vxor.u32 %v1551, 2147483648
        %v1604 = vxor.u32 %v1552, 2147483648
        %v1605 = vmul.f32 %v1601, 1.442695
        %v1606 = vpow.pop %v1605
        %v1607 = vmul.f32 %v1602, 1.442695
        %v1608 = vpow.pop %v1607
        %v1609 = vmul.f32 %v1603, 1.442695
        %v1610 = vpow.pop %v1609
        %v1611 = vmul.f32 %v1604, 1.442695
        %v1612 = vpow.pop %v1611
        %v1613 = vadd.f32 %v1606, 1.0
        %v1614 = vadd.f32 %v1608, 1.0
        %v1615 = vadd.f32 %v1610, 1.0
        %v1616 = vadd.f32 %v1612, 1.0
        %v1617 = vrcp.pop %v1613
        %v1618 = vmul.f32 1.0, %v1617
        %v1619 = vrcp.pop %v1614
        %v1620 = vmul.f32 1.0, %v1619
        %v1621 = vrcp.pop %v1615
        %v1622 = vmul.f32 1.0, %v1621
        %v1623 = vrcp.pop %v1616
        %v1624 = vmul.f32 1.0, %v1623
        %v1625 = vmax.f32 %v1597, 0.0
        %v1626 = vmax.f32 %v1598, 0.0
        %v1627 = vmax.f32 %v1599, 0.0
        %v1628 = vmax.f32 %v1600, 0.0
        %v1629 = vmul.f32 %v1618, %v1625
        %v1630 = vmul.f32 %v1620, %v1626
        %v1631 = vmul.f32 %v1622, %v1627
        %v1632 = vmul.f32 %v1624, %v1628
        %v1633 = vlaneseq
        %v1634 = vshrl.u32 %v1633, 7
        %v1635 = vsub.s32 2, %v1634
        %v1636 = vrot.slane %v1178, %v1635
        %vm1637 = vcmp.eq.s32.totalorder %v1636, 1
        %v1638 = vsel %vm1637, %v1268, %v1597
        %v1639 = vsel %vm1637, %v1269, %v1598
        %v1640 = vsel %vm1637, %v1270, %v1599
        %v1641 = vsel %vm1637, %v1271, %v1600
        %v1642 = vsel %vm1637, %v1300, %v1629
        %v1643 = vsel %vm1637, %v1301, %v1630
        %v1644 = vsel %vm1637, %v1302, %v1631
        %v1645 = vsel %vm1637, %v1303, %v1632
        %s1646 = scalar_lea.vmem [#allocation2], 128
        %1647 = vst [vmem:[%s1646] sm:$0xff] %v1638
        %1648 = vst [vmem:[%s1646 + $0x8] sm:$0xff] %v1639
        %1649 = vst [vmem:[%s1646 + $0x10] sm:$0xff] %v1640
        %1650 = vst [vmem:[%s1646 + $0x18] sm:$0xff] %v1641
        %1651 = vst [vmem:[%s1646 + $0x20] sm:$0xff] %v1642
        %1652 = vst [vmem:[%s1646 + $0x28] sm:$0xff] %v1643
        %1653 = vst [vmem:[%s1646 + $0x30] sm:$0xff] %v1644
        %1654 = vst [vmem:[%s1646 + $0x38] sm:$0xff] %v1645
        %vm1655 = vcmp.eq.s32.totalorder %v312, 2
        %v1656 = vsel %vm1655, 1, 0
        %v1657 = vlaneseq
        %v1658 = vshrl.u32 %v1657, 7
        %v1659 = vsub.s32 0, %v1658
        %v1660 = vrot.slane %v1656, %v1659
        %vm1661 = vcmp.eq.s32.totalorder %v1660, 1
        %v1662 = vsel %vm1661, %v1642, %v1208
        %v1663 = vsel %vm1661, %v1643, %v1209
        %v1664 = vsel %vm1661, %v1644, %v1210
        %v1665 = vsel %vm1661, %v1645, %v1211
        %v1666 = vlaneseq
        %v1667 = vshrl.u32 %v1666, 7
        %v1668 = vsub.s32 3, %v1667
        %v1669 = vrot.slane %v313, %v1668
        %v1670 = vmul.f32 %v329, %v1669
        %v1671 = vmul.f32 %v334, %v1669
        %v1672 = vmul.f32 %v339, %v1669
        %v1673 = vmul.f32 %v344, %v1669
        %v1674 = vmul.f32 %v349, %v1669
        %v1675 = vmul.f32 %v354, %v1669
        %v1676 = vmul.f32 %v359, %v1669
        %v1677 = vmul.f32 %v364, %v1669
        %v1678 = vmul.f32 %v369, %v1669
        %v1679 = vmul.f32 %v374, %v1669
        %v1680 = vmul.f32 %v379, %v1669
        %v1681 = vmul.f32 %v384, %v1669
        %v1682 = vadd.f32 %v1670, %v401
        %v1683 = vadd.f32 %v1671, %v406
        %v1684 = vadd.f32 %v1672, %v411
        %v1685 = vadd.f32 %v1673, %v416
        %v1686 = vadd.f32 %v1674, %v421
        %v1687 = vadd.f32 %v1675, %v426
        %v1688 = vadd.f32 %v1676, %v431
        %v1689 = vadd.f32 %v1677, %v436
        %v1690 = vadd.f32 %v1678, %v441
        %v1691 = vadd.f32 %v1679, %v446
        %v1692 = vadd.f32 %v1680, %v451
        %v1693 = vadd.f32 %v1681, %v456
        %v1694 = vxor.u32 %v1682, 2147483648
        %v1695 = vxor.u32 %v1683, 2147483648
        %v1696 = vxor.u32 %v1684, 2147483648
        %v1697 = vxor.u32 %v1685, 2147483648
        %v1698 = vmul.f32 %v1694, 1.442695
        %v1699 = vpow.pop %v1698
        %v1700 = vmul.f32 %v1695, 1.442695
        %v1701 = vpow.pop %v1700
        %v1702 = vmul.f32 %v1696, 1.442695
        %v1703 = vpow.pop %v1702
        %v1704 = vmul.f32 %v1697, 1.442695
        %v1705 = vpow.pop %v1704
        %v1706 = vadd.f32 %v1699, 1.0
        %v1707 = vadd.f32 %v1701, 1.0
        %v1708 = vadd.f32 %v1703, 1.0
        %v1709 = vadd.f32 %v1705, 1.0
        %v1710 = vrcp.pop %v1706
        %v1711 = vmul.f32 1.0, %v1710
        %v1712 = vrcp.pop %v1707
        %v1713 = vmul.f32 1.0, %v1712
        %v1714 = vrcp.pop %v1708
        %v1715 = vmul.f32 1.0, %v1714
        %v1716 = vrcp.pop %v1709
        %v1717 = vmul.f32 1.0, %v1716
        %v1718 = vmax.f32 %v1686, 0.0
        %v1719 = vmax.f32 %v1687, 0.0
        %v1720 = vmax.f32 %v1688, 0.0
        %v1721 = vmax.f32 %v1689, 0.0
        %v1722 = vmul.f32 %v1711, %v1718
        %v1723 = vmul.f32 %v1713, %v1719
        %v1724 = vmul.f32 %v1715, %v1720
        %v1725 = vmul.f32 %v1717, %v1721
        %v1726 = vxor.u32 %v1690, 2147483648
        %v1727 = vxor.u32 %v1691, 2147483648
        %v1728 = vxor.u32 %v1692, 2147483648
        %v1729 = vxor.u32 %v1693, 2147483648
        %v1730 = vmul.f32 %v1726, 1.442695
        %v1731 = vpow.pop %v1730
        %v1732 = vmul.f32 %v1727, 1.442695
        %v1733 = vpow.pop %v1732
        %v1734 = vmul.f32 %v1728, 1.442695
        %v1735 = vpow.pop %v1734
        %v1736 = vmul.f32 %v1729, 1.442695
        %v1737 = vpow.pop %v1736
        %v1738 = vadd.f32 %v1731, 1.0
        %v1739 = vadd.f32 %v1733, 1.0
        %v1740 = vadd.f32 %v1735, 1.0
        %v1741 = vadd.f32 %v1737, 1.0
        %v1742 = vrcp.pop %v1738
        %v1743 = vmul.f32 1.0, %v1742
        %v1744 = vrcp.pop %v1739
        %v1745 = vmul.f32 1.0, %v1744
        %v1746 = vrcp.pop %v1740
        %v1747 = vmul.f32 1.0, %v1746
        %v1748 = vrcp.pop %v1741
        %v1749 = vmul.f32 1.0, %v1748
        %v1750 = vmax.f32 %v1722, 0.0
        %v1751 = vmax.f32 %v1723, 0.0
        %v1752 = vmax.f32 %v1724, 0.0
        %v1753 = vmax.f32 %v1725, 0.0
        %v1754 = vmul.f32 %v1743, %v1750
        %v1755 = vmul.f32 %v1745, %v1751
        %v1756 = vmul.f32 %v1747, %v1752
        %v1757 = vmul.f32 %v1749, %v1753
        %v1758 = vld [vmem:[#allocation2] sm:$0xff]
        %v1759 = vld [vmem:[#allocation2 + $0x8] sm:$0xff]
        %v1760 = vld [vmem:[#allocation2 + $0x10] sm:$0xff]
        %v1761 = vld [vmem:[#allocation2 + $0x18] sm:$0xff]
        %v1762 = vld [vmem:[#allocation2 + $0x20] sm:$0xff]
        %v1763 = vld [vmem:[#allocation2 + $0x28] sm:$0xff]
        %v1764 = vld [vmem:[#allocation2 + $0x30] sm:$0xff]
        %v1765 = vld [vmem:[#allocation2 + $0x38] sm:$0xff]
        %v1766 = vlaneseq
        %v1767 = vshrl.u32 %v1766, 7
        %v1768 = vsub.s32 3, %v1767
        %v1769 = vrot.slane %v810, %v1768
        %vm1770 = vcmp.eq.s32.totalorder %v1769, 1
        %v1771 = vsel %vm1770, %v1758, 0.0
        %v1772 = vsel %vm1770, %v1759, 0.0
        %v1773 = vsel %vm1770, %v1760, 0.0
        %v1774 = vsel %vm1770, %v1761, 0.0
        %v1775 = vsel %vm1770, %v1762, 0.0
        %v1776 = vsel %vm1770, %v1763, 0.0
        %v1777 = vsel %vm1770, %v1764, 0.0
        %v1778 = vsel %vm1770, %v1765, 0.0
        %v1779 = vlaneseq
        %v1780 = vshrl.u32 %v1779, 7
        %v1781 = vsub.s32 3, %v1780
        %v1782 = vrot.slane %v825, %v1781
        %vm1783 = vcmp.eq.s32.totalorder %v1782, 1
        %v1784 = vsel %vm1783, %v1758, 0.0
        %v1785 = vsel %vm1783, %v1759, 0.0
        %v1786 = vsel %vm1783, %v1760, 0.0
        %v1787 = vsel %vm1783, %v1761, 0.0
        %v1788 = vsel %vm1783, %v1762, 0.0
        %v1789 = vsel %vm1783, %v1763, 0.0
        %v1790 = vsel %vm1783, %v1764, 0.0
        %v1791 = vsel %vm1783, %v1765, 0.0
        %v1792 = vld [vmem:[%s1192] sm:$0xff]
        %v1793 = vld [vmem:[%s1192 + $0x8] sm:$0xff]
        %v1794 = vld [vmem:[%s1192 + $0x10] sm:$0xff]
        %v1795 = vld [vmem:[%s1192 + $0x18] sm:$0xff]
        %v1796 = vld [vmem:[%s1192 + $0x20] sm:$0xff]
        %v1797 = vld [vmem:[%s1192 + $0x28] sm:$0xff]
        %v1798 = vld [vmem:[%s1192 + $0x30] sm:$0xff]
        %v1799 = vld [vmem:[%s1192 + $0x38] sm:$0xff]
        %v1800 = vlaneseq
        %v1801 = vshrl.u32 %v1800, 7
        %v1802 = vsub.s32 3, %v1801
        %v1803 = vrot.slane %v1347, %v1802
        %vm1804 = vcmp.eq.s32.totalorder %v1803, 1
        %v1805 = vsel %vm1804, %v1792, %v1771
        %v1806 = vsel %vm1804, %v1793, %v1772
        %v1807 = vsel %vm1804, %v1794, %v1773
        %v1808 = vsel %vm1804, %v1795, %v1774
        %v1809 = vsel %vm1804, %v1796, %v1775
        %v1810 = vsel %vm1804, %v1797, %v1776
        %v1811 = vsel %vm1804, %v1798, %v1777
        %v1812 = vsel %vm1804, %v1799, %v1778
        %v1813 = vlaneseq
        %v1814 = vshrl.u32 %v1813, 7
        %v1815 = vsub.s32 3, %v1814
        %v1816 = vrot.slane %v1362, %v1815
        %vm1817 = vcmp.eq.s32.totalorder %v1816, 1
        %v1818 = vsel %vm1817, %v1792, %v1784
        %v1819 = vsel %vm1817, %v1793, %v1785
        %v1820 = vsel %vm1817, %v1794, %v1786
        %v1821 = vsel %vm1817, %v1795, %v1787
        %v1822 = vsel %vm1817, %v1796, %v1788
        %v1823 = vsel %vm1817, %v1797, %v1789
        %v1824 = vsel %vm1817, %v1798, %v1790
        %v1825 = vsel %vm1817, %v1799, %v1791
        %v1826 = vld [vmem:[%s1646] sm:$0xff]
        %v1827 = vld [vmem:[%s1646 + $0x8] sm:$0xff]
        %v1828 = vld [vmem:[%s1646 + $0x10] sm:$0xff]
        %v1829 = vld [vmem:[%s1646 + $0x18] sm:$0xff]
        %v1830 = vld [vmem:[%s1646 + $0x20] sm:$0xff]
        %v1831 = vld [vmem:[%s1646 + $0x28] sm:$0xff]
        %v1832 = vld [vmem:[%s1646 + $0x30] sm:$0xff]
        %v1833 = vld [vmem:[%s1646 + $0x38] sm:$0xff]
        %vm1834 = vcmp.eq.s32.totalorder %v310, 2
        %v1835 = vsel %vm1834, 1, 0
        %v1836 = vlaneseq
        %v1837 = vshrl.u32 %v1836, 7
        %v1838 = vsub.s32 3, %v1837
        %v1839 = vrot.slane %v1835, %v1838
        %vm1840 = vcmp.eq.s32.totalorder %v1839, 1
        %v1841 = vsel %vm1840, %v1826, %v1805
        %v1842 = vsel %vm1840, %v1827, %v1806
        %v1843 = vsel %vm1840, %v1828, %v1807
        %v1844 = vsel %vm1840, %v1829, %v1808
        %v1845 = vsel %vm1840, %v1830, %v1809
        %v1846 = vsel %vm1840, %v1831, %v1810
        %v1847 = vsel %vm1840, %v1832, %v1811
        %v1848 = vsel %vm1840, %v1833, %v1812
        %vm1849 = vcmp.eq.s32.totalorder %v311, 2
        %v1850 = vsel %vm1849, 1, 0
        %v1851 = vlaneseq
        %v1852 = vshrl.u32 %v1851, 7
        %v1853 = vsub.s32 3, %v1852
        %v1854 = vrot.slane %v1850, %v1853
        %vm1855 = vcmp.eq.s32.totalorder %v1854, 1
        %v1856 = vsel %vm1855, %v1826, %v1818
        %v1857 = vsel %vm1855, %v1827, %v1819
        %v1858 = vsel %vm1855, %v1828, %v1820
        %v1859 = vsel %vm1855, %v1829, %v1821
        %v1860 = vsel %vm1855, %v1830, %v1822
        %v1861 = vsel %vm1855, %v1831, %v1823
        %v1862 = vsel %vm1855, %v1832, %v1824
        %v1863 = vsel %vm1855, %v1833, %v1825
        %v1864 = vpack.c.bf16 %v1846, %v1845
        %v1865 = vpack.c.bf16 %v1848, %v1847
        %v1866 = vpack.c.bf16 %v1861, %v1860
        %v1867 = vpack.c.bf16 %v1863, %v1862
        %1868 = vmatprep.subr.bf16.mxu0 0
        %1869 = vmatpush1.bf16.msra.mxu0 %v1864
        %1870 = vmatprep.subr.bf16.mxu0 0
        %1871 = vmatpush1.bf16.msra.mxu0 %v1865
        %1872 = vmatprep.subr.bf16.mxu0 0
        %1873 = vmatpush1.bf16.msra.mxu0 %v1866
        %1874 = vmatprep.subr.bf16.mxu0 0
        %1875 = vmatpush1.bf16.msra.mxu0 %v1867
        %1876 = vmatprep.subr.bf16.mxu0 0
        %1877 = vmatpush1.bf16.msra.mxu0 0
        %1878 = vmatprep.subr.bf16.mxu0 0
        %1879 = vmatpush1.bf16.msra.mxu0 0
        %1880 = vmatprep.subr.bf16.mxu0 0
        %1881 = vmatpush1.bf16.msra.mxu0 0
        %1882 = vmatprep.subr.bf16.mxu0 0
        %1883 = vmatpush1.bf16.msra.mxu0 0
        %1884 = vmatprep.subr.bf16.mxu0 0
        %1885 = vmatpush1.bf16.msra.mxu0 0
        %1886 = vmatprep.subr.bf16.mxu0 0
        %1887 = vmatpush1.bf16.msra.mxu0 0
        %1888 = vmatprep.subr.bf16.mxu0 0
        %1889 = vmatpush1.bf16.msra.mxu0 0
        %1890 = vmatprep.subr.bf16.mxu0 0
        %1891 = vmatpush1.bf16.msra.mxu0 0
        %1892 = vmatprep.subr.bf16.mxu0 0
        %1893 = vmatpush1.bf16.msra.mxu0 0
        %1894 = vmatprep.subr.bf16.mxu0 0
        %1895 = vmatpush1.bf16.msra.mxu0 0
        %1896 = vmatprep.subr.bf16.mxu0 0
        %1897 = vmatpush1.bf16.msra.mxu0 0
        %1898 = vmatprep.subr.bf16.mxu0 0
        %1899 = vmatpush1.bf16.msra.mxu0 0
        %1900 = vmatprep.mubr.bf16.mxu0 0
        %1901 = vmatmul.mubr.bf16.gmra.mrb[0].mxu0 %v895
        %v1902 = vpop.f32.mrb[0].mxu0
        %v1903 = vadd.f32 %v481, %v1902
        %v1904 = vpop.f32.mrb[0].mxu0
        %v1905 = vpop.f32.mrb[0].mxu0
        %v1906 = vadd.f32 %v486, %v1905
        %v1907 = vpop.f32.mrb[0].mxu0
        %1908 = vmatprep.mubr.bf16.mxu0 0
        %1909 = vmatmul.mubr.bf16.gmra.mrb[0].mxu0 %v898
        %v1910 = vpop.f32.mrb[0].mxu0
        %v1911 = vadd.f32 %v491, %v1910
        %v1912 = vpop.f32.mrb[0].mxu0
        %v1913 = vpop.f32.mrb[0].mxu0
        %v1914 = vadd.f32 %v496, %v1913
        %v1915 = vpop.f32.mrb[0].mxu0
        %1916 = vmatprep.mubr.bf16.mxu0 0
        %1917 = vmatmul.mubr.bf16.gmra.mrb[0].mxu0 %v901
        %v1918 = vpop.f32.mrb[0].mxu0
        %v1919 = vadd.f32 %v501, %v1918
        %v1920 = vpop.f32.mrb[0].mxu0
        %v1921 = vpop.f32.mrb[0].mxu0
        %v1922 = vadd.f32 %v506, %v1921
        %v1923 = vpop.f32.mrb[0].mxu0
        %1924 = vmatprep.mubr.bf16.mxu0 0
        %1925 = vmatmul.mubr.bf16.gmra.mrb[0].mxu0 %v904
        %v1926 = vpop.f32.mrb[0].mxu0
        %v1927 = vadd.f32 %v511, %v1926
        %v1928 = vpop.f32.mrb[0].mxu0
        %v1929 = vpop.f32.mrb[0].mxu0
        %v1930 = vadd.f32 %v516, %v1929
        %v1931 = vpop.f32.mrb[0].mxu0
        %1932 = vmatprep.mubr.bf16.mxu0 0
        %1933 = vmatmul.mubr.bf16.gmra.mrb[0].mxu0 %v907
        %v1934 = vpop.f32.mrb[0].mxu0
        %v1935 = vadd.f32 %v521, %v1934
        %v1936 = vpop.f32.mrb[0].mxu0
        %v1937 = vpop.f32.mrb[0].mxu0
        %v1938 = vadd.f32 %v526, %v1937
        %v1939 = vpop.f32.mrb[0].mxu0
        %1940 = vmatprep.mubr.bf16.mxu0 0
        %1941 = vmatmul.mubr.bf16.gmra.mrb[0].mxu0 %v910
        %v1942 = vpop.f32.mrb[0].mxu0
        %v1943 = vadd.f32 %v531, %v1942
        %v1944 = vpop.f32.mrb[0].mxu0
        %v1945 = vpop.f32.mrb[0].mxu0
        %v1946 = vadd.f32 %v536, %v1945
        %v1947 = vpop.f32.mrb[0].mxu0
        %1948 = vmatprep.mubr.bf16.mxu0 0
        %1949 = vmatmul.mubr.bf16.gmra.mrb[0].mxu0 %v913
        %v1950 = vpop.f32.mrb[0].mxu0
        %v1951 = vadd.f32 %v541, %v1950
        %v1952 = vpop.f32.mrb[0].mxu0
        %v1953 = vpop.f32.mrb[0].mxu0
        %v1954 = vadd.f32 %v546, %v1953
        %v1955 = vpop.f32.mrb[0].mxu0
        %1956 = vmatprep.mubr.bf16.mxu0 0
        %1957 = vmatmul.mubr.bf16.gmra.mrb[0].mxu0 %v916
        %v1958 = vpop.f32.mrb[0].mxu0
        %v1959 = vadd.f32 %v551, %v1958
        %v1960 = vpop.f32.mrb[0].mxu0
        %v1961 = vpop.f32.mrb[0].mxu0
        %v1962 = vadd.f32 %v556, %v1961
        %v1963 = vpop.f32.mrb[0].mxu0
        %1964 = vmatprep.mubr.bf16.mxu0 0
        %1965 = vmatmul.mubr.bf16.gmra.mrb[0].mxu0 %v919
        %v1966 = vpop.f32.mrb[0].mxu0
        %v1967 = vadd.f32 %v561, %v1966
        %v1968 = vpop.f32.mrb[0].mxu0
        %v1969 = vpop.f32.mrb[0].mxu0
        %v1970 = vadd.f32 %v566, %v1969
        %v1971 = vpop.f32.mrb[0].mxu0
        %1972 = vmatprep.mubr.bf16.mxu0 0
        %1973 = vmatmul.mubr.bf16.gmra.mrb[0].mxu0 %v922
        %v1974 = vpop.f32.mrb[0].mxu0
        %v1975 = vadd.f32 %v571, %v1974
        %v1976 = vpop.f32.mrb[0].mxu0
        %v1977 = vpop.f32.mrb[0].mxu0
        %v1978 = vadd.f32 %v576, %v1977
        %v1979 = vpop.f32.mrb[0].mxu0
        %1980 = vdwg.mxu0
        %v1981 = vxor.u32 %v1903, 2147483648
        %v1982 = vxor.u32 %v1906, 2147483648
        %v1983 = vxor.u32 %v1911, 2147483648
        %v1984 = vxor.u32 %v1914, 2147483648
        %v1985 = vmul.f32 %v1981, 1.442695
        %v1986 = vpow.pop %v1985
        %v1987 = vmul.f32 %v1982, 1.442695
        %v1988 = vpow.pop %v1987
        %v1989 = vmul.f32 %v1983, 1.442695
        %v1990 = vpow.pop %v1989
        %v1991 = vmul.f32 %v1984, 1.442695
        %v1992 = vpow.pop %v1991
        %v1993 = vadd.f32 %v1986, 1.0
        %v1994 = vadd.f32 %v1988, 1.0
        %v1995 = vadd.f32 %v1990, 1.0
        %v1996 = vadd.f32 %v1992, 1.0
        %v1997 = vrcp.pop %v1993
        %v1998 = vmul.f32 1.0, %v1997
        %v1999 = vrcp.pop %v1994
        %v2000 = vmul.f32 1.0, %v1999
        %v2001 = vrcp.pop %v1995
        %v2002 = vmul.f32 1.0, %v2001
        %v2003 = vrcp.pop %v1996
        %v2004 = vmul.f32 1.0, %v2003
        %v2005 = vxor.u32 %v1919, 2147483648
        %v2006 = vxor.u32 %v1922, 2147483648
        %v2007 = vxor.u32 %v1927, 2147483648
        %v2008 = vxor.u32 %v1930, 2147483648
        %v2009 = vmul.f32 %v2005, 1.442695
        %v2010 = vpow.pop %v2009
        %v2011 = vmul.f32 %v2006, 1.442695
        %v2012 = vpow.pop %v2011
        %v2013 = vmul.f32 %v2007, 1.442695
        %v2014 = vpow.pop %v2013
        %v2015 = vmul.f32 %v2008, 1.442695
        %v2016 = vpow.pop %v2015
        %v2017 = vadd.f32 %v2010, 1.0
        %v2018 = vadd.f32 %v2012, 1.0
        %v2019 = vadd.f32 %v2014, 1.0
        %v2020 = vadd.f32 %v2016, 1.0
        %v2021 = vrcp.pop %v2017
        %v2022 = vmul.f32 1.0, %v2021
        %v2023 = vrcp.pop %v2018
        %v2024 = vmul.f32 1.0, %v2023
        %v2025 = vrcp.pop %v2019
        %v2026 = vmul.f32 1.0, %v2025
        %v2027 = vrcp.pop %v2020
        %v2028 = vmul.f32 1.0, %v2027
        %v2029 = vadd.f32 %v1935, %v1682
        %v2030 = vadd.f32 %v1938, %v1683
        %v2031 = vadd.f32 %v1943, %v1684
        %v2032 = vadd.f32 %v1946, %v1685
        %v2033 = vadd.f32 %v1951, %v1686
        %v2034 = vadd.f32 %v1954, %v1687
        %v2035 = vadd.f32 %v1959, %v1688
        %v2036 = vadd.f32 %v1962, %v1689
        %v2037 = vadd.f32 %v1967, %v1690
        %v2038 = vadd.f32 %v1970, %v1691
        %v2039 = vadd.f32 %v1975, %v1692
        %v2040 = vadd.f32 %v1978, %v1693
        %v2041 = vxor.u32 %v2029, 2147483648
        %v2042 = vxor.u32 %v2030, 2147483648
        %v2043 = vxor.u32 %v2031, 2147483648
        %v2044 = vxor.u32 %v2032, 2147483648
        %v2045 = vmul.f32 %v2041, 1.442695
        %v2046 = vpow.pop %v2045
        %v2047 = vmul.f32 %v2042, 1.442695
        %v2048 = vpow.pop %v2047
        %v2049 = vmul.f32 %v2043, 1.442695
        %v2050 = vpow.pop %v2049
        %v2051 = vmul.f32 %v2044, 1.442695
        %v2052 = vpow.pop %v2051
        %v2053 = vadd.f32 %v2046, 1.0
        %v2054 = vadd.f32 %v2048, 1.0
        %v2055 = vadd.f32 %v2050, 1.0
        %v2056 = vadd.f32 %v2052, 1.0
        %v2057 = vrcp.pop %v2053
        %v2058 = vmul.f32 1.0, %v2057
        %v2059 = vrcp.pop %v2054
        %v2060 = vmul.f32 1.0, %v2059
        %v2061 = vrcp.pop %v2055
        %v2062 = vmul.f32 1.0, %v2061
        %v2063 = vrcp.pop %v2056
        %v2064 = vmul.f32 1.0, %v2063
        %v2065 = vmax.f32 %v2033, 0.0
        %v2066 = vmax.f32 %v2034, 0.0
        %v2067 = vmax.f32 %v2035, 0.0
        %v2068 = vmax.f32 %v2036, 0.0
        %v2069 = vmul.f32 %v2058, %v2065
        %v2070 = vmul.f32 %v2060, %v2066
        %v2071 = vmul.f32 %v2062, %v2067
        %v2072 = vmul.f32 %v2064, %v2068
        %v2073 = vmul.f32 %v1998, %v1841
        %v2074 = vmul.f32 %v2000, %v1842
        %v2075 = vmul.f32 %v2002, %v1843
        %v2076 = vmul.f32 %v2004, %v1844
        %v2077 = vadd.f32 %v2069, %v2073
        %v2078 = vadd.f32 %v2070, %v2074
        %v2079 = vadd.f32 %v2071, %v2075
        %v2080 = vadd.f32 %v2072, %v2076
        %v2081 = vmul.f32 %v2022, %v1856
        %v2082 = vmul.f32 %v2024, %v1857
        %v2083 = vmul.f32 %v2026, %v1858
        %v2084 = vmul.f32 %v2028, %v1859
        %v2085 = vadd.f32 %v2077, %v2081
        %v2086 = vadd.f32 %v2078, %v2082
        %v2087 = vadd.f32 %v2079, %v2083
        %v2088 = vadd.f32 %v2080, %v2084
        %v2089 = vxor.u32 %v2037, 2147483648
        %v2090 = vxor.u32 %v2038, 2147483648
        %v2091 = vxor.u32 %v2039, 2147483648
        %v2092 = vxor.u32 %v2040, 2147483648
        %v2093 = vmul.f32 %v2089, 1.442695
        %v2094 = vpow.pop %v2093
        %v2095 = vmul.f32 %v2090, 1.442695
        %v2096 = vpow.pop %v2095
        %v2097 = vmul.f32 %v2091, 1.442695
        %v2098 = vpow.pop %v2097
        %v2099 = vmul.f32 %v2092, 1.442695
        %v2100 = vpow.pop %v2099
        %v2101 = vadd.f32 %v2094, 1.0
        %v2102 = vadd.f32 %v2096, 1.0
        %v2103 = vadd.f32 %v2098, 1.0
        %v2104 = vadd.f32 %v2100, 1.0
        %v2105 = vrcp.pop %v2101
        %v2106 = vmul.f32 1.0, %v2105
        %v2107 = vrcp.pop %v2102
        %v2108 = vmul.f32 1.0, %v2107
        %v2109 = vrcp.pop %v2103
        %v2110 = vmul.f32 1.0, %v2109
        %v2111 = vrcp.pop %v2104
        %v2112 = vmul.f32 1.0, %v2111
        %v2113 = vmax.f32 %v2085, 0.0
        %v2114 = vmax.f32 %v2086, 0.0
        %v2115 = vmax.f32 %v2087, 0.0
        %v2116 = vmax.f32 %v2088, 0.0
        %v2117 = vmul.f32 %v2106, %v2113
        %v2118 = vmul.f32 %v2108, %v2114
        %v2119 = vmul.f32 %v2110, %v2115
        %v2120 = vmul.f32 %v2112, %v2116
        %v2121 = vlaneseq
        %v2122 = vshrl.u32 %v2121, 7
        %v2123 = vsub.s32 3, %v2122
        %v2124 = vrot.slane %v1178, %v2123
        %vm2125 = vcmp.eq.s32.totalorder %v2124, 1
        %v2126 = vsel %vm2125, %v1722, %v2085
        %v2127 = vsel %vm2125, %v1723, %v2086
        %v2128 = vsel %vm2125, %v1724, %v2087
        %v2129 = vsel %vm2125, %v1725, %v2088
        %v2130 = vsel %vm2125, %v1754, %v2117
        %v2131 = vsel %vm2125, %v1755, %v2118
        %v2132 = vsel %vm2125, %v1756, %v2119
        %v2133 = vsel %vm2125, %v1757, %v2120
        %s2134 = scalar_lea.vmem [#allocation2], 192
        %2135 = vst [vmem:[%s2134] sm:$0xff] %v2126
        %2136 = vst [vmem:[%s2134 + $0x8] sm:$0xff] %v2127
        %2137 = vst [vmem:[%s2134 + $0x10] sm:$0xff] %v2128
        %2138 = vst [vmem:[%s2134 + $0x18] sm:$0xff] %v2129
        %2139 = vst [vmem:[%s2134 + $0x20] sm:$0xff] %v2130
        %2140 = vst [vmem:[%s2134 + $0x28] sm:$0xff] %v2131
        %2141 = vst [vmem:[%s2134 + $0x30] sm:$0xff] %v2132
        %2142 = vst [vmem:[%s2134 + $0x38] sm:$0xff] %v2133
        %vm2143 = vcmp.eq.s32.totalorder %v312, 3
        %v2144 = vsel %vm2143, 1, 0
        %v2145 = vlaneseq
        %v2146 = vshrl.u32 %v2145, 7
        %v2147 = vsub.s32 0, %v2146
        %v2148 = vrot.slane %v2144, %v2147
        %vm2149 = vcmp.eq.s32.totalorder %v2148, 1
        %v2150 = vsel %vm2149, %v2130, %v1662
        %v2151 = vsel %vm2149, %v2131, %v1663
        %v2152 = vsel %vm2149, %v2132, %v1664
        %v2153 = vsel %vm2149, %v2133, %v1665
        %v2154 = vlaneseq
        %v2155 = vshrl.u32 %v2154, 7
        %v2156 = vsub.s32 4, %v2155
        %v2157 = vrot.slane %v313, %v2156
        %v2158 = vmul.f32 %v329, %v2157
        %v2159 = vmul.f32 %v334, %v2157
        %v2160 = vmul.f32 %v339, %v2157
        %v2161 = vmul.f32 %v344, %v2157
        %v2162 = vmul.f32 %v349, %v2157
        %v2163 = vmul.f32 %v354, %v2157
        %v2164 = vmul.f32 %v359, %v2157
        %v2165 = vmul.f32 %v364, %v2157
        %v2166 = vmul.f32 %v369, %v2157
        %v2167 = vmul.f32 %v374, %v2157
        %v2168 = vmul.f32 %v379, %v2157
        %v2169 = vmul.f32 %v384, %v2157
        %v2170 = vadd.f32 %v2158, %v401
        %v2171 = vadd.f32 %v2159, %v406
        %v2172 = vadd.f32 %v2160, %v411
        %v2173 = vadd.f32 %v2161, %v416
        %v2174 = vadd.f32 %v2162, %v421
        %v2175 = vadd.f32 %v2163, %v426
        %v2176 = vadd.f32 %v2164, %v431
        %v2177 = vadd.f32 %v2165, %v436
        %v2178 = vadd.f32 %v2166, %v441
        %v2179 = vadd.f32 %v2167, %v446
        %v2180 = vadd.f32 %v2168, %v451
        %v2181 = vadd.f32 %v2169, %v456
        %v2182 = vxor.u32 %v2170, 2147483648
        %v2183 = vxor.u32 %v2171, 2147483648
        %v2184 = vxor.u32 %v2172, 2147483648
        %v2185 = vxor.u32 %v2173, 2147483648
        %v2186 = vmul.f32 %v2182, 1.442695
        %v2187 = vpow.pop %v2186
        %v2188 = vmul.f32 %v2183, 1.442695
        %v2189 = vpow.pop %v2188
        %v2190 = vmul.f32 %v2184, 1.442695
        %v2191 = vpow.pop %v2190
        %v2192 = vmul.f32 %v2185, 1.442695
        %v2193 = vpow.pop %v2192
        %v2194 = vadd.f32 %v2187, 1.0
        %v2195 = vadd.f32 %v2189, 1.0
        %v2196 = vadd.f32 %v2191, 1.0
        %v2197 = vadd.f32 %v2193, 1.0
        %v2198 = vrcp.pop %v2194
        %v2199 = vmul.f32 1.0, %v2198
        %v2200 = vrcp.pop %v2195
        %v2201 = vmul.f32 1.0, %v2200
        %v2202 = vrcp.pop %v2196
        %v2203 = vmul.f32 1.0, %v2202
        %v2204 = vrcp.pop %v2197
        %v2205 = vmul.f32 1.0, %v2204
        %v2206 = vmax.f32 %v2174, 0.0
        %v2207 = vmax.f32 %v2175, 0.0
        %v2208 = vmax.f32 %v2176, 0.0
        %v2209 = vmax.f32 %v2177, 0.0
        %v2210 = vmul.f32 %v2199, %v2206
        %v2211 = vmul.f32 %v2201, %v2207
        %v2212 = vmul.f32 %v2203, %v2208
        %v2213 = vmul.f32 %v2205, %v2209
        %v2214 = vxor.u32 %v2178, 2147483648
        %v2215 = vxor.u32 %v2179, 2147483648
        %v2216 = vxor.u32 %v2180, 2147483648
        %v2217 = vxor.u32 %v2181, 2147483648
        %v2218 = vmul.f32 %v2214, 1.442695
        %v2219 = vpow.pop %v2218
        %v2220 = vmul.f32 %v2215, 1.442695
        %v2221 = vpow.pop %v2220
        %v2222 = vmul.f32 %v2216, 1.442695
        %v2223 = vpow.pop %v2222
        %v2224 = vmul.f32 %v2217, 1.442695
        %v2225 = vpow.pop %v2224
        %v2226 = vadd.f32 %v2219, 1.0
        %v2227 = vadd.f32 %v2221, 1.0
        %v2228 = vadd.f32 %v2223, 1.0
        %v2229 = vadd.f32 %v2225, 1.0
        %v2230 = vrcp.pop %v2226
        %v2231 = vmul.f32 1.0, %v2230
        %v2232 = vrcp.pop %v2227
        %v2233 = vmul.f32 1.0, %v2232
        %v2234 = vrcp.pop %v2228
        %v2235 = vmul.f32 1.0, %v2234
        %v2236 = vrcp.pop %v2229
        %v2237 = vmul.f32 1.0, %v2236
        %v2238 = vmax.f32 %v2210, 0.0
        %v2239 = vmax.f32 %v2211, 0.0
        %v2240 = vmax.f32 %v2212, 0.0
        %v2241 = vmax.f32 %v2213, 0.0
        %v2242 = vmul.f32 %v2231, %v2238
        %v2243 = vmul.f32 %v2233, %v2239
        %v2244 = vmul.f32 %v2235, %v2240
        %v2245 = vmul.f32 %v2237, %v2241
        %v2246 = vld [vmem:[#allocation2] sm:$0xff]
        %v2247 = vld [vmem:[#allocation2 + $0x8] sm:$0xff]
        %v2248 = vld [vmem:[#allocation2 + $0x10] sm:$0xff]
        %v2249 = vld [vmem:[#allocation2 + $0x18] sm:$0xff]
        %v2250 = vld [vmem:[#allocation2 + $0x20] sm:$0xff]
        %v2251 = vld [vmem:[#allocation2 + $0x28] sm:$0xff]
        %v2252 = vld [vmem:[#allocation2 + $0x30] sm:$0xff]
        %v2253 = vld [vmem:[#allocation2 + $0x38] sm:$0xff]
        %v2254 = vlaneseq
        %v2255 = vshrl.u32 %v2254, 7
        %v2256 = vsub.s32 4, %v2255
        %v2257 = vrot.slane %v810, %v2256
        %vm2258 = vcmp.eq.s32.totalorder %v2257, 1
        %v2259 = vsel %vm2258, %v2246, 0.0
        %v2260 = vsel %vm2258, %v2247, 0.0
        %v2261 = vsel %vm2258, %v2248, 0.0
        %v2262 = vsel %vm2258, %v2249, 0.0
        %v2263 = vsel %vm2258, %v2250, 0.0
        %v2264 = vsel %vm2258, %v2251, 0.0
        %v2265 = vsel %vm2258, %v2252, 0.0
        %v2266 = vsel %vm2258, %v2253, 0.0
        %v2267 = vlaneseq
        %v2268 = vshrl.u32 %v2267, 7
        %v2269 = vsub.s32 4, %v2268
        %v2270 = vrot.slane %v825, %v2269
        %vm2271 = vcmp.eq.s32.totalorder %v2270, 1
        %v2272 = vsel %vm2271, %v2246, 0.0
        %v2273 = vsel %vm2271, %v2247, 0.0
        %v2274 = vsel %vm2271, %v2248, 0.0
        %v2275 = vsel %vm2271, %v2249, 0.0
        %v2276 = vsel %vm2271, %v2250, 0.0
        %v2277 = vsel %vm2271, %v2251, 0.0
        %v2278 = vsel %vm2271, %v2252, 0.0
        %v2279 = vsel %vm2271, %v2253, 0.0
        %v2280 = vld [vmem:[%s1192] sm:$0xff]
        %v2281 = vld [vmem:[%s1192 + $0x8] sm:$0xff]
        %v2282 = vld [vmem:[%s1192 + $0x10] sm:$0xff]
        %v2283 = vld [vmem:[%s1192 + $0x18] sm:$0xff]
        %v2284 = vld [vmem:[%s1192 + $0x20] sm:$0xff]
        %v2285 = vld [vmem:[%s1192 + $0x28] sm:$0xff]
        %v2286 = vld [vmem:[%s1192 + $0x30] sm:$0xff]
        %v2287 = vld [vmem:[%s1192 + $0x38] sm:$0xff]
        %v2288 = vlaneseq
        %v2289 = vshrl.u32 %v2288, 7
        %v2290 = vsub.s32 4, %v2289
        %v2291 = vrot.slane %v1347, %v2290
        %vm2292 = vcmp.eq.s32.totalorder %v2291, 1
        %v2293 = vsel %vm2292, %v2280, %v2259
        %v2294 = vsel %vm2292, %v2281, %v2260
        %v2295 = vsel %vm2292, %v2282, %v2261
        %v2296 = vsel %vm2292, %v2283, %v2262
        %v2297 = vsel %vm2292, %v2284, %v2263
        %v2298 = vsel %vm2292, %v2285, %v2264
        %v2299 = vsel %vm2292, %v2286, %v2265
        %v2300 = vsel %vm2292, %v2287, %v2266
        %v2301 = vlaneseq
        %v2302 = vshrl.u32 %v2301, 7
        %v2303 = vsub.s32 4, %v2302
        %v2304 = vrot.slane %v1362, %v2303
        %vm2305 = vcmp.eq.s32.totalorder %v2304, 1
        %v2306 = vsel %vm2305, %v2280, %v2272
        %v2307 = vsel %vm2305, %v2281, %v2273
        %v2308 = vsel %vm2305, %v2282, %v2274
        %v2309 = vsel %vm2305, %v2283, %v2275
        %v2310 = vsel %vm2305, %v2284, %v2276
        %v2311 = vsel %vm2305, %v2285, %v2277
        %v2312 = vsel %vm2305, %v2286, %v2278
        %v2313 = vsel %vm2305, %v2287, %v2279
        %v2314 = vld [vmem:[%s1646] sm:$0xff]
        %v2315 = vld [vmem:[%s1646 + $0x8] sm:$0xff]
        %v2316 = vld [vmem:[%s1646 + $0x10] sm:$0xff]
        %v2317 = vld [vmem:[%s1646 + $0x18] sm:$0xff]
        %v2318 = vld [vmem:[%s1646 + $0x20] sm:$0xff]
        %v2319 = vld [vmem:[%s1646 + $0x28] sm:$0xff]
        %v2320 = vld [vmem:[%s1646 + $0x30] sm:$0xff]
        %v2321 = vld [vmem:[%s1646 + $0x38] sm:$0xff]
        %v2322 = vlaneseq
        %v2323 = vshrl.u32 %v2322, 7
        %v2324 = vsub.s32 4, %v2323
        %v2325 = vrot.slane %v1835, %v2324
        %vm2326 = vcmp.eq.s32.totalorder %v2325, 1
        %v2327 = vsel %vm2326, %v2314, %v2293
        %v2328 = vsel %vm2326, %v2315, %v2294
        %v2329 = vsel %vm2326, %v2316, %v2295
        %v2330 = vsel %vm2326, %v2317, %v2296
        %v2331 = vsel %vm2326, %v2318, %v2297
        %v2332 = vsel %vm2326, %v2319, %v2298
        %v2333 = vsel %vm2326, %v2320, %v2299
        %v2334 = vsel %vm2326, %v2321, %v2300
        %v2335 = vlaneseq
        %v2336 = vshrl.u32 %v2335, 7
        %v2337 = vsub.s32 4, %v2336
        %v2338 = vrot.slane %v1850, %v2337
        %vm2339 = vcmp.eq.s32.totalorder %v2338, 1
        %v2340 = vsel %vm2339, %v2314, %v2306
        %v2341 = vsel %vm2339, %v2315, %v2307
        %v2342 = vsel %vm2339, %v2316, %v2308
        %v2343 = vsel %vm2339, %v2317, %v2309
        %v2344 = vsel %vm2339, %v2318, %v2310
        %v2345 = vsel %vm2339, %v2319, %v2311
        %v2346 = vsel %vm2339, %v2320, %v2312
        %v2347 = vsel %vm2339, %v2321, %v2313
        %v2348 = vld [vmem:[%s2134] sm:$0xff]
        %v2349 = vld [vmem:[%s2134 + $0x8] sm:$0xff]
        %v2350 = vld [vmem:[%s2134 + $0x10] sm:$0xff]
        %v2351 = vld [vmem:[%s2134 + $0x18] sm:$0xff]
        %v2352 = vld [vmem:[%s2134 + $0x20] sm:$0xff]
        %v2353 = vld [vmem:[%s2134 + $0x28] sm:$0xff]
        %v2354 = vld [vmem:[%s2134 + $0x30] sm:$0xff]
        %v2355 = vld [vmem:[%s2134 + $0x38] sm:$0xff]
        %vm2356 = vcmp.eq.s32.totalorder %v310, 3
        %v2357 = vsel %vm2356, 1, 0
        %v2358 = vlaneseq
        %v2359 = vshrl.u32 %v2358, 7
        %v2360 = vsub.s32 4, %v2359
        %v2361 = vrot.slane %v2357, %v2360
        %vm2362 = vcmp.eq.s32.totalorder %v2361, 1
        %v2363 = vsel %vm2362, %v2348, %v2327
        %v2364 = vsel %vm2362, %v2349, %v2328
        %v2365 = vsel %vm2362, %v2350, %v2329
        %v2366 = vsel %vm2362, %v2351, %v2330
        %v2367 = vsel %vm2362, %v2352, %v2331
        %v2368 = vsel %vm2362, %v2353, %v2332
        %v2369 = vsel %vm2362, %v2354, %v2333
        %v2370 = vsel %vm2362, %v2355, %v2334
        %vm2371 = vcmp.eq.s32.totalorder %v311, 3
        %v2372 = vsel %vm2371, 1, 0
        %v2373 = vlaneseq
        %v2374 = vshrl.u32 %v2373, 7
        %v2375 = vsub.s32 4, %v2374
        %v2376 = vrot.slane %v2372, %v2375
        %vm2377 = vcmp.eq.s32.totalorder %v2376, 1
        %v2378 = vsel %vm2377, %v2348, %v2340
        %v2379 = vsel %vm2377, %v2349, %v2341
        %v2380 = vsel %vm2377, %v2350, %v2342
        %v2381 = vsel %vm2377, %v2351, %v2343
        %v2382 = vsel %vm2377, %v2352, %v2344
        %v2383 = vsel %vm2377, %v2353, %v2345
        %v2384 = vsel %vm2377, %v2354, %v2346
        %v2385 = vsel %vm2377, %v2355, %v2347
        %v2386 = vpack.c.bf16 %v2368, %v2367
        %v2387 = vpack.c.bf16 %v2370, %v2369
        %v2388 = vpack.c.bf16 %v2383, %v2382
        %v2389 = vpack.c.bf16 %v2385, %v2384
        %2390 = vmatprep.subr.bf16.mxu0 0
        %2391 = vmatpush1.bf16.msra.mxu0 %v2386
        %2392 = vmatprep.subr.bf16.mxu0 0
        %2393 = vmatpush1.bf16.msra.mxu0 %v2387
        %2394 = vmatprep.subr.bf16.mxu0 0
        %2395 = vmatpush1.bf16.msra.mxu0 %v2388
        %2396 = vmatprep.subr.bf16.mxu0 0
        %2397 = vmatpush1.bf16.msra.mxu0 %v2389
        %2398 = vmatprep.subr.bf16.mxu0 0
        %2399 = vmatpush1.bf16.msra.mxu0 0
        %2400 = vmatprep.subr.bf16.mxu0 0
        %2401 = vmatpush1.bf16.msra.mxu0 0
        %2402 = vmatprep.subr.bf16.mxu0 0
        %2403 = vmatpush1.bf16.msra.mxu0 0
        %2404 = vmatprep.subr.bf16.mxu0 0
        %2405 = vmatpush1.bf16.msra.mxu0 0
        %2406 = vmatprep.subr.bf16.mxu0 0
        %2407 = vmatpush1.bf16.msra.mxu0 0
        %2408 = vmatprep.subr.bf16.mxu0 0
        %2409 = vmatpush1.bf16.msra.mxu0 0
        %2410 = vmatprep.subr.bf16.mxu0 0
        %2411 = vmatpush1.bf16.msra.mxu0 0
        %2412 = vmatprep.subr.bf16.mxu0 0
        %2413 = vmatpush1.bf16.msra.mxu0 0
        %2414 = vmatprep.subr.bf16.mxu0 0
        %2415 = vmatpush1.bf16.msra.mxu0 0
        %2416 = vmatprep.subr.bf16.mxu0 0
        %2417 = vmatpush1.bf16.msra.mxu0 0
        %2418 = vmatprep.subr.bf16.mxu0 0
        %2419 = vmatpush1.bf16.msra.mxu0 0
        %2420 = vmatprep.subr.bf16.mxu0 0
        %2421 = vmatpush1.bf16.msra.mxu0 0
        %2422 = vmatprep.mubr.bf16.mxu0 0
        %2423 = vmatmul.mubr.bf16.gmra.mrb[0].mxu0 %v895
        %v2424 = vpop.f32.mrb[0].mxu0
        %v2425 = vadd.f32 %v481, %v2424
        %v2426 = vpop.f32.mrb[0].mxu0
        %v2427 = vpop.f32.mrb[0].mxu0
        %v2428 = vadd.f32 %v486, %v2427
        %v2429 = vpop.f32.mrb[0].mxu0
        %2430 = vmatprep.mubr.bf16.mxu0 0
        %2431 = vmatmul.mubr.bf16.gmra.mrb[0].mxu0 %v898
        %v2432 = vpop.f32.mrb[0].mxu0
        %v2433 = vadd.f32 %v491, %v2432
        %v2434 = vpop.f32.mrb[0].mxu0
        %v2435 = vpop.f32.mrb[0].mxu0
        %v2436 = vadd.f32 %v496, %v2435
        %v2437 = vpop.f32.mrb[0].mxu0
        %2438 = vmatprep.mubr.bf16.mxu0 0
        %2439 = vmatmul.mubr.bf16.gmra.mrb[0].mxu0 %v901
        %v2440 = vpop.f32.mrb[0].mxu0
        %v2441 = vadd.f32 %v501, %v2440
        %v2442 = vpop.f32.mrb[0].mxu0
        %v2443 = vpop.f32.mrb[0].mxu0
        %v2444 = vadd.f32 %v506, %v2443
        %v2445 = vpop.f32.mrb[0].mxu0
        %2446 = vmatprep.mubr.bf16.mxu0 0
        %2447 = vmatmul.mubr.bf16.gmra.mrb[0].mxu0 %v904
        %v2448 = vpop.f32.mrb[0].mxu0
        %v2449 = vadd.f32 %v511, %v2448
        %v2450 = vpop.f32.mrb[0].mxu0
        %v2451 = vpop.f32.mrb[0].mxu0
        %v2452 = vadd.f32 %v516, %v2451
        %v2453 = vpop.f32.mrb[0].mxu0
        %2454 = vmatprep.mubr.bf16.mxu0 0
        %2455 = vmatmul.mubr.bf16.gmra.mrb[0].mxu0 %v907
        %v2456 = vpop.f32.mrb[0].mxu0
        %v2457 = vadd.f32 %v521, %v2456
        %v2458 = vpop.f32.mrb[0].mxu0
        %v2459 = vpop.f32.mrb[0].mxu0
        %v2460 = vadd.f32 %v526, %v2459
        %v2461 = vpop.f32.mrb[0].mxu0
        %2462 = vmatprep.mubr.bf16.mxu0 0
        %2463 = vmatmul.mubr.bf16.gmra.mrb[0].mxu0 %v910
        %v2464 = vpop.f32.mrb[0].mxu0
        %v2465 = vadd.f32 %v531, %v2464
        %v2466 = vpop.f32.mrb[0].mxu0
        %v2467 = vpop.f32.mrb[0].mxu0
        %v2468 = vadd.f32 %v536, %v2467
        %v2469 = vpop.f32.mrb[0].mxu0
        %2470 = vmatprep.mubr.bf16.mxu0 0
        %2471 = vmatmul.mubr.bf16.gmra.mrb[0].mxu0 %v913
        %v2472 = vpop.f32.mrb[0].mxu0
        %v2473 = vadd.f32 %v541, %v2472
        %v2474 = vpop.f32.mrb[0].mxu0
        %v2475 = vpop.f32.mrb[0].mxu0
        %v2476 = vadd.f32 %v546, %v2475
        %v2477 = vpop.f32.mrb[0].mxu0
        %2478 = vmatprep.mubr.bf16.mxu0 0
        %2479 = vmatmul.mubr.bf16.gmra.mrb[0].mxu0 %v916
        %v2480 = vpop.f32.mrb[0].mxu0
        %v2481 = vadd.f32 %v551, %v2480
        %v2482 = vpop.f32.mrb[0].mxu0
        %v2483 = vpop.f32.mrb[0].mxu0
        %v2484 = vadd.f32 %v556, %v2483
        %v2485 = vpop.f32.mrb[0].mxu0
        %2486 = vmatprep.mubr.bf16.mxu0 0
        %2487 = vmatmul.mubr.bf16.gmra.mrb[0].mxu0 %v919
        %v2488 = vpop.f32.mrb[0].mxu0
        %v2489 = vadd.f32 %v561, %v2488
        %v2490 = vpop.f32.mrb[0].mxu0
        %v2491 = vpop.f32.mrb[0].mxu0
        %v2492 = vadd.f32 %v566, %v2491
        %v2493 = vpop.f32.mrb[0].mxu0
        %2494 = vmatprep.mubr.bf16.mxu0 0
        %2495 = vmatmul.mubr.bf16.gmra.mrb[0].mxu0 %v922
        %v2496 = vpop.f32.mrb[0].mxu0
        %v2497 = vadd.f32 %v571, %v2496
        %v2498 = vpop.f32.mrb[0].mxu0
        %v2499 = vpop.f32.mrb[0].mxu0
        %v2500 = vadd.f32 %v576, %v2499
        %v2501 = vpop.f32.mrb[0].mxu0
        %2502 = vdwg.mxu0
        %v2503 = vxor.u32 %v2425, 2147483648
        %v2504 = vxor.u32 %v2428, 2147483648
        %v2505 = vxor.u32 %v2433, 2147483648
        %v2506 = vxor.u32 %v2436, 2147483648
        %v2507 = vmul.f32 %v2503, 1.442695
        %v2508 = vpow.pop %v2507
        %v2509 = vmul.f32 %v2504, 1.442695
        %v2510 = vpow.pop %v2509
        %v2511 = vmul.f32 %v2505, 1.442695
        %v2512 = vpow.pop %v2511
        %v2513 = vmul.f32 %v2506, 1.442695
        %v2514 = vpow.pop %v2513
        %v2515 = vadd.f32 %v2508, 1.0
        %v2516 = vadd.f32 %v2510, 1.0
        %v2517 = vadd.f32 %v2512, 1.0
        %v2518 = vadd.f32 %v2514, 1.0
        %v2519 = vrcp.pop %v2515
        %v2520 = vmul.f32 1.0, %v2519
        %v2521 = vrcp.pop %v2516
        %v2522 = vmul.f32 1.0, %v2521
        %v2523 = vrcp.pop %v2517
        %v2524 = vmul.f32 1.0, %v2523
        %v2525 = vrcp.pop %v2518
        %v2526 = vmul.f32 1.0, %v2525
        %v2527 = vxor.u32 %v2441, 2147483648
        %v2528 = vxor.u32 %v2444, 2147483648
        %v2529 = vxor.u32 %v2449, 2147483648
        %v2530 = vxor.u32 %v2452, 2147483648
        %v2531 = vmul.f32 %v2527, 1.442695
        %v2532 = vpow.pop %v2531
        %v2533 = vmul.f32 %v2528, 1.442695
        %v2534 = vpow.pop %v2533
        %v2535 = vmul.f32 %v2529, 1.442695
        %v2536 = vpow.pop %v2535
        %v2537 = vmul.f32 %v2530, 1.442695
        %v2538 = vpow.pop %v2537
        %v2539 = vadd.f32 %v2532, 1.0
        %v2540 = vadd.f32 %v2534, 1.0
        %v2541 = vadd.f32 %v2536, 1.0
        %v2542 = vadd.f32 %v2538, 1.0
        %v2543 = vrcp.pop %v2539
        %v2544 = vmul.f32 1.0, %v2543
        %v2545 = vrcp.pop %v2540
        %v2546 = vmul.f32 1.0, %v2545
        %v2547 = vrcp.pop %v2541
        %v2548 = vmul.f32 1.0, %v2547
        %v2549 = vrcp.pop %v2542
        %v2550 = vmul.f32 1.0, %v2549
        %v2551 = vadd.f32 %v2457, %v2170
        %v2552 = vadd.f32 %v2460, %v2171
        %v2553 = vadd.f32 %v2465, %v2172
        %v2554 = vadd.f32 %v2468, %v2173
        %v2555 = vadd.f32 %v2473, %v2174
        %v2556 = vadd.f32 %v2476, %v2175
        %v2557 = vadd.f32 %v2481, %v2176
        %v2558 = vadd.f32 %v2484, %v2177
        %v2559 = vadd.f32 %v2489, %v2178
        %v2560 = vadd.f32 %v2492, %v2179
        %v2561 = vadd.f32 %v2497, %v2180
        %v2562 = vadd.f32 %v2500, %v2181
        %v2563 = vxor.u32 %v2551, 2147483648
        %v2564 = vxor.u32 %v2552, 2147483648
        %v2565 = vxor.u32 %v2553, 2147483648
        %v2566 = vxor.u32 %v2554, 2147483648
        %v2567 = vmul.f32 %v2563, 1.442695
        %v2568 = vpow.pop %v2567
        %v2569 = vmul.f32 %v2564, 1.442695
        %v2570 = vpow.pop %v2569
        %v2571 = vmul.f32 %v2565, 1.442695
        %v2572 = vpow.pop %v2571
        %v2573 = vmul.f32 %v2566, 1.442695
        %v2574 = vpow.pop %v2573
        %v2575 = vadd.f32 %v2568, 1.0
        %v2576 = vadd.f32 %v2570, 1.0
        %v2577 = vadd.f32 %v2572, 1.0
        %v2578 = vadd.f32 %v2574, 1.0
        %v2579 = vrcp.pop %v2575
        %v2580 = vmul.f32 1.0, %v2579
        %v2581 = vrcp.pop %v2576
        %v2582 = vmul.f32 1.0, %v2581
        %v2583 = vrcp.pop %v2577
        %v2584 = vmul.f32 1.0, %v2583
        %v2585 = vrcp.pop %v2578
        %v2586 = vmul.f32 1.0, %v2585
        %v2587 = vmax.f32 %v2555, 0.0
        %v2588 = vmax.f32 %v2556, 0.0
        %v2589 = vmax.f32 %v2557, 0.0
        %v2590 = vmax.f32 %v2558, 0.0
        %v2591 = vmul.f32 %v2580, %v2587
        %v2592 = vmul.f32 %v2582, %v2588
        %v2593 = vmul.f32 %v2584, %v2589
        %v2594 = vmul.f32 %v2586, %v2590
        %v2595 = vmul.f32 %v2520, %v2363
        %v2596 = vmul.f32 %v2522, %v2364
        %v2597 = vmul.f32 %v2524, %v2365
        %v2598 = vmul.f32 %v2526, %v2366
        %v2599 = vadd.f32 %v2591, %v2595
        %v2600 = vadd.f32 %v2592, %v2596
        %v2601 = vadd.f32 %v2593, %v2597
        %v2602 = vadd.f32 %v2594, %v2598
        %v2603 = vmul.f32 %v2544, %v2378
        %v2604 = vmul.f32 %v2546, %v2379
        %v2605 = vmul.f32 %v2548, %v2380
        %v2606 = vmul.f32 %v2550, %v2381
        %v2607 = vadd.f32 %v2599, %v2603
        %v2608 = vadd.f32 %v2600, %v2604
        %v2609 = vadd.f32 %v2601, %v2605
        %v2610 = vadd.f32 %v2602, %v2606
        %v2611 = vxor.u32 %v2559, 2147483648
        %v2612 = vxor.u32 %v2560, 2147483648
        %v2613 = vxor.u32 %v2561, 2147483648
        %v2614 = vxor.u32 %v2562, 2147483648
        %v2615 = vmul.f32 %v2611, 1.442695
        %v2616 = vpow.pop %v2615
        %v2617 = vmul.f32 %v2612, 1.442695
        %v2618 = vpow.pop %v2617
        %v2619 = vmul.f32 %v2613, 1.442695
        %v2620 = vpow.pop %v2619
        %v2621 = vmul.f32 %v2614, 1.442695
        %v2622 = vpow.pop %v2621
        %v2623 = vadd.f32 %v2616, 1.0
        %v2624 = vadd.f32 %v2618, 1.0
        %v2625 = vadd.f32 %v2620, 1.0
        %v2626 = vadd.f32 %v2622, 1.0
        %v2627 = vrcp.pop %v2623
        %v2628 = vmul.f32 1.0, %v2627
        %v2629 = vrcp.pop %v2624
        %v2630 = vmul.f32 1.0, %v2629
        %v2631 = vrcp.pop %v2625
        %v2632 = vmul.f32 1.0, %v2631
        %v2633 = vrcp.pop %v2626
        %v2634 = vmul.f32 1.0, %v2633
        %v2635 = vmax.f32 %v2607, 0.0
        %v2636 = vmax.f32 %v2608, 0.0
        %v2637 = vmax.f32 %v2609, 0.0
        %v2638 = vmax.f32 %v2610, 0.0
        %v2639 = vmul.f32 %v2628, %v2635
        %v2640 = vmul.f32 %v2630, %v2636
        %v2641 = vmul.f32 %v2632, %v2637
        %v2642 = vmul.f32 %v2634, %v2638
        %v2643 = vlaneseq
        %v2644 = vshrl.u32 %v2643, 7
        %v2645 = vsub.s32 4, %v2644
        %v2646 = vrot.slane %v1178, %v2645
        %vm2647 = vcmp.eq.s32.totalorder %v2646, 1
        %v2648 = vsel %vm2647, %v2210, %v2607
        %v2649 = vsel %vm2647, %v2211, %v2608
        %v2650 = vsel %vm2647, %v2212, %v2609
        %v2651 = vsel %vm2647, %v2213, %v2610
        %v2652 = vsel %vm2647, %v2242, %v2639
        %v2653 = vsel %vm2647, %v2243, %v2640
        %v2654 = vsel %vm2647, %v2244, %v2641
        %v2655 = vsel %vm2647, %v2245, %v2642
        %s2656 = scalar_lea.vmem [#allocation2], 256
        %2657 = vst [vmem:[%s2656] sm:$0xff] %v2648
        %2658 = vst [vmem:[%s2656 + $0x8] sm:$0xff] %v2649
        %2659 = vst [vmem:[%s2656 + $0x10] sm:$0xff] %v2650
        %2660 = vst [vmem:[%s2656 + $0x18] sm:$0xff] %v2651
        %2661 = vst [vmem:[%s2656 + $0x20] sm:$0xff] %v2652
        %2662 = vst [vmem:[%s2656 + $0x28] sm:$0xff] %v2653
        %2663 = vst [vmem:[%s2656 + $0x30] sm:$0xff] %v2654
        %2664 = vst [vmem:[%s2656 + $0x38] sm:$0xff] %v2655
        %vm2665 = vcmp.eq.s32.totalorder %v312, 4
        %v2666 = vsel %vm2665, 1, 0
        %v2667 = vlaneseq
        %v2668 = vshrl.u32 %v2667, 7
        %v2669 = vsub.s32 0, %v2668
        %v2670 = vrot.slane %v2666, %v2669
        %vm2671 = vcmp.eq.s32.totalorder %v2670, 1
        %v2672 = vsel %vm2671, %v2652, %v2150
        %v2673 = vsel %vm2671, %v2653, %v2151
        %v2674 = vsel %vm2671, %v2654, %v2152
        %v2675 = vsel %vm2671, %v2655, %v2153
        %v2676 = vlaneseq
        %v2677 = vshrl.u32 %v2676, 7
        %v2678 = vsub.s32 5, %v2677
        %v2679 = vrot.slane %v313, %v2678
        %v2680 = vmul.f32 %v329, %v2679
        %v2681 = vmul.f32 %v334, %v2679
        %v2682 = vmul.f32 %v339, %v2679
        %v2683 = vmul.f32 %v344, %v2679
        %v2684 = vmul.f32 %v349, %v2679
        %v2685 = vmul.f32 %v354, %v2679
        %v2686 = vmul.f32 %v359, %v2679
        %v2687 = vmul.f32 %v364, %v2679
        %v2688 = vmul.f32 %v369, %v2679
        %v2689 = vmul.f32 %v374, %v2679
        %v2690 = vmul.f32 %v379, %v2679
        %v2691 = vmul.f32 %v384, %v2679
        %v2692 = vadd.f32 %v2680, %v401
        %v2693 = vadd.f32 %v2681, %v406
        %v2694 = vadd.f32 %v2682, %v411
        %v2695 = vadd.f32 %v2683, %v416
        %v2696 = vadd.f32 %v2684, %v421
        %v2697 = vadd.f32 %v2685, %v426
        %v2698 = vadd.f32 %v2686, %v431
        %v2699 = vadd.f32 %v2687, %v436
        %v2700 = vadd.f32 %v2688, %v441
        %v2701 = vadd.f32 %v2689, %v446
        %v2702 = vadd.f32 %v2690, %v451
        %v2703 = vadd.f32 %v2691, %v456
        %v2704 = vxor.u32 %v2692, 2147483648
        %v2705 = vxor.u32 %v2693, 2147483648
        %v2706 = vxor.u32 %v2694, 2147483648
        %v2707 = vxor.u32 %v2695, 2147483648
        %v2708 = vmul.f32 %v2704, 1.442695
        %v2709 = vpow.pop %v2708
        %v2710 = vmul.f32 %v2705, 1.442695
        %v2711 = vpow.pop %v2710
        %v2712 = vmul.f32 %v2706, 1.442695
        %v2713 = vpow.pop %v2712
        %v2714 = vmul.f32 %v2707, 1.442695
        %v2715 = vpow.pop %v2714
        %v2716 = vadd.f32 %v2709, 1.0
        %v2717 = vadd.f32 %v2711, 1.0
        %v2718 = vadd.f32 %v2713, 1.0
        %v2719 = vadd.f32 %v2715, 1.0
        %v2720 = vrcp.pop %v2716
        %v2721 = vmul.f32 1.0, %v2720
        %v2722 = vrcp.pop %v2717
        %v2723 = vmul.f32 1.0, %v2722
        %v2724 = vrcp.pop %v2718
        %v2725 = vmul.f32 1.0, %v2724
        %v2726 = vrcp.pop %v2719
        %v2727 = vmul.f32 1.0, %v2726
        %v2728 = vmax.f32 %v2696, 0.0
        %v2729 = vmax.f32 %v2697, 0.0
        %v2730 = vmax.f32 %v2698, 0.0
        %v2731 = vmax.f32 %v2699, 0.0
        %v2732 = vmul.f32 %v2721, %v2728
        %v2733 = vmul.f32 %v2723, %v2729
        %v2734 = vmul.f32 %v2725, %v2730
        %v2735 = vmul.f32 %v2727, %v2731
        %v2736 = vxor.u32 %v2700, 2147483648
        %v2737 = vxor.u32 %v2701, 2147483648
        %v2738 = vxor.u32 %v2702, 2147483648
        %v2739 = vxor.u32 %v2703, 2147483648
        %v2740 = vmul.f32 %v2736, 1.442695
        %v2741 = vpow.pop %v2740
        %v2742 = vmul.f32 %v2737, 1.442695
        %v2743 = vpow.pop %v2742
        %v2744 = vmul.f32 %v2738, 1.442695
        %v2745 = vpow.pop %v2744
        %v2746 = vmul.f32 %v2739, 1.442695
        %v2747 = vpow.pop %v2746
        %v2748 = vadd.f32 %v2741, 1.0
        %v2749 = vadd.f32 %v2743, 1.0
        %v2750 = vadd.f32 %v2745, 1.0
        %v2751 = vadd.f32 %v2747, 1.0
        %v2752 = vrcp.pop %v2748
        %v2753 = vmul.f32 1.0, %v2752
        %v2754 = vrcp.pop %v2749
        %v2755 = vmul.f32 1.0, %v2754
        %v2756 = vrcp.pop %v2750
        %v2757 = vmul.f32 1.0, %v2756
        %v2758 = vrcp.pop %v2751
        %v2759 = vmul.f32 1.0, %v2758
        %v2760 = vmax.f32 %v2732, 0.0
        %v2761 = vmax.f32 %v2733, 0.0
        %v2762 = vmax.f32 %v2734, 0.0
        %v2763 = vmax.f32 %v2735, 0.0
        %v2764 = vmul.f32 %v2753, %v2760
        %v2765 = vmul.f32 %v2755, %v2761
        %v2766 = vmul.f32 %v2757, %v2762
        %v2767 = vmul.f32 %v2759, %v2763
        %v2768 = vld [vmem:[#allocation2] sm:$0xff]
        %v2769 = vld [vmem:[#allocation2 + $0x8] sm:$0xff]
        %v2770 = vld [vmem:[#allocation2 + $0x10] sm:$0xff]
        %v2771 = vld [vmem:[#allocation2 + $0x18] sm:$0xff]
        %v2772 = vld [vmem:[#allocation2 + $0x20] sm:$0xff]
        %v2773 = vld [vmem:[#allocation2 + $0x28] sm:$0xff]
        %v2774 = vld [vmem:[#allocation2 + $0x30] sm:$0xff]
        %v2775 = vld [vmem:[#allocation2 + $0x38] sm:$0xff]
        %v2776 = vlaneseq
        %v2777 = vshrl.u32 %v2776, 7
        %v2778 = vsub.s32 5, %v2777
        %v2779 = vrot.slane %v810, %v2778
        %vm2780 = vcmp.eq.s32.totalorder %v2779, 1
        %v2781 = vsel %vm2780, %v2768, 0.0
        %v2782 = vsel %vm2780, %v2769, 0.0
        %v2783 = vsel %vm2780, %v2770, 0.0
        %v2784 = vsel %vm2780, %v2771, 0.0
        %v2785 = vsel %vm2780, %v2772, 0.0
        %v2786 = vsel %vm2780, %v2773, 0.0
        %v2787 = vsel %vm2780, %v2774, 0.0
        %v2788 = vsel %vm2780, %v2775, 0.0
        %v2789 = vlaneseq
        %v2790 = vshrl.u32 %v2789, 7
        %v2791 = vsub.s32 5, %v2790
        %v2792 = vrot.slane %v825, %v2791
        %vm2793 = vcmp.eq.s32.totalorder %v2792, 1
        %v2794 = vsel %vm2793, %v2768, 0.0
        %v2795 = vsel %vm2793, %v2769, 0.0
        %v2796 = vsel %vm2793, %v2770, 0.0
        %v2797 = vsel %vm2793, %v2771, 0.0
        %v2798 = vsel %vm2793, %v2772, 0.0
        %v2799 = vsel %vm2793, %v2773, 0.0
        %v2800 = vsel %vm2793, %v2774, 0.0
        %v2801 = vsel %vm2793, %v2775, 0.0
        %v2802 = vld [vmem:[%s1192] sm:$0xff]
        %v2803 = vld [vmem:[%s1192 + $0x8] sm:$0xff]
        %v2804 = vld [vmem:[%s1192 + $0x10] sm:$0xff]
        %v2805 = vld [vmem:[%s1192 + $0x18] sm:$0xff]
        %v2806 = vld [vmem:[%s1192 + $0x20] sm:$0xff]
        %v2807 = vld [vmem:[%s1192 + $0x28] sm:$0xff]
        %v2808 = vld [vmem:[%s1192 + $0x30] sm:$0xff]
        %v2809 = vld [vmem:[%s1192 + $0x38] sm:$0xff]
        %v2810 = vlaneseq
        %v2811 = vshrl.u32 %v2810, 7
        %v2812 = vsub.s32 5, %v2811
        %v2813 = vrot.slane %v1347, %v2812
        %vm2814 = vcmp.eq.s32.totalorder %v2813, 1
        %v2815 = vsel %vm2814, %v2802, %v2781
        %v2816 = vsel %vm2814, %v2803, %v2782
        %v2817 = vsel %vm2814, %v2804, %v2783
        %v2818 = vsel %vm2814, %v2805, %v2784
        %v2819 = vsel %vm2814, %v2806, %v2785
        %v2820 = vsel %vm2814, %v2807, %v2786
        %v2821 = vsel %vm2814, %v2808, %v2787
        %v2822 = vsel %vm2814, %v2809, %v2788
        %v2823 = vlaneseq
        %v2824 = vshrl.u32 %v2823, 7
        %v2825 = vsub.s32 5, %v2824
        %v2826 = vrot.slane %v1362, %v2825
        %vm2827 = vcmp.eq.s32.totalorder %v2826, 1
        %v2828 = vsel %vm2827, %v2802, %v2794
        %v2829 = vsel %vm2827, %v2803, %v2795
        %v2830 = vsel %vm2827, %v2804, %v2796
        %v2831 = vsel %vm2827, %v2805, %v2797
        %v2832 = vsel %vm2827, %v2806, %v2798
        %v2833 = vsel %vm2827, %v2807, %v2799
        %v2834 = vsel %vm2827, %v2808, %v2800
        %v2835 = vsel %vm2827, %v2809, %v2801
        %v2836 = vld [vmem:[%s1646] sm:$0xff]
        %v2837 = vld [vmem:[%s1646 + $0x8] sm:$0xff]
        %v2838 = vld [vmem:[%s1646 + $0x10] sm:$0xff]
        %v2839 = vld [vmem:[%s1646 + $0x18] sm:$0xff]
        %v2840 = vld [vmem:[%s1646 + $0x20] sm:$0xff]
        %v2841 = vld [vmem:[%s1646 + $0x28] sm:$0xff]
        %v2842 = vld [vmem:[%s1646 + $0x30] sm:$0xff]
        %v2843 = vld [vmem:[%s1646 + $0x38] sm:$0xff]
        %v2844 = vlaneseq
        %v2845 = vshrl.u32 %v2844, 7
        %v2846 = vsub.s32 5, %v2845
        %v2847 = vrot.slane %v1835, %v2846
        %vm2848 = vcmp.eq.s32.totalorder %v2847, 1
        %v2849 = vsel %vm2848, %v2836, %v2815
        %v2850 = vsel %vm2848, %v2837, %v2816
        %v2851 = vsel %vm2848, %v2838, %v2817
        %v2852 = vsel %vm2848, %v2839, %v2818
        %v2853 = vsel %vm2848, %v2840, %v2819
        %v2854 = vsel %vm2848, %v2841, %v2820
        %v2855 = vsel %vm2848, %v2842, %v2821
        %v2856 = vsel %vm2848, %v2843, %v2822
        %v2857 = vlaneseq
        %v2858 = vshrl.u32 %v2857, 7
        %v2859 = vsub.s32 5, %v2858
        %v2860 = vrot.slane %v1850, %v2859
        %vm2861 = vcmp.eq.s32.totalorder %v2860, 1
        %v2862 = vsel %vm2861, %v2836, %v2828
        %v2863 = vsel %vm2861, %v2837, %v2829
        %v2864 = vsel %vm2861, %v2838, %v2830
        %v2865 = vsel %vm2861, %v2839, %v2831
        %v2866 = vsel %vm2861, %v2840, %v2832
        %v2867 = vsel %vm2861, %v2841, %v2833
        %v2868 = vsel %vm2861, %v2842, %v2834
        %v2869 = vsel %vm2861, %v2843, %v2835
        %v2870 = vld [vmem:[%s2134] sm:$0xff]
        %v2871 = vld [vmem:[%s2134 + $0x8] sm:$0xff]
        %v2872 = vld [vmem:[%s2134 + $0x10] sm:$0xff]
        %v2873 = vld [vmem:[%s2134 + $0x18] sm:$0xff]
        %v2874 = vld [vmem:[%s2134 + $0x20] sm:$0xff]
        %v2875 = vld [vmem:[%s2134 + $0x28] sm:$0xff]
        %v2876 = vld [vmem:[%s2134 + $0x30] sm:$0xff]
        %v2877 = vld [vmem:[%s2134 + $0x38] sm:$0xff]
        %v2878 = vlaneseq
        %v2879 = vshrl.u32 %v2878, 7
        %v2880 = vsub.s32 5, %v2879
        %v2881 = vrot.slane %v2357, %v2880
        %vm2882 = vcmp.eq.s32.totalorder %v2881, 1
        %v2883 = vsel %vm2882, %v2870, %v2849
        %v2884 = vsel %vm2882, %v2871, %v2850
        %v2885 = vsel %vm2882, %v2872, %v2851
        %v2886 = vsel %vm2882, %v2873, %v2852
        %v2887 = vsel %vm2882, %v2874, %v2853
        %v2888 = vsel %vm2882, %v2875, %v2854
        %v2889 = vsel %vm2882, %v2876, %v2855
        %v2890 = vsel %vm2882, %v2877, %v2856
        %v2891 = vlaneseq
        %v2892 = vshrl.u32 %v2891, 7
        %v2893 = vsub.s32 5, %v2892
        %v2894 = vrot.slane %v2372, %v2893
        %vm2895 = vcmp.eq.s32.totalorder %v2894, 1
        %v2896 = vsel %vm2895, %v2870, %v2862
        %v2897 = vsel %vm2895, %v2871, %v2863
        %v2898 = vsel %vm2895, %v2872, %v2864
        %v2899 = vsel %vm2895, %v2873, %v2865
        %v2900 = vsel %vm2895, %v2874, %v2866
        %v2901 = vsel %vm2895, %v2875, %v2867
        %v2902 = vsel %vm2895, %v2876, %v2868
        %v2903 = vsel %vm2895, %v2877, %v2869
        %v2904 = vld [vmem:[%s2656] sm:$0xff]
        %v2905 = vld [vmem:[%s2656 + $0x8] sm:$0xff]
        %v2906 = vld [vmem:[%s2656 + $0x10] sm:$0xff]
        %v2907 = vld [vmem:[%s2656 + $0x18] sm:$0xff]
        %v2908 = vld [vmem:[%s2656 + $0x20] sm:$0xff]
        %v2909 = vld [vmem:[%s2656 + $0x28] sm:$0xff]
        %v2910 = vld [vmem:[%s2656 + $0x30] sm:$0xff]
        %v2911 = vld [vmem:[%s2656 + $0x38] sm:$0xff]
        %vm2912 = vcmp.eq.s32.totalorder %v310, 4
        %v2913 = vsel %vm2912, 1, 0
        %v2914 = vlaneseq
        %v2915 = vshrl.u32 %v2914, 7
        %v2916 = vsub.s32 5, %v2915
        %v2917 = vrot.slane %v2913, %v2916
        %vm2918 = vcmp.eq.s32.totalorder %v2917, 1
        %v2919 = vsel %vm2918, %v2904, %v2883
        %v2920 = vsel %vm2918, %v2905, %v2884
        %v2921 = vsel %vm2918, %v2906, %v2885
        %v2922 = vsel %vm2918, %v2907, %v2886
        %v2923 = vsel %vm2918, %v2908, %v2887
        %v2924 = vsel %vm2918, %v2909, %v2888
        %v2925 = vsel %vm2918, %v2910, %v2889
        %v2926 = vsel %vm2918, %v2911, %v2890
        %vm2927 = vcmp.eq.s32.totalorder %v311, 4
        %v2928 = vsel %vm2927, 1, 0
        %v2929 = vlaneseq
        %v2930 = vshrl.u32 %v2929, 7
        %v2931 = vsub.s32 5, %v2930
        %v2932 = vrot.slane %v2928, %v2931
        %vm2933 = vcmp.eq.s32.totalorder %v2932, 1
        %v2934 = vsel %vm2933, %v2904, %v2896
        %v2935 = vsel %vm2933, %v2905, %v2897
        %v2936 = vsel %vm2933, %v2906, %v2898
        %v2937 = vsel %vm2933, %v2907, %v2899
        %v2938 = vsel %vm2933, %v2908, %v2900
        %v2939 = vsel %vm2933, %v2909, %v2901
        %v2940 = vsel %vm2933, %v2910, %v2902
        %v2941 = vsel %vm2933, %v2911, %v2903
        %v2942 = vpack.c.bf16 %v2924, %v2923
        %v2943 = vpack.c.bf16 %v2926, %v2925
        %v2944 = vpack.c.bf16 %v2939, %v2938
        %v2945 = vpack.c.bf16 %v2941, %v2940
        %2946 = vmatprep.subr.bf16.mxu0 0
        %2947 = vmatpush1.bf16.msra.mxu0 %v2942
        %2948 = vmatprep.subr.bf16.mxu0 0
        %2949 = vmatpush1.bf16.msra.mxu0 %v2943
        %2950 = vmatprep.subr.bf16.mxu0 0
        %2951 = vmatpush1.bf16.msra.mxu0 %v2944
        %2952 = vmatprep.subr.bf16.mxu0 0
        %2953 = vmatpush1.bf16.msra.mxu0 %v2945
        %2954 = vmatprep.subr.bf16.mxu0 0
        %2955 = vmatpush1.bf16.msra.mxu0 0
        %2956 = vmatprep.subr.bf16.mxu0 0
        %2957 = vmatpush1.bf16.msra.mxu0 0
        %2958 = vmatprep.subr.bf16.mxu0 0
        %2959 = vmatpush1.bf16.msra.mxu0 0
        %2960 = vmatprep.subr.bf16.mxu0 0
        %2961 = vmatpush1.bf16.msra.mxu0 0
        %2962 = vmatprep.subr.bf16.mxu0 0
        %2963 = vmatpush1.bf16.msra.mxu0 0
        %2964 = vmatprep.subr.bf16.mxu0 0
        %2965 = vmatpush1.bf16.msra.mxu0 0
        %2966 = vmatprep.subr.bf16.mxu0 0
        %2967 = vmatpush1.bf16.msra.mxu0 0
        %2968 = vmatprep.subr.bf16.mxu0 0
        %2969 = vmatpush1.bf16.msra.mxu0 0
        %2970 = vmatprep.subr.bf16.mxu0 0
        %2971 = vmatpush1.bf16.msra.mxu0 0
        %2972 = vmatprep.subr.bf16.mxu0 0
        %2973 = vmatpush1.bf16.msra.mxu0 0
        %2974 = vmatprep.subr.bf16.mxu0 0
        %2975 = vmatpush1.bf16.msra.mxu0 0
        %2976 = vmatprep.subr.bf16.mxu0 0
        %2977 = vmatpush1.bf16.msra.mxu0 0
        %2978 = vmatprep.mubr.bf16.mxu0 0
        %2979 = vmatmul.mubr.bf16.gmra.mrb[0].mxu0 %v895
        %v2980 = vpop.f32.mrb[0].mxu0
        %v2981 = vadd.f32 %v481, %v2980
        %v2982 = vpop.f32.mrb[0].mxu0
        %v2983 = vpop.f32.mrb[0].mxu0
        %v2984 = vadd.f32 %v486, %v2983
        %v2985 = vpop.f32.mrb[0].mxu0
        %2986 = vmatprep.mubr.bf16.mxu0 0
        %2987 = vmatmul.mubr.bf16.gmra.mrb[0].mxu0 %v898
        %v2988 = vpop.f32.mrb[0].mxu0
        %v2989 = vadd.f32 %v491, %v2988
        %v2990 = vpop.f32.mrb[0].mxu0
        %v2991 = vpop.f32.mrb[0].mxu0
        %v2992 = vadd.f32 %v496, %v2991
        %v2993 = vpop.f32.mrb[0].mxu0
        %2994 = vmatprep.mubr.bf16.mxu0 0
        %2995 = vmatmul.mubr.bf16.gmra.mrb[0].mxu0 %v901
        %v2996 = vpop.f32.mrb[0].mxu0
        %v2997 = vadd.f32 %v501, %v2996
        %v2998 = vpop.f32.mrb[0].mxu0
        %v2999 = vpop.f32.mrb[0].mxu0
        %v3000 = vadd.f32 %v506, %v2999
        %v3001 = vpop.f32.mrb[0].mxu0
        %3002 = vmatprep.mubr.bf16.mxu0 0
        %3003 = vmatmul.mubr.bf16.gmra.mrb[0].mxu0 %v904
        %v3004 = vpop.f32.mrb[0].mxu0
        %v3005 = vadd.f32 %v511, %v3004
        %v3006 = vpop.f32.mrb[0].mxu0
        %v3007 = vpop.f32.mrb[0].mxu0
        %v3008 = vadd.f32 %v516, %v3007
        %v3009 = vpop.f32.mrb[0].mxu0
        %3010 = vmatprep.mubr.bf16.mxu0 0
        %3011 = vmatmul.mubr.bf16.gmra.mrb[0].mxu0 %v907
        %v3012 = vpop.f32.mrb[0].mxu0
        %v3013 = vadd.f32 %v521, %v3012
        %v3014 = vpop.f32.mrb[0].mxu0
        %v3015 = vpop.f32.mrb[0].mxu0
        %v3016 = vadd.f32 %v526, %v3015
        %v3017 = vpop.f32.mrb[0].mxu0
        %3018 = vmatprep.mubr.bf16.mxu0 0
        %3019 = vmatmul.mubr.bf16.gmra.mrb[0].mxu0 %v910
        %v3020 = vpop.f32.mrb[0].mxu0
        %v3021 = vadd.f32 %v531, %v3020
        %v3022 = vpop.f32.mrb[0].mxu0
        %v3023 = vpop.f32.mrb[0].mxu0
        %v3024 = vadd.f32 %v536, %v3023
        %v3025 = vpop.f32.mrb[0].mxu0
        %3026 = vmatprep.mubr.bf16.mxu0 0
        %3027 = vmatmul.mubr.bf16.gmra.mrb[0].mxu0 %v913
        %v3028 = vpop.f32.mrb[0].mxu0
        %v3029 = vadd.f32 %v541, %v3028
        %v3030 = vpop.f32.mrb[0].mxu0
        %v3031 = vpop.f32.mrb[0].mxu0
        %v3032 = vadd.f32 %v546, %v3031
        %v3033 = vpop.f32.mrb[0].mxu0
        %3034 = vmatprep.mubr.bf16.mxu0 0
        %3035 = vmatmul.mubr.bf16.gmra.mrb[0].mxu0 %v916
        %v3036 = vpop.f32.mrb[0].mxu0
        %v3037 = vadd.f32 %v551, %v3036
        %v3038 = vpop.f32.mrb[0].mxu0
        %v3039 = vpop.f32.mrb[0].mxu0
        %v3040 = vadd.f32 %v556, %v3039
        %v3041 = vpop.f32.mrb[0].mxu0
        %3042 = vmatprep.mubr.bf16.mxu0 0
        %3043 = vmatmul.mubr.bf16.gmra.mrb[0].mxu0 %v919
        %v3044 = vpop.f32.mrb[0].mxu0
        %v3045 = vadd.f32 %v561, %v3044
        %v3046 = vpop.f32.mrb[0].mxu0
        %v3047 = vpop.f32.mrb[0].mxu0
        %v3048 = vadd.f32 %v566, %v3047
        %v3049 = vpop.f32.mrb[0].mxu0
        %3050 = vmatprep.mubr.bf16.mxu0 0
        %3051 = vmatmul.mubr.bf16.gmra.mrb[0].mxu0 %v922
        %v3052 = vpop.f32.mrb[0].mxu0
        %v3053 = vadd.f32 %v571, %v3052
        %v3054 = vpop.f32.mrb[0].mxu0
        %v3055 = vpop.f32.mrb[0].mxu0
        %v3056 = vadd.f32 %v576, %v3055
        %v3057 = vpop.f32.mrb[0].mxu0
        %3058 = vdwg.mxu0
        %v3059 = vxor.u32 %v2981, 2147483648
        %v3060 = vxor.u32 %v2984, 2147483648
        %v3061 = vxor.u32 %v2989, 2147483648
        %v3062 = vxor.u32 %v2992, 2147483648
        %v3063 = vmul.f32 %v3059, 1.442695
        %v3064 = vpow.pop %v3063
        %v3065 = vmul.f32 %v3060, 1.442695
        %v3066 = vpow.pop %v3065
        %v3067 = vmul.f32 %v3061, 1.442695
        %v3068 = vpow.pop %v3067
        %v3069 = vmul.f32 %v3062, 1.442695
        %v3070 = vpow.pop %v3069
        %v3071 = vadd.f32 %v3064, 1.0
        %v3072 = vadd.f32 %v3066, 1.0
        %v3073 = vadd.f32 %v3068, 1.0
        %v3074 = vadd.f32 %v3070, 1.0
        %v3075 = vrcp.pop %v3071
        %v3076 = vmul.f32 1.0, %v3075
        %v3077 = vrcp.pop %v3072
        %v3078 = vmul.f32 1.0, %v3077
        %v3079 = vrcp.pop %v3073
        %v3080 = vmul.f32 1.0, %v3079
        %v3081 = vrcp.pop %v3074
        %v3082 = vmul.f32 1.0, %v3081
        %v3083 = vxor.u32 %v2997, 2147483648
        %v3084 = vxor.u32 %v3000, 2147483648
        %v3085 = vxor.u32 %v3005, 2147483648
        %v3086 = vxor.u32 %v3008, 2147483648
        %v3087 = vmul.f32 %v3083, 1.442695
        %v3088 = vpow.pop %v3087
        %v3089 = vmul.f32 %v3084, 1.442695
        %v3090 = vpow.pop %v3089
        %v3091 = vmul.f32 %v3085, 1.442695
        %v3092 = vpow.pop %v3091
        %v3093 = vmul.f32 %v3086, 1.442695
        %v3094 = vpow.pop %v3093
        %v3095 = vadd.f32 %v3088, 1.0
        %v3096 = vadd.f32 %v3090, 1.0
        %v3097 = vadd.f32 %v3092, 1.0
        %v3098 = vadd.f32 %v3094, 1.0
        %v3099 = vrcp.pop %v3095
        %v3100 = vmul.f32 1.0, %v3099
        %v3101 = vrcp.pop %v3096
        %v3102 = vmul.f32 1.0, %v3101
        %v3103 = vrcp.pop %v3097
        %v3104 = vmul.f32 1.0, %v3103
        %v3105 = vrcp.pop %v3098
        %v3106 = vmul.f32 1.0, %v3105
        %v3107 = vadd.f32 %v3013, %v2692
        %v3108 = vadd.f32 %v3016, %v2693
        %v3109 = vadd.f32 %v3021, %v2694
        %v3110 = vadd.f32 %v3024, %v2695
        %v3111 = vadd.f32 %v3029, %v2696
        %v3112 = vadd.f32 %v3032, %v2697
        %v3113 = vadd.f32 %v3037, %v2698
        %v3114 = vadd.f32 %v3040, %v2699
        %v3115 = vadd.f32 %v3045, %v2700
        %v3116 = vadd.f32 %v3048, %v2701
        %v3117 = vadd.f32 %v3053, %v2702
        %v3118 = vadd.f32 %v3056, %v2703
        %v3119 = vxor.u32 %v3107, 2147483648
        %v3120 = vxor.u32 %v3108, 2147483648
        %v3121 = vxor.u32 %v3109, 2147483648
        %v3122 = vxor.u32 %v3110, 2147483648
        %v3123 = vmul.f32 %v3119, 1.442695
        %v3124 = vpow.pop %v3123
        %v3125 = vmul.f32 %v3120, 1.442695
        %v3126 = vpow.pop %v3125
        %v3127 = vmul.f32 %v3121, 1.442695
        %v3128 = vpow.pop %v3127
        %v3129 = vmul.f32 %v3122, 1.442695
        %v3130 = vpow.pop %v3129
        %v3131 = vadd.f32 %v3124, 1.0
        %v3132 = vadd.f32 %v3126, 1.0
        %v3133 = vadd.f32 %v3128, 1.0
        %v3134 = vadd.f32 %v3130, 1.0
        %v3135 = vrcp.pop %v3131
        %v3136 = vmul.f32 1.0, %v3135
        %v3137 = vrcp.pop %v3132
        %v3138 = vmul.f32 1.0, %v3137
        %v3139 = vrcp.pop %v3133
        %v3140 = vmul.f32 1.0, %v3139
        %v3141 = vrcp.pop %v3134
        %v3142 = vmul.f32 1.0, %v3141
        %v3143 = vmax.f32 %v3111, 0.0
        %v3144 = vmax.f32 %v3112, 0.0
        %v3145 = vmax.f32 %v3113, 0.0
        %v3146 = vmax.f32 %v3114, 0.0
        %v3147 = vmul.f32 %v3136, %v3143
        %v3148 = vmul.f32 %v3138, %v3144
        %v3149 = vmul.f32 %v3140, %v3145
        %v3150 = vmul.f32 %v3142, %v3146
        %v3151 = vmul.f32 %v3076, %v2919
        %v3152 = vmul.f32 %v3078, %v2920
        %v3153 = vmul.f32 %v3080, %v2921
        %v3154 = vmul.f32 %v3082, %v2922
        %v3155 = vadd.f32 %v3147, %v3151
        %v3156 = vadd.f32 %v3148, %v3152
        %v3157 = vadd.f32 %v3149, %v3153
        %v3158 = vadd.f32 %v3150, %v3154
        %v3159 = vmul.f32 %v3100, %v2934
        %v3160 = vmul.f32 %v3102, %v2935
        %v3161 = vmul.f32 %v3104, %v2936
        %v3162 = vmul.f32 %v3106, %v2937
        %v3163 = vadd.f32 %v3155, %v3159
        %v3164 = vadd.f32 %v3156, %v3160
        %v3165 = vadd.f32 %v3157, %v3161
        %v3166 = vadd.f32 %v3158, %v3162
        %v3167 = vxor.u32 %v3115, 2147483648
        %v3168 = vxor.u32 %v3116, 2147483648
        %v3169 = vxor.u32 %v3117, 2147483648
        %v3170 = vxor.u32 %v3118, 2147483648
        %v3171 = vmul.f32 %v3167, 1.442695
        %v3172 = vpow.pop %v3171
        %v3173 = vmul.f32 %v3168, 1.442695
        %v3174 = vpow.pop %v3173
        %v3175 = vmul.f32 %v3169, 1.442695
        %v3176 = vpow.pop %v3175
        %v3177 = vmul.f32 %v3170, 1.442695
        %v3178 = vpow.pop %v3177
        %v3179 = vadd.f32 %v3172, 1.0
        %v3180 = vadd.f32 %v3174, 1.0
        %v3181 = vadd.f32 %v3176, 1.0
        %v3182 = vadd.f32 %v3178, 1.0
        %v3183 = vrcp.pop %v3179
        %v3184 = vmul.f32 1.0, %v3183
        %v3185 = vrcp.pop %v3180
        %v3186 = vmul.f32 1.0, %v3185
        %v3187 = vrcp.pop %v3181
        %v3188 = vmul.f32 1.0, %v3187
        %v3189 = vrcp.pop %v3182
        %v3190 = vmul.f32 1.0, %v3189
        %v3191 = vmax.f32 %v3163, 0.0
        %v3192 = vmax.f32 %v3164, 0.0
        %v3193 = vmax.f32 %v3165, 0.0
        %v3194 = vmax.f32 %v3166, 0.0
        %v3195 = vmul.f32 %v3184, %v3191
        %v3196 = vmul.f32 %v3186, %v3192
        %v3197 = vmul.f32 %v3188, %v3193
        %v3198 = vmul.f32 %v3190, %v3194
        %v3199 = vlaneseq
        %v3200 = vshrl.u32 %v3199, 7
        %v3201 = vsub.s32 5, %v3200
        %v3202 = vrot.slane %v1178, %v3201
        %vm3203 = vcmp.eq.s32.totalorder %v3202, 1
        %v3204 = vsel %vm3203, %v2732, %v3163
        %v3205 = vsel %vm3203, %v2733, %v3164
        %v3206 = vsel %vm3203, %v2734, %v3165
        %v3207 = vsel %vm3203, %v2735, %v3166
        %v3208 = vsel %vm3203, %v2764, %v3195
        %v3209 = vsel %vm3203, %v2765, %v3196
        %v3210 = vsel %vm3203, %v2766, %v3197
        %v3211 = vsel %vm3203, %v2767, %v3198
        %s3212 = scalar_lea.vmem [#allocation2], 320
        %3213 = vst [vmem:[%s3212] sm:$0xff] %v3204
        %3214 = vst [vmem:[%s3212 + $0x8] sm:$0xff] %v3205
        %3215 = vst [vmem:[%s3212 + $0x10] sm:$0xff] %v3206
        %3216 = vst [vmem:[%s3212 + $0x18] sm:$0xff] %v3207
        %3217 = vst [vmem:[%s3212 + $0x20] sm:$0xff] %v3208
        %3218 = vst [vmem:[%s3212 + $0x28] sm:$0xff] %v3209
        %3219 = vst [vmem:[%s3212 + $0x30] sm:$0xff] %v3210
        %3220 = vst [vmem:[%s3212 + $0x38] sm:$0xff] %v3211
        %vm3221 = vcmp.eq.s32.totalorder %v312, 5
        %v3222 = vsel %vm3221, 1, 0
        %v3223 = vlaneseq
        %v3224 = vshrl.u32 %v3223, 7
        %v3225 = vsub.s32 0, %v3224
        %v3226 = vrot.slane %v3222, %v3225
        %vm3227 = vcmp.eq.s32.totalorder %v3226, 1
        %v3228 = vsel %vm3227, %v3208, %v2672
        %v3229 = vsel %vm3227, %v3209, %v2673
        %v3230 = vsel %vm3227, %v3210, %v2674
        %v3231 = vsel %vm3227, %v3211, %v2675
        %v3232 = vlaneseq
        %v3233 = vshrl.u32 %v3232, 7
        %v3234 = vsub.s32 6, %v3233
        %v3235 = vrot.slane %v313, %v3234
        %v3236 = vmul.f32 %v329, %v3235
        %v3237 = vmul.f32 %v334, %v3235
        %v3238 = vmul.f32 %v339, %v3235
        %v3239 = vmul.f32 %v344, %v3235
        %v3240 = vmul.f32 %v349, %v3235
        %v3241 = vmul.f32 %v354, %v3235
        %v3242 = vmul.f32 %v359, %v3235
        %v3243 = vmul.f32 %v364, %v3235
        %v3244 = vmul.f32 %v369, %v3235
        %v3245 = vmul.f32 %v374, %v3235
        %v3246 = vmul.f32 %v379, %v3235
        %v3247 = vmul.f32 %v384, %v3235
        %v3248 = vadd.f32 %v3236, %v401
        %v3249 = vadd.f32 %v3237, %v406
        %v3250 = vadd.f32 %v3238, %v411
        %v3251 = vadd.f32 %v3239, %v416
        %v3252 = vadd.f32 %v3240, %v421
        %v3253 = vadd.f32 %v3241, %v426
        %v3254 = vadd.f32 %v3242, %v431
        %v3255 = vadd.f32 %v3243, %v436
        %v3256 = vadd.f32 %v3244, %v441
        %v3257 = vadd.f32 %v3245, %v446
        %v3258 = vadd.f32 %v3246, %v451
        %v3259 = vadd.f32 %v3247, %v456
        %v3260 = vxor.u32 %v3248, 2147483648
        %v3261 = vxor.u32 %v3249, 2147483648
        %v3262 = vxor.u32 %v3250, 2147483648
        %v3263 = vxor.u32 %v3251, 2147483648
        %v3264 = vmul.f32 %v3260, 1.442695
        %v3265 = vpow.pop %v3264
        %v3266 = vmul.f32 %v3261, 1.442695
        %v3267 = vpow.pop %v3266
        %v3268 = vmul.f32 %v3262, 1.442695
        %v3269 = vpow.pop %v3268
        %v3270 = vmul.f32 %v3263, 1.442695
        %v3271 = vpow.pop %v3270
        %v3272 = vadd.f32 %v3265, 1.0
        %v3273 = vadd.f32 %v3267, 1.0
        %v3274 = vadd.f32 %v3269, 1.0
        %v3275 = vadd.f32 %v3271, 1.0
        %v3276 = vrcp.pop %v3272
        %v3277 = vmul.f32 1.0, %v3276
        %v3278 = vrcp.pop %v3273
        %v3279 = vmul.f32 1.0, %v3278
        %v3280 = vrcp.pop %v3274
        %v3281 = vmul.f32 1.0, %v3280
        %v3282 = vrcp.pop %v3275
        %v3283 = vmul.f32 1.0, %v3282
        %v3284 = vmax.f32 %v3252, 0.0
        %v3285 = vmax.f32 %v3253, 0.0
        %v3286 = vmax.f32 %v3254, 0.0
        %v3287 = vmax.f32 %v3255, 0.0
        %v3288 = vmul.f32 %v3277, %v3284
        %v3289 = vmul.f32 %v3279, %v3285
        %v3290 = vmul.f32 %v3281, %v3286
        %v3291 = vmul.f32 %v3283, %v3287
        %v3292 = vxor.u32 %v3256, 2147483648
        %v3293 = vxor.u32 %v3257, 2147483648
        %v3294 = vxor.u32 %v3258, 2147483648
        %v3295 = vxor.u32 %v3259, 2147483648
        %v3296 = vmul.f32 %v3292, 1.442695
        %v3297 = vpow.pop %v3296
        %v3298 = vmul.f32 %v3293, 1.442695
        %v3299 = vpow.pop %v3298
        %v3300 = vmul.f32 %v3294, 1.442695
        %v3301 = vpow.pop %v3300
        %v3302 = vmul.f32 %v3295, 1.442695
        %v3303 = vpow.pop %v3302
        %v3304 = vadd.f32 %v3297, 1.0
        %v3305 = vadd.f32 %v3299, 1.0
        %v3306 = vadd.f32 %v3301, 1.0
        %v3307 = vadd.f32 %v3303, 1.0
        %v3308 = vrcp.pop %v3304
        %v3309 = vmul.f32 1.0, %v3308
        %v3310 = vrcp.pop %v3305
        %v3311 = vmul.f32 1.0, %v3310
        %v3312 = vrcp.pop %v3306
        %v3313 = vmul.f32 1.0, %v3312
        %v3314 = vrcp.pop %v3307
        %v3315 = vmul.f32 1.0, %v3314
        %v3316 = vmax.f32 %v3288, 0.0
        %v3317 = vmax.f32 %v3289, 0.0
        %v3318 = vmax.f32 %v3290, 0.0
        %v3319 = vmax.f32 %v3291, 0.0
        %v3320 = vmul.f32 %v3309, %v3316
        %v3321 = vmul.f32 %v3311, %v3317
        %v3322 = vmul.f32 %v3313, %v3318
        %v3323 = vmul.f32 %v3315, %v3319
        %v3324 = vld [vmem:[#allocation2] sm:$0xff]
        %v3325 = vld [vmem:[#allocation2 + $0x8] sm:$0xff]
        %v3326 = vld [vmem:[#allocation2 + $0x10] sm:$0xff]
        %v3327 = vld [vmem:[#allocation2 + $0x18] sm:$0xff]
        %v3328 = vld [vmem:[#allocation2 + $0x20] sm:$0xff]
        %v3329 = vld [vmem:[#allocation2 + $0x28] sm:$0xff]
        %v3330 = vld [vmem:[#allocation2 + $0x30] sm:$0xff]
        %v3331 = vld [vmem:[#allocation2 + $0x38] sm:$0xff]
        %v3332 = vlaneseq
        %v3333 = vshrl.u32 %v3332, 7
        %v3334 = vsub.s32 6, %v3333
        %v3335 = vrot.slane %v810, %v3334
        %vm3336 = vcmp.eq.s32.totalorder %v3335, 1
        %v3337 = vsel %vm3336, %v3324, 0.0
        %v3338 = vsel %vm3336, %v3325, 0.0
        %v3339 = vsel %vm3336, %v3326, 0.0
        %v3340 = vsel %vm3336, %v3327, 0.0
        %v3341 = vsel %vm3336, %v3328, 0.0
        %v3342 = vsel %vm3336, %v3329, 0.0
        %v3343 = vsel %vm3336, %v3330, 0.0
        %v3344 = vsel %vm3336, %v3331, 0.0
        %v3345 = vlaneseq
        %v3346 = vshrl.u32 %v3345, 7
        %v3347 = vsub.s32 6, %v3346
        %v3348 = vrot.slane %v825, %v3347
        %vm3349 = vcmp.eq.s32.totalorder %v3348, 1
        %v3350 = vsel %vm3349, %v3324, 0.0
        %v3351 = vsel %vm3349, %v3325, 0.0
        %v3352 = vsel %vm3349, %v3326, 0.0
        %v3353 = vsel %vm3349, %v3327, 0.0
        %v3354 = vsel %vm3349, %v3328, 0.0
        %v3355 = vsel %vm3349, %v3329, 0.0
        %v3356 = vsel %vm3349, %v3330, 0.0
        %v3357 = vsel %vm3349, %v3331, 0.0
        %v3358 = vld [vmem:[%s1192] sm:$0xff]
        %v3359 = vld [vmem:[%s1192 + $0x8] sm:$0xff]
        %v3360 = vld [vmem:[%s1192 + $0x10] sm:$0xff]
        %v3361 = vld [vmem:[%s1192 + $0x18] sm:$0xff]
        %v3362 = vld [vmem:[%s1192 + $0x20] sm:$0xff]
        %v3363 = vld [vmem:[%s1192 + $0x28] sm:$0xff]
        %v3364 = vld [vmem:[%s1192 + $0x30] sm:$0xff]
        %v3365 = vld [vmem:[%s1192 + $0x38] sm:$0xff]
        %v3366 = vlaneseq
        %v3367 = vshrl.u32 %v3366, 7
        %v3368 = vsub.s32 6, %v3367
        %v3369 = vrot.slane %v1347, %v3368
        %vm3370 = vcmp.eq.s32.totalorder %v3369, 1
        %v3371 = vsel %vm3370, %v3358, %v3337
        %v3372 = vsel %vm3370, %v3359, %v3338
        %v3373 = vsel %vm3370, %v3360, %v3339
        %v3374 = vsel %vm3370, %v3361, %v3340
        %v3375 = vsel %vm3370, %v3362, %v3341
        %v3376 = vsel %vm3370, %v3363, %v3342
        %v3377 = vsel %vm3370, %v3364, %v3343
        %v3378 = vsel %vm3370, %v3365, %v3344
        %v3379 = vlaneseq
        %v3380 = vshrl.u32 %v3379, 7
        %v3381 = vsub.s32 6, %v3380
        %v3382 = vrot.slane %v1362, %v3381
        %vm3383 = vcmp.eq.s32.totalorder %v3382, 1
        %v3384 = vsel %vm3383, %v3358, %v3350
        %v3385 = vsel %vm3383, %v3359, %v3351
        %v3386 = vsel %vm3383, %v3360, %v3352
        %v3387 = vsel %vm3383, %v3361, %v3353
        %v3388 = vsel %vm3383, %v3362, %v3354
        %v3389 = vsel %vm3383, %v3363, %v3355
        %v3390 = vsel %vm3383, %v3364, %v3356
        %v3391 = vsel %vm3383, %v3365, %v3357
        %v3392 = vld [vmem:[%s1646] sm:$0xff]
        %v3393 = vld [vmem:[%s1646 + $0x8] sm:$0xff]
        %v3394 = vld [vmem:[%s1646 + $0x10] sm:$0xff]
        %v3395 = vld [vmem:[%s1646 + $0x18] sm:$0xff]
        %v3396 = vld [vmem:[%s1646 + $0x20] sm:$0xff]
        %v3397 = vld [vmem:[%s1646 + $0x28] sm:$0xff]
        %v3398 = vld [vmem:[%s1646 + $0x30] sm:$0xff]
        %v3399 = vld [vmem:[%s1646 + $0x38] sm:$0xff]
        %v3400 = vlaneseq
        %v3401 = vshrl.u32 %v3400, 7
        %v3402 = vsub.s32 6, %v3401
        %v3403 = vrot.slane %v1835, %v3402
        %vm3404 = vcmp.eq.s32.totalorder %v3403, 1
        %v3405 = vsel %vm3404, %v3392, %v3371
        %v3406 = vsel %vm3404, %v3393, %v3372
        %v3407 = vsel %vm3404, %v3394, %v3373
        %v3408 = vsel %vm3404, %v3395, %v3374
        %v3409 = vsel %vm3404, %v3396, %v3375
        %v3410 = vsel %vm3404, %v3397, %v3376
        %v3411 = vsel %vm3404, %v3398, %v3377
        %v3412 = vsel %vm3404, %v3399, %v3378
        %v3413 = vlaneseq
        %v3414 = vshrl.u32 %v3413, 7
        %v3415 = vsub.s32 6, %v3414
        %v3416 = vrot.slane %v1850, %v3415
        %vm3417 = vcmp.eq.s32.totalorder %v3416, 1
        %v3418 = vsel %vm3417, %v3392, %v3384
        %v3419 = vsel %vm3417, %v3393, %v3385
        %v3420 = vsel %vm3417, %v3394, %v3386
        %v3421 = vsel %vm3417, %v3395, %v3387
        %v3422 = vsel %vm3417, %v3396, %v3388
        %v3423 = vsel %vm3417, %v3397, %v3389
        %v3424 = vsel %vm3417, %v3398, %v3390
        %v3425 = vsel %vm3417, %v3399, %v3391
        %v3426 = vld [vmem:[%s2134] sm:$0xff]
        %v3427 = vld [vmem:[%s2134 + $0x8] sm:$0xff]
        %v3428 = vld [vmem:[%s2134 + $0x10] sm:$0xff]
        %v3429 = vld [vmem:[%s2134 + $0x18] sm:$0xff]
        %v3430 = vld [vmem:[%s2134 + $0x20] sm:$0xff]
        %v3431 = vld [vmem:[%s2134 + $0x28] sm:$0xff]
        %v3432 = vld [vmem:[%s2134 + $0x30] sm:$0xff]
        %v3433 = vld [vmem:[%s2134 + $0x38] sm:$0xff]
        %v3434 = vlaneseq
        %v3435 = vshrl.u32 %v3434, 7
        %v3436 = vsub.s32 6, %v3435
        %v3437 = vrot.slane %v2357, %v3436
        %vm3438 = vcmp.eq.s32.totalorder %v3437, 1
        %v3439 = vsel %vm3438, %v3426, %v3405
        %v3440 = vsel %vm3438, %v3427, %v3406
        %v3441 = vsel %vm3438, %v3428, %v3407
        %v3442 = vsel %vm3438, %v3429, %v3408
        %v3443 = vsel %vm3438, %v3430, %v3409
        %v3444 = vsel %vm3438, %v3431, %v3410
        %v3445 = vsel %vm3438, %v3432, %v3411
        %v3446 = vsel %vm3438, %v3433, %v3412
        %v3447 = vlaneseq
        %v3448 = vshrl.u32 %v3447, 7
        %v3449 = vsub.s32 6, %v3448
        %v3450 = vrot.slane %v2372, %v3449
        %vm3451 = vcmp.eq.s32.totalorder %v3450, 1
        %v3452 = vsel %vm3451, %v3426, %v3418
        %v3453 = vsel %vm3451, %v3427, %v3419
        %v3454 = vsel %vm3451, %v3428, %v3420
        %v3455 = vsel %vm3451, %v3429, %v3421
        %v3456 = vsel %vm3451, %v3430, %v3422
        %v3457 = vsel %vm3451, %v3431, %v3423
        %v3458 = vsel %vm3451, %v3432, %v3424
        %v3459 = vsel %vm3451, %v3433, %v3425
        %v3460 = vld [vmem:[%s2656] sm:$0xff]
        %v3461 = vld [vmem:[%s2656 + $0x8] sm:$0xff]
        %v3462 = vld [vmem:[%s2656 + $0x10] sm:$0xff]
        %v3463 = vld [vmem:[%s2656 + $0x18] sm:$0xff]
        %v3464 = vld [vmem:[%s2656 + $0x20] sm:$0xff]
        %v3465 = vld [vmem:[%s2656 + $0x28] sm:$0xff]
        %v3466 = vld [vmem:[%s2656 + $0x30] sm:$0xff]
        %v3467 = vld [vmem:[%s2656 + $0x38] sm:$0xff]
        %v3468 = vlaneseq
        %v3469 = vshrl.u32 %v3468, 7
        %v3470 = vsub.s32 6, %v3469
        %v3471 = vrot.slane %v2913, %v3470
        %vm3472 = vcmp.eq.s32.totalorder %v3471, 1
        %v3473 = vsel %vm3472, %v3460, %v3439
        %v3474 = vsel %vm3472, %v3461, %v3440
        %v3475 = vsel %vm3472, %v3462, %v3441
        %v3476 = vsel %vm3472, %v3463, %v3442
        %v3477 = vsel %vm3472, %v3464, %v3443
        %v3478 = vsel %vm3472, %v3465, %v3444
        %v3479 = vsel %vm3472, %v3466, %v3445
        %v3480 = vsel %vm3472, %v3467, %v3446
        %v3481 = vlaneseq
        %v3482 = vshrl.u32 %v3481, 7
        %v3483 = vsub.s32 6, %v3482
        %v3484 = vrot.slane %v2928, %v3483
        %vm3485 = vcmp.eq.s32.totalorder %v3484, 1
        %v3486 = vsel %vm3485, %v3460, %v3452
        %v3487 = vsel %vm3485, %v3461, %v3453
        %v3488 = vsel %vm3485, %v3462, %v3454
        %v3489 = vsel %vm3485, %v3463, %v3455
        %v3490 = vsel %vm3485, %v3464, %v3456
        %v3491 = vsel %vm3485, %v3465, %v3457
        %v3492 = vsel %vm3485, %v3466, %v3458
        %v3493 = vsel %vm3485, %v3467, %v3459
        %v3494 = vld [vmem:[%s3212] sm:$0xff]
        %v3495 = vld [vmem:[%s3212 + $0x8] sm:$0xff]
        %v3496 = vld [vmem:[%s3212 + $0x10] sm:$0xff]
        %v3497 = vld [vmem:[%s3212 + $0x18] sm:$0xff]
        %v3498 = vld [vmem:[%s3212 + $0x20] sm:$0xff]
        %v3499 = vld [vmem:[%s3212 + $0x28] sm:$0xff]
        %v3500 = vld [vmem:[%s3212 + $0x30] sm:$0xff]
        %v3501 = vld [vmem:[%s3212 + $0x38] sm:$0xff]
        %vm3502 = vcmp.eq.s32.totalorder %v310, 5
        %v3503 = vsel %vm3502, 1, 0
        %v3504 = vlaneseq
        %v3505 = vshrl.u32 %v3504, 7
        %v3506 = vsub.s32 6, %v3505
        %v3507 = vrot.slane %v3503, %v3506
        %vm3508 = vcmp.eq.s32.totalorder %v3507, 1
        %v3509 = vsel %vm3508, %v3494, %v3473
        %v3510 = vsel %vm3508, %v3495, %v3474
        %v3511 = vsel %vm3508, %v3496, %v3475
        %v3512 = vsel %vm3508, %v3497, %v3476
        %v3513 = vsel %vm3508, %v3498, %v3477
        %v3514 = vsel %vm3508, %v3499, %v3478
        %v3515 = vsel %vm3508, %v3500, %v3479
        %v3516 = vsel %vm3508, %v3501, %v3480
        %vm3517 = vcmp.eq.s32.totalorder %v311, 5
        %v3518 = vsel %vm3517, 1, 0
        %v3519 = vlaneseq
        %v3520 = vshrl.u32 %v3519, 7
        %v3521 = vsub.s32 6, %v3520
        %v3522 = vrot.slane %v3518, %v3521
        %vm3523 = vcmp.eq.s32.totalorder %v3522, 1
        %v3524 = vsel %vm3523, %v3494, %v3486
        %v3525 = vsel %vm3523, %v3495, %v3487
        %v3526 = vsel %vm3523, %v3496, %v3488
        %v3527 = vsel %vm3523, %v3497, %v3489
        %v3528 = vsel %vm3523, %v3498, %v3490
        %v3529 = vsel %vm3523, %v3499, %v3491
        %v3530 = vsel %vm3523, %v3500, %v3492
        %v3531 = vsel %vm3523, %v3501, %v3493
        %v3532 = vpack.c.bf16 %v3514, %v3513
        %v3533 = vpack.c.bf16 %v3516, %v3515
        %v3534 = vpack.c.bf16 %v3529, %v3528
        %v3535 = vpack.c.bf16 %v3531, %v3530
        %3536 = vmatprep.subr.bf16.mxu0 0
        %3537 = vmatpush1.bf16.msra.mxu0 %v3532
        %3538 = vmatprep.subr.bf16.mxu0 0
        %3539 = vmatpush1.bf16.msra.mxu0 %v3533
        %3540 = vmatprep.subr.bf16.mxu0 0
        %3541 = vmatpush1.bf16.msra.mxu0 %v3534
        %3542 = vmatprep.subr.bf16.mxu0 0
        %3543 = vmatpush1.bf16.msra.mxu0 %v3535
        %3544 = vmatprep.subr.bf16.mxu0 0
        %3545 = vmatpush1.bf16.msra.mxu0 0
        %3546 = vmatprep.subr.bf16.mxu0 0
        %3547 = vmatpush1.bf16.msra.mxu0 0
        %3548 = vmatprep.subr.bf16.mxu0 0
        %3549 = vmatpush1.bf16.msra.mxu0 0
        %3550 = vmatprep.subr.bf16.mxu0 0
        %3551 = vmatpush1.bf16.msra.mxu0 0
        %3552 = vmatprep.subr.bf16.mxu0 0
        %3553 = vmatpush1.bf16.msra.mxu0 0
        %3554 = vmatprep.subr.bf16.mxu0 0
        %3555 = vmatpush1.bf16.msra.mxu0 0
        %3556 = vmatprep.subr.bf16.mxu0 0
        %3557 = vmatpush1.bf16.msra.mxu0 0
        %3558 = vmatprep.subr.bf16.mxu0 0
        %3559 = vmatpush1.bf16.msra.mxu0 0
        %3560 = vmatprep.subr.bf16.mxu0 0
        %3561 = vmatpush1.bf16.msra.mxu0 0
        %3562 = vmatprep.subr.bf16.mxu0 0
        %3563 = vmatpush1.bf16.msra.mxu0 0
        %3564 = vmatprep.subr.bf16.mxu0 0
        %3565 = vmatpush1.bf16.msra.mxu0 0
        %3566 = vmatprep.subr.bf16.mxu0 0
        %3567 = vmatpush1.bf16.msra.mxu0 0
        %3568 = vmatprep.mubr.bf16.mxu0 0
        %3569 = vmatmul.mubr.bf16.gmra.mrb[0].mxu0 %v895
        %v3570 = vpop.f32.mrb[0].mxu0
        %v3571 = vadd.f32 %v481, %v3570
        %v3572 = vpop.f32.mrb[0].mxu0
        %v3573 = vpop.f32.mrb[0].mxu0
        %v3574 = vadd.f32 %v486, %v3573
        %v3575 = vpop.f32.mrb[0].mxu0
        %3576 = vmatprep.mubr.bf16.mxu0 0
        %3577 = vmatmul.mubr.bf16.gmra.mrb[0].mxu0 %v898
        %v3578 = vpop.f32.mrb[0].mxu0
        %v3579 = vadd.f32 %v491, %v3578
        %v3580 = vpop.f32.mrb[0].mxu0
        %v3581 = vpop.f32.mrb[0].mxu0
        %v3582 = vadd.f32 %v496, %v3581
        %v3583 = vpop.f32.mrb[0].mxu0
        %3584 = vmatprep.mubr.bf16.mxu0 0
        %3585 = vmatmul.mubr.bf16.gmra.mrb[0].mxu0 %v901
        %v3586 = vpop.f32.mrb[0].mxu0
        %v3587 = vadd.f32 %v501, %v3586
        %v3588 = vpop.f32.mrb[0].mxu0
        %v3589 = vpop.f32.mrb[0].mxu0
        %v3590 = vadd.f32 %v506, %v3589
        %v3591 = vpop.f32.mrb[0].mxu0
        %3592 = vmatprep.mubr.bf16.mxu0 0
        %3593 = vmatmul.mubr.bf16.gmra.mrb[0].mxu0 %v904
        %v3594 = vpop.f32.mrb[0].mxu0
        %v3595 = vadd.f32 %v511, %v3594
        %v3596 = vpop.f32.mrb[0].mxu0
        %v3597 = vpop.f32.mrb[0].mxu0
        %v3598 = vadd.f32 %v516, %v3597
        %v3599 = vpop.f32.mrb[0].mxu0
        %3600 = vmatprep.mubr.bf16.mxu0 0
        %3601 = vmatmul.mubr.bf16.gmra.mrb[0].mxu0 %v907
        %v3602 = vpop.f32.mrb[0].mxu0
        %v3603 = vadd.f32 %v521, %v3602
        %v3604 = vpop.f32.mrb[0].mxu0
        %v3605 = vpop.f32.mrb[0].mxu0
        %v3606 = vadd.f32 %v526, %v3605
        %v3607 = vpop.f32.mrb[0].mxu0
        %3608 = vmatprep.mubr.bf16.mxu0 0
        %3609 = vmatmul.mubr.bf16.gmra.mrb[0].mxu0 %v910
        %v3610 = vpop.f32.mrb[0].mxu0
        %v3611 = vadd.f32 %v531, %v3610
        %v3612 = vpop.f32.mrb[0].mxu0
        %v3613 = vpop.f32.mrb[0].mxu0
        %v3614 = vadd.f32 %v536, %v3613
        %v3615 = vpop.f32.mrb[0].mxu0
        %3616 = vmatprep.mubr.bf16.mxu0 0
        %3617 = vmatmul.mubr.bf16.gmra.mrb[0].mxu0 %v913
        %v3618 = vpop.f32.mrb[0].mxu0
        %v3619 = vadd.f32 %v541, %v3618
        %v3620 = vpop.f32.mrb[0].mxu0
        %v3621 = vpop.f32.mrb[0].mxu0
        %v3622 = vadd.f32 %v546, %v3621
        %v3623 = vpop.f32.mrb[0].mxu0
        %3624 = vmatprep.mubr.bf16.mxu0 0
        %3625 = vmatmul.mubr.bf16.gmra.mrb[0].mxu0 %v916
        %v3626 = vpop.f32.mrb[0].mxu0
        %v3627 = vadd.f32 %v551, %v3626
        %v3628 = vpop.f32.mrb[0].mxu0
        %v3629 = vpop.f32.mrb[0].mxu0
        %v3630 = vadd.f32 %v556, %v3629
        %v3631 = vpop.f32.mrb[0].mxu0
        %3632 = vmatprep.mubr.bf16.mxu0 0
        %3633 = vmatmul.mubr.bf16.gmra.mrb[0].mxu0 %v919
        %v3634 = vpop.f32.mrb[0].mxu0
        %v3635 = vadd.f32 %v561, %v3634
        %v3636 = vpop.f32.mrb[0].mxu0
        %v3637 = vpop.f32.mrb[0].mxu0
        %v3638 = vadd.f32 %v566, %v3637
        %v3639 = vpop.f32.mrb[0].mxu0
        %3640 = vmatprep.mubr.bf16.mxu0 0
        %3641 = vmatmul.mubr.bf16.gmra.mrb[0].mxu0 %v922
        %v3642 = vpop.f32.mrb[0].mxu0
        %v3643 = vadd.f32 %v571, %v3642
        %v3644 = vpop.f32.mrb[0].mxu0
        %v3645 = vpop.f32.mrb[0].mxu0
        %v3646 = vadd.f32 %v576, %v3645
        %v3647 = vpop.f32.mrb[0].mxu0
        %3648 = vdwg.mxu0
        %v3649 = vxor.u32 %v3571, 2147483648
        %v3650 = vxor.u32 %v3574, 2147483648
        %v3651 = vxor.u32 %v3579, 2147483648
        %v3652 = vxor.u32 %v3582, 2147483648
        %v3653 = vmul.f32 %v3649, 1.442695
        %v3654 = vpow.pop %v3653
        %v3655 = vmul.f32 %v3650, 1.442695
        %v3656 = vpow.pop %v3655
        %v3657 = vmul.f32 %v3651, 1.442695
        %v3658 = vpow.pop %v3657
        %v3659 = vmul.f32 %v3652, 1.442695
        %v3660 = vpow.pop %v3659
        %v3661 = vadd.f32 %v3654, 1.0
        %v3662 = vadd.f32 %v3656, 1.0
        %v3663 = vadd.f32 %v3658, 1.0
        %v3664 = vadd.f32 %v3660, 1.0
        %v3665 = vrcp.pop %v3661
        %v3666 = vmul.f32 1.0, %v3665
        %v3667 = vrcp.pop %v3662
        %v3668 = vmul.f32 1.0, %v3667
        %v3669 = vrcp.pop %v3663
        %v3670 = vmul.f32 1.0, %v3669
        %v3671 = vrcp.pop %v3664
        %v3672 = vmul.f32 1.0, %v3671
        %v3673 = vxor.u32 %v3587, 2147483648
        %v3674 = vxor.u32 %v3590, 2147483648
        %v3675 = vxor.u32 %v3595, 2147483648
        %v3676 = vxor.u32 %v3598, 2147483648
        %v3677 = vmul.f32 %v3673, 1.442695
        %v3678 = vpow.pop %v3677
        %v3679 = vmul.f32 %v3674, 1.442695
        %v3680 = vpow.pop %v3679
        %v3681 = vmul.f32 %v3675, 1.442695
        %v3682 = vpow.pop %v3681
        %v3683 = vmul.f32 %v3676, 1.442695
        %v3684 = vpow.pop %v3683
        %v3685 = vadd.f32 %v3678, 1.0
        %v3686 = vadd.f32 %v3680, 1.0
        %v3687 = vadd.f32 %v3682, 1.0
        %v3688 = vadd.f32 %v3684, 1.0
        %v3689 = vrcp.pop %v3685
        %v3690 = vmul.f32 1.0, %v3689
        %v3691 = vrcp.pop %v3686
        %v3692 = vmul.f32 1.0, %v3691
        %v3693 = vrcp.pop %v3687
        %v3694 = vmul.f32 1.0, %v3693
        %v3695 = vrcp.pop %v3688
        %v3696 = vmul.f32 1.0, %v3695
        %v3697 = vadd.f32 %v3603, %v3248
        %v3698 = vadd.f32 %v3606, %v3249
        %v3699 = vadd.f32 %v3611, %v3250
        %v3700 = vadd.f32 %v3614, %v3251
        %v3701 = vadd.f32 %v3619, %v3252
        %v3702 = vadd.f32 %v3622, %v3253
        %v3703 = vadd.f32 %v3627, %v3254
        %v3704 = vadd.f32 %v3630, %v3255
        %v3705 = vadd.f32 %v3635, %v3256
        %v3706 = vadd.f32 %v3638, %v3257
        %v3707 = vadd.f32 %v3643, %v3258
        %v3708 = vadd.f32 %v3646, %v3259
        %v3709 = vxor.u32 %v3697, 2147483648
        %v3710 = vxor.u32 %v3698, 2147483648
        %v3711 = vxor.u32 %v3699, 2147483648
        %v3712 = vxor.u32 %v3700, 2147483648
        %v3713 = vmul.f32 %v3709, 1.442695
        %v3714 = vpow.pop %v3713
        %v3715 = vmul.f32 %v3710, 1.442695
        %v3716 = vpow.pop %v3715
        %v3717 = vmul.f32 %v3711, 1.442695
        %v3718 = vpow.pop %v3717
        %v3719 = vmul.f32 %v3712, 1.442695
        %v3720 = vpow.pop %v3719
        %v3721 = vadd.f32 %v3714, 1.0
        %v3722 = vadd.f32 %v3716, 1.0
        %v3723 = vadd.f32 %v3718, 1.0
        %v3724 = vadd.f32 %v3720, 1.0
        %v3725 = vrcp.pop %v3721
        %v3726 = vmul.f32 1.0, %v3725
        %v3727 = vrcp.pop %v3722
        %v3728 = vmul.f32 1.0, %v3727
        %v3729 = vrcp.pop %v3723
        %v3730 = vmul.f32 1.0, %v3729
        %v3731 = vrcp.pop %v3724
        %v3732 = vmul.f32 1.0, %v3731
        %v3733 = vmax.f32 %v3701, 0.0
        %v3734 = vmax.f32 %v3702, 0.0
        %v3735 = vmax.f32 %v3703, 0.0
        %v3736 = vmax.f32 %v3704, 0.0
        %v3737 = vmul.f32 %v3726, %v3733
        %v3738 = vmul.f32 %v3728, %v3734
        %v3739 = vmul.f32 %v3730, %v3735
        %v3740 = vmul.f32 %v3732, %v3736
        %v3741 = vmul.f32 %v3666, %v3509
        %v3742 = vmul.f32 %v3668, %v3510
        %v3743 = vmul.f32 %v3670, %v3511
        %v3744 = vmul.f32 %v3672, %v3512
        %v3745 = vadd.f32 %v3737, %v3741
        %v3746 = vadd.f32 %v3738, %v3742
        %v3747 = vadd.f32 %v3739, %v3743
        %v3748 = vadd.f32 %v3740, %v3744
        %v3749 = vmul.f32 %v3690, %v3524
        %v3750 = vmul.f32 %v3692, %v3525
        %v3751 = vmul.f32 %v3694, %v3526
        %v3752 = vmul.f32 %v3696, %v3527
        %v3753 = vadd.f32 %v3745, %v3749
        %v3754 = vadd.f32 %v3746, %v3750
        %v3755 = vadd.f32 %v3747, %v3751
        %v3756 = vadd.f32 %v3748, %v3752
        %v3757 = vxor.u32 %v3705, 2147483648
        %v3758 = vxor.u32 %v3706, 2147483648
        %v3759 = vxor.u32 %v3707, 2147483648
        %v3760 = vxor.u32 %v3708, 2147483648
        %v3761 = vmul.f32 %v3757, 1.442695
        %v3762 = vpow.pop %v3761
        %v3763 = vmul.f32 %v3758, 1.442695
        %v3764 = vpow.pop %v3763
        %v3765 = vmul.f32 %v3759, 1.442695
        %v3766 = vpow.pop %v3765
        %v3767 = vmul.f32 %v3760, 1.442695
        %v3768 = vpow.pop %v3767
        %v3769 = vadd.f32 %v3762, 1.0
        %v3770 = vadd.f32 %v3764, 1.0
        %v3771 = vadd.f32 %v3766, 1.0
        %v3772 = vadd.f32 %v3768, 1.0
        %v3773 = vrcp.pop %v3769
        %v3774 = vmul.f32 1.0, %v3773
        %v3775 = vrcp.pop %v3770
        %v3776 = vmul.f32 1.0, %v3775
        %v3777 = vrcp.pop %v3771
        %v3778 = vmul.f32 1.0, %v3777
        %v3779 = vrcp.pop %v3772
        %v3780 = vmul.f32 1.0, %v3779
        %v3781 = vmax.f32 %v3753, 0.0
        %v3782 = vmax.f32 %v3754, 0.0
        %v3783 = vmax.f32 %v3755, 0.0
        %v3784 = vmax.f32 %v3756, 0.0
        %v3785 = vmul.f32 %v3774, %v3781
        %v3786 = vmul.f32 %v3776, %v3782
        %v3787 = vmul.f32 %v3778, %v3783
        %v3788 = vmul.f32 %v3780, %v3784
        %v3789 = vlaneseq
        %v3790 = vshrl.u32 %v3789, 7
        %v3791 = vsub.s32 6, %v3790
        %v3792 = vrot.slane %v1178, %v3791
        %vm3793 = vcmp.eq.s32.totalorder %v3792, 1
        %v3794 = vsel %vm3793, %v3288, %v3753
        %v3795 = vsel %vm3793, %v3289, %v3754
        %v3796 = vsel %vm3793, %v3290, %v3755
        %v3797 = vsel %vm3793, %v3291, %v3756
        %v3798 = vsel %vm3793, %v3320, %v3785
        %v3799 = vsel %vm3793, %v3321, %v3786
        %v3800 = vsel %vm3793, %v3322, %v3787
        %v3801 = vsel %vm3793, %v3323, %v3788
        %s3802 = scalar_lea.vmem [#allocation2], 384
        %3803 = vst [vmem:[%s3802] sm:$0xff] %v3794
        %3804 = vst [vmem:[%s3802 + $0x8] sm:$0xff] %v3795
        %3805 = vst [vmem:[%s3802 + $0x10] sm:$0xff] %v3796
        %3806 = vst [vmem:[%s3802 + $0x18] sm:$0xff] %v3797
        %3807 = vst [vmem:[%s3802 + $0x20] sm:$0xff] %v3798
        %3808 = vst [vmem:[%s3802 + $0x28] sm:$0xff] %v3799
        %3809 = vst [vmem:[%s3802 + $0x30] sm:$0xff] %v3800
        %3810 = vst [vmem:[%s3802 + $0x38] sm:$0xff] %v3801
        %vm3811 = vcmp.eq.s32.totalorder %v312, 6
        %v3812 = vsel %vm3811, 1, 0
        %v3813 = vlaneseq
        %v3814 = vshrl.u32 %v3813, 7
        %v3815 = vsub.s32 0, %v3814
        %v3816 = vrot.slane %v3812, %v3815
        %vm3817 = vcmp.eq.s32.totalorder %v3816, 1
        %v3818 = vsel %vm3817, %v3798, %v3228
        %v3819 = vsel %vm3817, %v3799, %v3229
        %v3820 = vsel %vm3817, %v3800, %v3230
        %v3821 = vsel %vm3817, %v3801, %v3231
        %v3822 = vlaneseq
        %v3823 = vshrl.u32 %v3822, 7
        %v3824 = vsub.s32 7, %v3823
        %v3825 = vrot.slane %v313, %v3824
        %v3826 = vmul.f32 %v329, %v3825
        %v3827 = vmul.f32 %v334, %v3825
        %v3828 = vmul.f32 %v339, %v3825
        %v3829 = vmul.f32 %v344, %v3825
        %v3830 = vmul.f32 %v349, %v3825
        %v3831 = vmul.f32 %v354, %v3825
        %v3832 = vmul.f32 %v359, %v3825
        %v3833 = vmul.f32 %v364, %v3825
        %v3834 = vmul.f32 %v369, %v3825
        %v3835 = vmul.f32 %v374, %v3825
        %v3836 = vmul.f32 %v379, %v3825
        %v3837 = vmul.f32 %v384, %v3825
        %v3838 = vadd.f32 %v3826, %v401
        %v3839 = vadd.f32 %v3827, %v406
        %v3840 = vadd.f32 %v3828, %v411
        %v3841 = vadd.f32 %v3829, %v416
        %v3842 = vadd.f32 %v3830, %v421
        %v3843 = vadd.f32 %v3831, %v426
        %v3844 = vadd.f32 %v3832, %v431
        %v3845 = vadd.f32 %v3833, %v436
        %v3846 = vadd.f32 %v3834, %v441
        %v3847 = vadd.f32 %v3835, %v446
        %v3848 = vadd.f32 %v3836, %v451
        %v3849 = vadd.f32 %v3837, %v456
        %v3850 = vxor.u32 %v3838, 2147483648
        %v3851 = vxor.u32 %v3839, 2147483648
        %v3852 = vxor.u32 %v3840, 2147483648
        %v3853 = vxor.u32 %v3841, 2147483648
        %v3854 = vmul.f32 %v3850, 1.442695
        %v3855 = vpow.pop %v3854
        %v3856 = vmul.f32 %v3851, 1.442695
        %v3857 = vpow.pop %v3856
        %v3858 = vmul.f32 %v3852, 1.442695
        %v3859 = vpow.pop %v3858
        %v3860 = vmul.f32 %v3853, 1.442695
        %v3861 = vpow.pop %v3860
        %v3862 = vadd.f32 %v3855, 1.0
        %v3863 = vadd.f32 %v3857, 1.0
        %v3864 = vadd.f32 %v3859, 1.0
        %v3865 = vadd.f32 %v3861, 1.0
        %v3866 = vrcp.pop %v3862
        %v3867 = vmul.f32 1.0, %v3866
        %v3868 = vrcp.pop %v3863
        %v3869 = vmul.f32 1.0, %v3868
        %v3870 = vrcp.pop %v3864
        %v3871 = vmul.f32 1.0, %v3870
        %v3872 = vrcp.pop %v3865
        %v3873 = vmul.f32 1.0, %v3872
        %v3874 = vmax.f32 %v3842, 0.0
        %v3875 = vmax.f32 %v3843, 0.0
        %v3876 = vmax.f32 %v3844, 0.0
        %v3877 = vmax.f32 %v3845, 0.0
        %v3878 = vmul.f32 %v3867, %v3874
        %v3879 = vmul.f32 %v3869, %v3875
        %v3880 = vmul.f32 %v3871, %v3876
        %v3881 = vmul.f32 %v3873, %v3877
        %v3882 = vxor.u32 %v3846, 2147483648
        %v3883 = vxor.u32 %v3847, 2147483648
        %v3884 = vxor.u32 %v3848, 2147483648
        %v3885 = vxor.u32 %v3849, 2147483648
        %v3886 = vmul.f32 %v3882, 1.442695
        %v3887 = vpow.pop %v3886
        %v3888 = vmul.f32 %v3883, 1.442695
        %v3889 = vpow.pop %v3888
        %v3890 = vmul.f32 %v3884, 1.442695
        %v3891 = vpow.pop %v3890
        %v3892 = vmul.f32 %v3885, 1.442695
        %v3893 = vpow.pop %v3892
        %v3894 = vadd.f32 %v3887, 1.0
        %v3895 = vadd.f32 %v3889, 1.0
        %v3896 = vadd.f32 %v3891, 1.0
        %v3897 = vadd.f32 %v3893, 1.0
        %v3898 = vrcp.pop %v3894
        %v3899 = vmul.f32 1.0, %v3898
        %v3900 = vrcp.pop %v3895
        %v3901 = vmul.f32 1.0, %v3900
        %v3902 = vrcp.pop %v3896
        %v3903 = vmul.f32 1.0, %v3902
        %v3904 = vrcp.pop %v3897
        %v3905 = vmul.f32 1.0, %v3904
        %v3906 = vmax.f32 %v3878, 0.0
        %v3907 = vmax.f32 %v3879, 0.0
        %v3908 = vmax.f32 %v3880, 0.0
        %v3909 = vmax.f32 %v3881, 0.0
        %v3910 = vmul.f32 %v3899, %v3906
        %v3911 = vmul.f32 %v3901, %v3907
        %v3912 = vmul.f32 %v3903, %v3908
        %v3913 = vmul.f32 %v3905, %v3909
        %v3914 = vld [vmem:[#allocation2] sm:$0xff]
        %v3915 = vld [vmem:[#allocation2 + $0x8] sm:$0xff]
        %v3916 = vld [vmem:[#allocation2 + $0x10] sm:$0xff]
        %v3917 = vld [vmem:[#allocation2 + $0x18] sm:$0xff]
        %v3918 = vld [vmem:[#allocation2 + $0x20] sm:$0xff]
        %v3919 = vld [vmem:[#allocation2 + $0x28] sm:$0xff]
        %v3920 = vld [vmem:[#allocation2 + $0x30] sm:$0xff]
        %v3921 = vld [vmem:[#allocation2 + $0x38] sm:$0xff]
        %v3922 = vlaneseq
        %v3923 = vshrl.u32 %v3922, 7
        %v3924 = vsub.s32 7, %v3923
        %v3925 = vrot.slane %v810, %v3924
        %vm3926 = vcmp.eq.s32.totalorder %v3925, 1
        %v3927 = vsel %vm3926, %v3914, 0.0
        %v3928 = vsel %vm3926, %v3915, 0.0
        %v3929 = vsel %vm3926, %v3916, 0.0
        %v3930 = vsel %vm3926, %v3917, 0.0
        %v3931 = vsel %vm3926, %v3918, 0.0
        %v3932 = vsel %vm3926, %v3919, 0.0
        %v3933 = vsel %vm3926, %v3920, 0.0
        %v3934 = vsel %vm3926, %v3921, 0.0
        %v3935 = vlaneseq
        %v3936 = vshrl.u32 %v3935, 7
        %v3937 = vsub.s32 7, %v3936
        %v3938 = vrot.slane %v825, %v3937
        %vm3939 = vcmp.eq.s32.totalorder %v3938, 1
        %v3940 = vsel %vm3939, %v3914, 0.0
        %v3941 = vsel %vm3939, %v3915, 0.0
        %v3942 = vsel %vm3939, %v3916, 0.0
        %v3943 = vsel %vm3939, %v3917, 0.0
        %v3944 = vsel %vm3939, %v3918, 0.0
        %v3945 = vsel %vm3939, %v3919, 0.0
        %v3946 = vsel %vm3939, %v3920, 0.0
        %v3947 = vsel %vm3939, %v3921, 0.0
        %v3948 = vld [vmem:[%s1192] sm:$0xff]
        %v3949 = vld [vmem:[%s1192 + $0x8] sm:$0xff]
        %v3950 = vld [vmem:[%s1192 + $0x10] sm:$0xff]
        %v3951 = vld [vmem:[%s1192 + $0x18] sm:$0xff]
        %v3952 = vld [vmem:[%s1192 + $0x20] sm:$0xff]
        %v3953 = vld [vmem:[%s1192 + $0x28] sm:$0xff]
        %v3954 = vld [vmem:[%s1192 + $0x30] sm:$0xff]
        %v3955 = vld [vmem:[%s1192 + $0x38] sm:$0xff]
        %v3956 = vlaneseq
        %v3957 = vshrl.u32 %v3956, 7
        %v3958 = vsub.s32 7, %v3957
        %v3959 = vrot.slane %v1347, %v3958
        %vm3960 = vcmp.eq.s32.totalorder %v3959, 1
        %v3961 = vsel %vm3960, %v3948, %v3927
        %v3962 = vsel %vm3960, %v3949, %v3928
        %v3963 = vsel %vm3960, %v3950, %v3929
        %v3964 = vsel %vm3960, %v3951, %v3930
        %v3965 = vsel %vm3960, %v3952, %v3931
        %v3966 = vsel %vm3960, %v3953, %v3932
        %v3967 = vsel %vm3960, %v3954, %v3933
        %v3968 = vsel %vm3960, %v3955, %v3934
        %v3969 = vlaneseq
        %v3970 = vshrl.u32 %v3969, 7
        %v3971 = vsub.s32 7, %v3970
        %v3972 = vrot.slane %v1362, %v3971
        %vm3973 = vcmp.eq.s32.totalorder %v3972, 1
        %v3974 = vsel %vm3973, %v3948, %v3940
        %v3975 = vsel %vm3973, %v3949, %v3941
        %v3976 = vsel %vm3973, %v3950, %v3942
        %v3977 = vsel %vm3973, %v3951, %v3943
        %v3978 = vsel %vm3973, %v3952, %v3944
        %v3979 = vsel %vm3973, %v3953, %v3945
        %v3980 = vsel %vm3973, %v3954, %v3946
        %v3981 = vsel %vm3973, %v3955, %v3947
        %v3982 = vld [vmem:[%s1646] sm:$0xff]
        %v3983 = vld [vmem:[%s1646 + $0x8] sm:$0xff]
        %v3984 = vld [vmem:[%s1646 + $0x10] sm:$0xff]
        %v3985 = vld [vmem:[%s1646 + $0x18] sm:$0xff]
        %v3986 = vld [vmem:[%s1646 + $0x20] sm:$0xff]
        %v3987 = vld [vmem:[%s1646 + $0x28] sm:$0xff]
        %v3988 = vld [vmem:[%s1646 + $0x30] sm:$0xff]
        %v3989 = vld [vmem:[%s1646 + $0x38] sm:$0xff]
        %v3990 = vlaneseq
        %v3991 = vshrl.u32 %v3990, 7
        %v3992 = vsub.s32 7, %v3991
        %v3993 = vrot.slane %v1835, %v3992
        %vm3994 = vcmp.eq.s32.totalorder %v3993, 1
        %v3995 = vsel %vm3994, %v3982, %v3961
        %v3996 = vsel %vm3994, %v3983, %v3962
        %v3997 = vsel %vm3994, %v3984, %v3963
        %v3998 = vsel %vm3994, %v3985, %v3964
        %v3999 = vsel %vm3994, %v3986, %v3965
        %v4000 = vsel %vm3994, %v3987, %v3966
        %v4001 = vsel %vm3994, %v3988, %v3967
        %v4002 = vsel %vm3994, %v3989, %v3968
        %v4003 = vlaneseq
        %v4004 = vshrl.u32 %v4003, 7
        %v4005 = vsub.s32 7, %v4004
        %v4006 = vrot.slane %v1850, %v4005
        %vm4007 = vcmp.eq.s32.totalorder %v4006, 1
        %v4008 = vsel %vm4007, %v3982, %v3974
        %v4009 = vsel %vm4007, %v3983, %v3975
        %v4010 = vsel %vm4007, %v3984, %v3976
        %v4011 = vsel %vm4007, %v3985, %v3977
        %v4012 = vsel %vm4007, %v3986, %v3978
        %v4013 = vsel %vm4007, %v3987, %v3979
        %v4014 = vsel %vm4007, %v3988, %v3980
        %v4015 = vsel %vm4007, %v3989, %v3981
        %v4016 = vld [vmem:[%s2134] sm:$0xff]
        %v4017 = vld [vmem:[%s2134 + $0x8] sm:$0xff]
        %v4018 = vld [vmem:[%s2134 + $0x10] sm:$0xff]
        %v4019 = vld [vmem:[%s2134 + $0x18] sm:$0xff]
        %v4020 = vld [vmem:[%s2134 + $0x20] sm:$0xff]
        %v4021 = vld [vmem:[%s2134 + $0x28] sm:$0xff]
        %v4022 = vld [vmem:[%s2134 + $0x30] sm:$0xff]
        %v4023 = vld [vmem:[%s2134 + $0x38] sm:$0xff]
        %v4024 = vlaneseq
        %v4025 = vshrl.u32 %v4024, 7
        %v4026 = vsub.s32 7, %v4025
        %v4027 = vrot.slane %v2357, %v4026
        %vm4028 = vcmp.eq.s32.totalorder %v4027, 1
        %v4029 = vsel %vm4028, %v4016, %v3995
        %v4030 = vsel %vm4028, %v4017, %v3996
        %v4031 = vsel %vm4028, %v4018, %v3997
        %v4032 = vsel %vm4028, %v4019, %v3998
        %v4033 = vsel %vm4028, %v4020, %v3999
        %v4034 = vsel %vm4028, %v4021, %v4000
        %v4035 = vsel %vm4028, %v4022, %v4001
        %v4036 = vsel %vm4028, %v4023, %v4002
        %v4037 = vlaneseq
        %v4038 = vshrl.u32 %v4037, 7
        %v4039 = vsub.s32 7, %v4038
        %v4040 = vrot.slane %v2372, %v4039
        %vm4041 = vcmp.eq.s32.totalorder %v4040, 1
        %v4042 = vsel %vm4041, %v4016, %v4008
        %v4043 = vsel %vm4041, %v4017, %v4009
        %v4044 = vsel %vm4041, %v4018, %v4010
        %v4045 = vsel %vm4041, %v4019, %v4011
        %v4046 = vsel %vm4041, %v4020, %v4012
        %v4047 = vsel %vm4041, %v4021, %v4013
        %v4048 = vsel %vm4041, %v4022, %v4014
        %v4049 = vsel %vm4041, %v4023, %v4015
        %v4050 = vld [vmem:[%s2656] sm:$0xff]
        %v4051 = vld [vmem:[%s2656 + $0x8] sm:$0xff]
        %v4052 = vld [vmem:[%s2656 + $0x10] sm:$0xff]
        %v4053 = vld [vmem:[%s2656 + $0x18] sm:$0xff]
        %v4054 = vld [vmem:[%s2656 + $0x20] sm:$0xff]
        %v4055 = vld [vmem:[%s2656 + $0x28] sm:$0xff]
        %v4056 = vld [vmem:[%s2656 + $0x30] sm:$0xff]
        %v4057 = vld [vmem:[%s2656 + $0x38] sm:$0xff]
        %v4058 = vlaneseq
        %v4059 = vshrl.u32 %v4058, 7
        %v4060 = vsub.s32 7, %v4059
        %v4061 = vrot.slane %v2913, %v4060
        %vm4062 = vcmp.eq.s32.totalorder %v4061, 1
        %v4063 = vsel %vm4062, %v4050, %v4029
        %v4064 = vsel %vm4062, %v4051, %v4030
        %v4065 = vsel %vm4062, %v4052, %v4031
        %v4066 = vsel %vm4062, %v4053, %v4032
        %v4067 = vsel %vm4062, %v4054, %v4033
        %v4068 = vsel %vm4062, %v4055, %v4034
        %v4069 = vsel %vm4062, %v4056, %v4035
        %v4070 = vsel %vm4062, %v4057, %v4036
        %v4071 = vlaneseq
        %v4072 = vshrl.u32 %v4071, 7
        %v4073 = vsub.s32 7, %v4072
        %v4074 = vrot.slane %v2928, %v4073
        %vm4075 = vcmp.eq.s32.totalorder %v4074, 1
        %v4076 = vsel %vm4075, %v4050, %v4042
        %v4077 = vsel %vm4075, %v4051, %v4043
        %v4078 = vsel %vm4075, %v4052, %v4044
        %v4079 = vsel %vm4075, %v4053, %v4045
        %v4080 = vsel %vm4075, %v4054, %v4046
        %v4081 = vsel %vm4075, %v4055, %v4047
        %v4082 = vsel %vm4075, %v4056, %v4048
        %v4083 = vsel %vm4075, %v4057, %v4049
        %v4084 = vld [vmem:[%s3212] sm:$0xff]
        %v4085 = vld [vmem:[%s3212 + $0x8] sm:$0xff]
        %v4086 = vld [vmem:[%s3212 + $0x10] sm:$0xff]
        %v4087 = vld [vmem:[%s3212 + $0x18] sm:$0xff]
        %v4088 = vld [vmem:[%s3212 + $0x20] sm:$0xff]
        %v4089 = vld [vmem:[%s3212 + $0x28] sm:$0xff]
        %v4090 = vld [vmem:[%s3212 + $0x30] sm:$0xff]
        %v4091 = vld [vmem:[%s3212 + $0x38] sm:$0xff]
        %v4092 = vlaneseq
        %v4093 = vshrl.u32 %v4092, 7
        %v4094 = vsub.s32 7, %v4093
        %v4095 = vrot.slane %v3503, %v4094
        %vm4096 = vcmp.eq.s32.totalorder %v4095, 1
        %v4097 = vsel %vm4096, %v4084, %v4063
        %v4098 = vsel %vm4096, %v4085, %v4064
        %v4099 = vsel %vm4096, %v4086, %v4065
        %v4100 = vsel %vm4096, %v4087, %v4066
        %v4101 = vsel %vm4096, %v4088, %v4067
        %v4102 = vsel %vm4096, %v4089, %v4068
        %v4103 = vsel %vm4096, %v4090, %v4069
        %v4104 = vsel %vm4096, %v4091, %v4070
        %v4105 = vlaneseq
        %v4106 = vshrl.u32 %v4105, 7
        %v4107 = vsub.s32 7, %v4106
        %v4108 = vrot.slane %v3518, %v4107
        %vm4109 = vcmp.eq.s32.totalorder %v4108, 1
        %v4110 = vsel %vm4109, %v4084, %v4076
        %v4111 = vsel %vm4109, %v4085, %v4077
        %v4112 = vsel %vm4109, %v4086, %v4078
        %v4113 = vsel %vm4109, %v4087, %v4079
        %v4114 = vsel %vm4109, %v4088, %v4080
        %v4115 = vsel %vm4109, %v4089, %v4081
        %v4116 = vsel %vm4109, %v4090, %v4082
        %v4117 = vsel %vm4109, %v4091, %v4083
        %v4118 = vld [vmem:[%s3802] sm:$0xff]
        %v4119 = vld [vmem:[%s3802 + $0x8] sm:$0xff]
        %v4120 = vld [vmem:[%s3802 + $0x10] sm:$0xff]
        %v4121 = vld [vmem:[%s3802 + $0x18] sm:$0xff]
        %v4122 = vld [vmem:[%s3802 + $0x20] sm:$0xff]
        %v4123 = vld [vmem:[%s3802 + $0x28] sm:$0xff]
        %v4124 = vld [vmem:[%s3802 + $0x30] sm:$0xff]
        %v4125 = vld [vmem:[%s3802 + $0x38] sm:$0xff]
        %vm4126 = vcmp.eq.s32.totalorder %v310, 6
        %v4127 = vsel %vm4126, 1, 0
        %v4128 = vlaneseq
        %v4129 = vshrl.u32 %v4128, 7
        %v4130 = vsub.s32 7, %v4129
        %v4131 = vrot.slane %v4127, %v4130
        %vm4132 = vcmp.eq.s32.totalorder %v4131, 1
        %v4133 = vsel %vm4132, %v4118, %v4097
        %v4134 = vsel %vm4132, %v4119, %v4098
        %v4135 = vsel %vm4132, %v4120, %v4099
        %v4136 = vsel %vm4132, %v4121, %v4100
        %v4137 = vsel %vm4132, %v4122, %v4101
        %v4138 = vsel %vm4132, %v4123, %v4102
        %v4139 = vsel %vm4132, %v4124, %v4103
        %v4140 = vsel %vm4132, %v4125, %v4104
        %vm4141 = vcmp.eq.s32.totalorder %v311, 6
        %v4142 = vsel %vm4141, 1, 0
        %v4143 = vlaneseq
        %v4144 = vshrl.u32 %v4143, 7
        %v4145 = vsub.s32 7, %v4144
        %v4146 = vrot.slane %v4142, %v4145
        %vm4147 = vcmp.eq.s32.totalorder %v4146, 1
        %v4148 = vsel %vm4147, %v4118, %v4110
        %v4149 = vsel %vm4147, %v4119, %v4111
        %v4150 = vsel %vm4147, %v4120, %v4112
        %v4151 = vsel %vm4147, %v4121, %v4113
        %v4152 = vsel %vm4147, %v4122, %v4114
        %v4153 = vsel %vm4147, %v4123, %v4115
        %v4154 = vsel %vm4147, %v4124, %v4116
        %v4155 = vsel %vm4147, %v4125, %v4117
        %v4156 = vpack.c.bf16 %v4138, %v4137
        %v4157 = vpack.c.bf16 %v4140, %v4139
        %v4158 = vpack.c.bf16 %v4153, %v4152
        %v4159 = vpack.c.bf16 %v4155, %v4154
        %4160 = vmatprep.subr.bf16.mxu0 0
        %4161 = vmatpush1.bf16.msra.mxu0 %v4156
        %4162 = vmatprep.subr.bf16.mxu0 0
        %4163 = vmatpush1.bf16.msra.mxu0 %v4157
        %4164 = vmatprep.subr.bf16.mxu0 0
        %4165 = vmatpush1.bf16.msra.mxu0 %v4158
        %4166 = vmatprep.subr.bf16.mxu0 0
        %4167 = vmatpush1.bf16.msra.mxu0 %v4159
        %4168 = vmatprep.subr.bf16.mxu0 0
        %4169 = vmatpush1.bf16.msra.mxu0 0
        %4170 = vmatprep.subr.bf16.mxu0 0
        %4171 = vmatpush1.bf16.msra.mxu0 0
        %4172 = vmatprep.subr.bf16.mxu0 0
        %4173 = vmatpush1.bf16.msra.mxu0 0
        %4174 = vmatprep.subr.bf16.mxu0 0
        %4175 = vmatpush1.bf16.msra.mxu0 0
        %4176 = vmatprep.subr.bf16.mxu0 0
        %4177 = vmatpush1.bf16.msra.mxu0 0
        %4178 = vmatprep.subr.bf16.mxu0 0
        %4179 = vmatpush1.bf16.msra.mxu0 0
        %4180 = vmatprep.subr.bf16.mxu0 0
        %4181 = vmatpush1.bf16.msra.mxu0 0
        %4182 = vmatprep.subr.bf16.mxu0 0
        %4183 = vmatpush1.bf16.msra.mxu0 0
        %4184 = vmatprep.subr.bf16.mxu0 0
        %4185 = vmatpush1.bf16.msra.mxu0 0
        %4186 = vmatprep.subr.bf16.mxu0 0
        %4187 = vmatpush1.bf16.msra.mxu0 0
        %4188 = vmatprep.subr.bf16.mxu0 0
        %4189 = vmatpush1.bf16.msra.mxu0 0
        %4190 = vmatprep.subr.bf16.mxu0 0
        %4191 = vmatpush1.bf16.msra.mxu0 0
        %4192 = vmatprep.mubr.bf16.mxu0 0
        %4193 = vmatmul.mubr.bf16.gmra.mrb[0].mxu0 %v895
        %v4194 = vpop.f32.mrb[0].mxu0
        %v4195 = vadd.f32 %v481, %v4194
        %v4196 = vpop.f32.mrb[0].mxu0
        %v4197 = vpop.f32.mrb[0].mxu0
        %v4198 = vadd.f32 %v486, %v4197
        %v4199 = vpop.f32.mrb[0].mxu0
        %4200 = vmatprep.mubr.bf16.mxu0 0
        %4201 = vmatmul.mubr.bf16.gmra.mrb[0].mxu0 %v898
        %v4202 = vpop.f32.mrb[0].mxu0
        %v4203 = vadd.f32 %v491, %v4202
        %v4204 = vpop.f32.mrb[0].mxu0
        %v4205 = vpop.f32.mrb[0].mxu0
        %v4206 = vadd.f32 %v496, %v4205
        %v4207 = vpop.f32.mrb[0].mxu0
        %4208 = vmatprep.mubr.bf16.mxu0 0
        %4209 = vmatmul.mubr.bf16.gmra.mrb[0].mxu0 %v901
        %v4210 = vpop.f32.mrb[0].mxu0
        %v4211 = vadd.f32 %v501, %v4210
        %v4212 = vpop.f32.mrb[0].mxu0
        %v4213 = vpop.f32.mrb[0].mxu0
        %v4214 = vadd.f32 %v506, %v4213
        %v4215 = vpop.f32.mrb[0].mxu0
        %4216 = vmatprep.mubr.bf16.mxu0 0
        %4217 = vmatmul.mubr.bf16.gmra.mrb[0].mxu0 %v904
        %v4218 = vpop.f32.mrb[0].mxu0
        %v4219 = vadd.f32 %v511, %v4218
        %v4220 = vpop.f32.mrb[0].mxu0
        %v4221 = vpop.f32.mrb[0].mxu0
        %v4222 = vadd.f32 %v516, %v4221
        %v4223 = vpop.f32.mrb[0].mxu0
        %4224 = vmatprep.mubr.bf16.mxu0 0
        %4225 = vmatmul.mubr.bf16.gmra.mrb[0].mxu0 %v907
        %v4226 = vpop.f32.mrb[0].mxu0
        %v4227 = vadd.f32 %v521, %v4226
        %v4228 = vpop.f32.mrb[0].mxu0
        %v4229 = vpop.f32.mrb[0].mxu0
        %v4230 = vadd.f32 %v526, %v4229
        %v4231 = vpop.f32.mrb[0].mxu0
        %4232 = vmatprep.mubr.bf16.mxu0 0
        %4233 = vmatmul.mubr.bf16.gmra.mrb[0].mxu0 %v910
        %v4234 = vpop.f32.mrb[0].mxu0
        %v4235 = vadd.f32 %v531, %v4234
        %v4236 = vpop.f32.mrb[0].mxu0
        %v4237 = vpop.f32.mrb[0].mxu0
        %v4238 = vadd.f32 %v536, %v4237
        %v4239 = vpop.f32.mrb[0].mxu0
        %4240 = vmatprep.mubr.bf16.mxu0 0
        %4241 = vmatmul.mubr.bf16.gmra.mrb[0].mxu0 %v913
        %v4242 = vpop.f32.mrb[0].mxu0
        %v4243 = vadd.f32 %v541, %v4242
        %v4244 = vpop.f32.mrb[0].mxu0
        %v4245 = vpop.f32.mrb[0].mxu0
        %v4246 = vadd.f32 %v546, %v4245
        %v4247 = vpop.f32.mrb[0].mxu0
        %4248 = vmatprep.mubr.bf16.mxu0 0
        %4249 = vmatmul.mubr.bf16.gmra.mrb[0].mxu0 %v916
        %v4250 = vpop.f32.mrb[0].mxu0
        %v4251 = vadd.f32 %v551, %v4250
        %v4252 = vpop.f32.mrb[0].mxu0
        %v4253 = vpop.f32.mrb[0].mxu0
        %v4254 = vadd.f32 %v556, %v4253
        %v4255 = vpop.f32.mrb[0].mxu0
        %4256 = vmatprep.mubr.bf16.mxu0 0
        %4257 = vmatmul.mubr.bf16.gmra.mrb[0].mxu0 %v919
        %v4258 = vpop.f32.mrb[0].mxu0
        %v4259 = vadd.f32 %v561, %v4258
        %v4260 = vpop.f32.mrb[0].mxu0
        %v4261 = vpop.f32.mrb[0].mxu0
        %v4262 = vadd.f32 %v566, %v4261
        %v4263 = vpop.f32.mrb[0].mxu0
        %4264 = vmatprep.mubr.bf16.mxu0 0
        %4265 = vmatmul.mubr.bf16.gmra.mrb[0].mxu0 %v922
        %v4266 = vpop.f32.mrb[0].mxu0
        %v4267 = vadd.f32 %v571, %v4266
        %v4268 = vpop.f32.mrb[0].mxu0
        %v4269 = vpop.f32.mrb[0].mxu0
        %v4270 = vadd.f32 %v576, %v4269
        %v4271 = vpop.f32.mrb[0].mxu0
        %4272 = vdwg.mxu0
        %v4273 = vxor.u32 %v4195, 2147483648
        %v4274 = vxor.u32 %v4198, 2147483648
        %v4275 = vxor.u32 %v4203, 2147483648
        %v4276 = vxor.u32 %v4206, 2147483648
        %v4277 = vmul.f32 %v4273, 1.442695
        %v4278 = vpow.pop %v4277
        %v4279 = vmul.f32 %v4274, 1.442695
        %v4280 = vpow.pop %v4279
        %v4281 = vmul.f32 %v4275, 1.442695
        %v4282 = vpow.pop %v4281
        %v4283 = vmul.f32 %v4276, 1.442695
        %v4284 = vpow.pop %v4283
        %v4285 = vadd.f32 %v4278, 1.0
        %v4286 = vadd.f32 %v4280, 1.0
        %v4287 = vadd.f32 %v4282, 1.0
        %v4288 = vadd.f32 %v4284, 1.0
        %v4289 = vrcp.pop %v4285
        %v4290 = vmul.f32 1.0, %v4289
        %v4291 = vrcp.pop %v4286
        %v4292 = vmul.f32 1.0, %v4291
        %v4293 = vrcp.pop %v4287
        %v4294 = vmul.f32 1.0, %v4293
        %v4295 = vrcp.pop %v4288
        %v4296 = vmul.f32 1.0, %v4295
        %v4297 = vxor.u32 %v4211, 2147483648
        %v4298 = vxor.u32 %v4214, 2147483648
        %v4299 = vxor.u32 %v4219, 2147483648
        %v4300 = vxor.u32 %v4222, 2147483648
        %v4301 = vmul.f32 %v4297, 1.442695
        %v4302 = vpow.pop %v4301
        %v4303 = vmul.f32 %v4298, 1.442695
        %v4304 = vpow.pop %v4303
        %v4305 = vmul.f32 %v4299, 1.442695
        %v4306 = vpow.pop %v4305
        %v4307 = vmul.f32 %v4300, 1.442695
        %v4308 = vpow.pop %v4307
        %v4309 = vadd.f32 %v4302, 1.0
        %v4310 = vadd.f32 %v4304, 1.0
        %v4311 = vadd.f32 %v4306, 1.0
        %v4312 = vadd.f32 %v4308, 1.0
        %v4313 = vrcp.pop %v4309
        %v4314 = vmul.f32 1.0, %v4313
        %v4315 = vrcp.pop %v4310
        %v4316 = vmul.f32 1.0, %v4315
        %v4317 = vrcp.pop %v4311
        %v4318 = vmul.f32 1.0, %v4317
        %v4319 = vrcp.pop %v4312
        %v4320 = vmul.f32 1.0, %v4319
        %v4321 = vadd.f32 %v4227, %v3838
        %v4322 = vadd.f32 %v4230, %v3839
        %v4323 = vadd.f32 %v4235, %v3840
        %v4324 = vadd.f32 %v4238, %v3841
        %v4325 = vadd.f32 %v4243, %v3842
        %v4326 = vadd.f32 %v4246, %v3843
        %v4327 = vadd.f32 %v4251, %v3844
        %v4328 = vadd.f32 %v4254, %v3845
        %v4329 = vadd.f32 %v4259, %v3846
        %v4330 = vadd.f32 %v4262, %v3847
        %v4331 = vadd.f32 %v4267, %v3848
        %v4332 = vadd.f32 %v4270, %v3849
        %v4333 = vxor.u32 %v4321, 2147483648
        %v4334 = vxor.u32 %v4322, 2147483648
        %v4335 = vxor.u32 %v4323, 2147483648
        %v4336 = vxor.u32 %v4324, 2147483648
        %v4337 = vmul.f32 %v4333, 1.442695
        %v4338 = vpow.pop %v4337
        %v4339 = vmul.f32 %v4334, 1.442695
        %v4340 = vpow.pop %v4339
        %v4341 = vmul.f32 %v4335, 1.442695
        %v4342 = vpow.pop %v4341
        %v4343 = vmul.f32 %v4336, 1.442695
        %v4344 = vpow.pop %v4343
        %v4345 = vadd.f32 %v4338, 1.0
        %v4346 = vadd.f32 %v4340, 1.0
        %v4347 = vadd.f32 %v4342, 1.0
        %v4348 = vadd.f32 %v4344, 1.0
        %v4349 = vrcp.pop %v4345
        %v4350 = vmul.f32 1.0, %v4349
        %v4351 = vrcp.pop %v4346
        %v4352 = vmul.f32 1.0, %v4351
        %v4353 = vrcp.pop %v4347
        %v4354 = vmul.f32 1.0, %v4353
        %v4355 = vrcp.pop %v4348
        %v4356 = vmul.f32 1.0, %v4355
        %v4357 = vmax.f32 %v4325, 0.0
        %v4358 = vmax.f32 %v4326, 0.0
        %v4359 = vmax.f32 %v4327, 0.0
        %v4360 = vmax.f32 %v4328, 0.0
        %v4361 = vmul.f32 %v4350, %v4357
        %v4362 = vmul.f32 %v4352, %v4358
        %v4363 = vmul.f32 %v4354, %v4359
        %v4364 = vmul.f32 %v4356, %v4360
        %v4365 = vmul.f32 %v4290, %v4133
        %v4366 = vmul.f32 %v4292, %v4134
        %v4367 = vmul.f32 %v4294, %v4135
        %v4368 = vmul.f32 %v4296, %v4136
        %v4369 = vadd.f32 %v4361, %v4365
        %v4370 = vadd.f32 %v4362, %v4366
        %v4371 = vadd.f32 %v4363, %v4367
        %v4372 = vadd.f32 %v4364, %v4368
        %v4373 = vmul.f32 %v4314, %v4148
        %v4374 = vmul.f32 %v4316, %v4149
        %v4375 = vmul.f32 %v4318, %v4150
        %v4376 = vmul.f32 %v4320, %v4151
        %v4377 = vadd.f32 %v4369, %v4373
        %v4378 = vadd.f32 %v4370, %v4374
        %v4379 = vadd.f32 %v4371, %v4375
        %v4380 = vadd.f32 %v4372, %v4376
        %v4381 = vxor.u32 %v4329, 2147483648
        %v4382 = vxor.u32 %v4330, 2147483648
        %v4383 = vxor.u32 %v4331, 2147483648
        %v4384 = vxor.u32 %v4332, 2147483648
        %v4385 = vmul.f32 %v4381, 1.442695
        %v4386 = vpow.pop %v4385
        %v4387 = vmul.f32 %v4382, 1.442695
        %v4388 = vpow.pop %v4387
        %v4389 = vmul.f32 %v4383, 1.442695
        %v4390 = vpow.pop %v4389
        %v4391 = vmul.f32 %v4384, 1.442695
        %v4392 = vpow.pop %v4391
        %v4393 = vadd.f32 %v4386, 1.0
        %v4394 = vadd.f32 %v4388, 1.0
        %v4395 = vadd.f32 %v4390, 1.0
        %v4396 = vadd.f32 %v4392, 1.0
        %v4397 = vrcp.pop %v4393
        %v4398 = vmul.f32 1.0, %v4397
        %v4399 = vrcp.pop %v4394
        %v4400 = vmul.f32 1.0, %v4399
        %v4401 = vrcp.pop %v4395
        %v4402 = vmul.f32 1.0, %v4401
        %v4403 = vrcp.pop %v4396
        %v4404 = vmul.f32 1.0, %v4403
        %v4405 = vmax.f32 %v4377, 0.0
        %v4406 = vmax.f32 %v4378, 0.0
        %v4407 = vmax.f32 %v4379, 0.0
        %v4408 = vmax.f32 %v4380, 0.0
        %v4409 = vmul.f32 %v4398, %v4405
        %v4410 = vmul.f32 %v4400, %v4406
        %v4411 = vmul.f32 %v4402, %v4407
        %v4412 = vmul.f32 %v4404, %v4408
        %v4413 = vlaneseq
        %v4414 = vshrl.u32 %v4413, 7
        %v4415 = vsub.s32 7, %v4414
        %v4416 = vrot.slane %v1178, %v4415
        %vm4417 = vcmp.eq.s32.totalorder %v4416, 1
        %v4418 = vsel %vm4417, %v3878, %v4377
        %v4419 = vsel %vm4417, %v3879, %v4378
        %v4420 = vsel %vm4417, %v3880, %v4379
        %v4421 = vsel %vm4417, %v3881, %v4380
        %v4422 = vsel %vm4417, %v3910, %v4409
        %v4423 = vsel %vm4417, %v3911, %v4410
        %v4424 = vsel %vm4417, %v3912, %v4411
        %v4425 = vsel %vm4417, %v3913, %v4412
        %s4426 = scalar_lea.vmem [#allocation2], 448
        %4427 = vst [vmem:[%s4426] sm:$0xff] %v4418
        %4428 = vst [vmem:[%s4426 + $0x8] sm:$0xff] %v4419
        %4429 = vst [vmem:[%s4426 + $0x10] sm:$0xff] %v4420
        %4430 = vst [vmem:[%s4426 + $0x18] sm:$0xff] %v4421
        %4431 = vst [vmem:[%s4426 + $0x20] sm:$0xff] %v4422
        %4432 = vst [vmem:[%s4426 + $0x28] sm:$0xff] %v4423
        %4433 = vst [vmem:[%s4426 + $0x30] sm:$0xff] %v4424
        %4434 = vst [vmem:[%s4426 + $0x38] sm:$0xff] %v4425
        %vm4435 = vcmp.eq.s32.totalorder %v312, 7
        %v4436 = vsel %vm4435, 1, 0
        %v4437 = vlaneseq
        %v4438 = vshrl.u32 %v4437, 7
        %v4439 = vsub.s32 0, %v4438
        %v4440 = vrot.slane %v4436, %v4439
        %vm4441 = vcmp.eq.s32.totalorder %v4440, 1
        %v4442 = vsel %vm4441, %v4422, %v3818
        %v4443 = vsel %vm4441, %v4423, %v3819
        %v4444 = vsel %vm4441, %v4424, %v3820
        %v4445 = vsel %vm4441, %v4425, %v3821
        %4446 = vst [vmem:[%s304] sm:$0xff] %v4442
        %4447 = vst [vmem:[%s304 + $0x8] sm:$0xff] %v4443
        %4448 = vst [vmem:[%s304 + $0x10] sm:$0xff] %v4444
        %4449 = vst [vmem:[%s304 + $0x18] sm:$0xff] %v4445
        %s4450 = sand.u32 %s164, 1
        %s4451 = scalar_lea.sflag [#allocation5], %s4450
        %s4452 = sand.u32 %s164, 1
        %s4453 = smul.addr %s4452, 32
        %s4454 = scalar_lea.vmem [#allocation4], %s4453
        // Predicated region
        $region83: #{tpu_custom_call.1} parent=77 // pred_check
          %p4455 = pneg %p174
        $region84: #{tpu_custom_call.1} parent=77 // pred_check_branch
          %4457 = sbr.rel (%p4455) target = $region86
        $region85: #{tpu_custom_call.1} parent=77 // pred_region
          %s4459 = ssub.s32 512, 512
          %4460 = vsyncadd %s4451, %s4459
          %s4461 = smul.addr %s20, 128
          %s4462 = scalar_lea.hbm %s6, %s4461
          %s4463 = sshll.u32 %s4454, 4
          %s4464 = int_to_ptr.vmem [resolvable:$true] %s4463
          %4469 = dma.vmem_to_hbm [thread:$0]  %s4464, 512, %s4462, %s4451, 128, 1024, 8
        $region86: #{tpu_custom_call.1} parent=77 // pred_fallthru
          _
      $region78: #{tpu_custom_call.1} parent=5 // pred_fallthru
        _
      %p4470 = scmp.le.s32.totalorder 2, %s15
      // Predicated region
      $region87: #{tpu_custom_call.1} parent=5 // pred_check
        %p4471 = pneg %p4470
      $region88: #{tpu_custom_call.1} parent=5 // pred_check_branch
        %4473 = sbr.rel (%p4471) target = $region90
      $region89: #{tpu_custom_call.1} parent=5 // pred_region
        %s4474 = ssub.s32 %s15, 2
        // Predicated region
        $region91: #{tpu_custom_call.1} parent=89 // pred_check
          %p4475 = pneg %p180
        $region92: #{tpu_custom_call.1} parent=89 // pred_check_branch
          %4477 = sbr.rel (%p4475) target = $region94
        $region93: #{tpu_custom_call.1} parent=89 // pred_region
          %s4478 = sand.u32 %s165, 1
          %s4479 = scalar_lea.sflag [#allocation5], %s4478
          %s4480 = sand.u32 %s165, 1
          %s4481 = smul.addr %s4480, 32
          %s4482 = scalar_lea.vmem [#allocation4], %s4481
          %4483 = dma.done %s4479, 512
        $region94: #{tpu_custom_call.1} parent=89 // pred_fallthru
          _
      $region90: #{tpu_custom_call.1} parent=5 // pred_fallthru
        _
    $region6: #{tpu_custom_call.1} parent=1 // loop_footer
      %s19 = sadd.s32 1, %s15
    $region7: #{tpu_custom_call.1} parent=1 // loop_footer_branch
      %14 = sbr.rel target = $region3
    $region8: #{tpu_custom_call.1} parent=1 // loop_exit
      _
    %4484 = vsyncpa [#allocation5], 1
    %s4485 = scalar_lea.sflag [#allocation5], 1
    %4486 = vsyncpa %s4485, 1

</llo_original>
